<compile_context>
chip_gen: v5e
topology: v5e:2x2
jax: 0.10.0
libtpu: 0.0.40
codegen_flags: <defaults>
</compile_context>

<pallas_src>
import functools

import jax
import jax.numpy as jnp
from jax import lax
from jax.experimental import pallas as pl
from jax.experimental.pallas import tpu as pltpu


def _round_up(x, m):
    return ((x + m - 1) // m) * m


def convrnn_recurrence_kernel(u_ref, w2_ref, mask_ref, y_ref, hext_ref, hs_ref,
                              *, kh, kw, Hp, Wp, NP, OFF, KK):
    """One grid program = one time-chunk of one batch element's recurrence.

    u_ref    : (Tc, Hd, NP)   hoisted input-path pre-activations (bias folded)
    w2_ref   : (Hd, KKP)      gate recurrent weights, stacked (c_out, tap*Hd+c_in)
    mask_ref : (Hd, NP)       1.0 on interior spatial positions, 0.0 on halo/pad
    y_ref    : (Tc, Hd, NP)   hidden-state sequence for this chunk
    hext_ref : VMEM (Hd, EXT) haloed flat state with zero margins (persists
                              across time chunks; state is at lanes [OFF, OFF+NP))
    hs_ref   : VMEM (KKP, NP) im2col stack of the kh*kw shifted state windows
    """
    Tc, hd, _ = u_ref.shape
    ph, pw = kh // 2, kw // 2
    KKP = hs_ref.shape[0]

    # Zero the K-padding rows of the im2col slab (their w2 columns are zero
    # too, but scratch VMEM starts undefined and 0*NaN != 0).
    if KKP > KK:
        hs_ref[KK:KKP, :] = jnp.zeros((KKP - KK, NP), jnp.float32)

    # Fresh zero state (interior + halo + margins) at the start of a sequence.
    @pl.when(pl.program_id(1) == 0)
    def _():
        hext_ref[...] = jnp.zeros_like(hext_ref)

    # Static lane offsets of the kh*kw shifted windows inside the state buffer.
    offs = [OFF + (ki - ph) * Wp + (kj - pw)
            for ki in range(kh) for kj in range(kw)]

    def step(t, carry):
        # im2col: each tap is a contiguous (Hd, NP) lane window of the haloed
        # flat state; stack along sublanes (no strided slices, no relayouts).
        for tap, o in enumerate(offs):
            hs_ref[tap * hd:(tap + 1) * hd, :] = hext_ref[:, o:o + NP]
        # One fused matmul per step: (Hd, KKP) @ (KKP, NP), K = kh*kw*Hd.
        acc = jnp.dot(w2_ref[...], hs_ref[...],
                      preferred_element_type=jnp.float32)
        g = jnp.tanh(acc + u_ref[t]) * mask_ref[...]   # zero halo / pad lanes
        y_ref[t] = g                                   # lane-dense (384) store
        hext_ref[:, OFF:OFF + NP] = g                  # vreg-aligned writeback
        return carry

    lax.fori_loop(0, Tc, step, 0, unroll=True)


def convrnn_layer(x_bthwc, wx_gate, wh_gate, b_gate, hd, kh, kw, time_chunk=None):
    """One ConvRNNCell over the whole sequence. x: (B,T,H,W,Cin) -> (B,T,Hd,H,W)."""
    B, T, H, W, Cin = x_bthwc.shape
    ph, pw = kh // 2, kw // 2
    Hp, Wp = H + 2 * ph, W + 2 * pw
    NP = _round_up(Hp * Wp, 128)           # padded flat spatial frame (lanes)
    KK = kh * kw * hd                      # im2col contraction size
    KKP = _round_up(KK, 128)               # zero-padded K
    OFF = _round_up(max(ph * Wp + pw, 1), 128)   # >= max tap shift, vreg aligned
    EXT = OFF + NP + OFF                   # state buffer width (zero margins)

    Tc = T if time_chunk is None else int(time_chunk)
    if Tc <= 0 or T % Tc != 0:
        Tc = T
    nTc = T // Tc

    # ---- input path (no recurrent dependence): one XLA conv over (B*T) ----
    x2 = x_bthwc.reshape(B * T, H, W, Cin).astype(jnp.float32)
    dn = lax.conv_dimension_numbers(x2.shape, wx_gate.shape,
                                    ('NHWC', 'HWIO', 'NHWC'))
    u = lax.conv_general_dilated(x2, wx_gate, (1, 1), 'SAME',
                                 dimension_numbers=dn)
    u = u + b_gate.reshape(1, 1, 1, hd)                    # fold gate bias once
    u = u.reshape(B, T, H, W, hd).transpose(0, 1, 4, 2, 3)  # (B,T,Hd,H,W)
    u = jnp.pad(u, ((0, 0), (0, 0), (0, 0), (ph, ph), (pw, pw)))
    u = u.reshape(B, T, hd, Hp * Wp)
    u = jnp.pad(u, ((0, 0), (0, 0), (0, 0), (0, NP - Hp * Wp)))  # (B,T,Hd,NP)

    # ---- recurrent gate weights, stacked for the fused im2col matmul ----
    # w2[c_out, (ki*kw+kj)*Hd + c_in] = Wh_gate[ki, kj, c_in, c_out]
    w2 = wh_gate.transpose(3, 0, 1, 2).reshape(hd, KK)
    w2 = jnp.pad(w2, ((0, 0), (0, KKP - KK)))              # (Hd, KKP)

    # ---- interior mask in the padded flat frame (computed once, host side) --
    idx = jnp.arange(NP)
    r, c = idx // Wp, idx % Wp
    m = ((r >= ph) & (r < Hp - ph) & (c >= pw) & (c < Wp - pw)
         & (idx < Hp * Wp))
    mask = jnp.broadcast_to(m.astype(jnp.float32)[None, :], (hd, NP))

    kernel = functools.partial(convrnn_recurrence_kernel, kh=kh, kw=kw,
                               Hp=Hp, Wp=Wp, NP=NP, OFF=OFF, KK=KK)

    y = pl.pallas_call(
        kernel,
        out_shape=jax.ShapeDtypeStruct((B, T, hd, NP), jnp.float32),
        grid_spec=pltpu.PrefetchScalarGridSpec(
            num_scalar_prefetch=0,
            grid=(B, nTc),
            in_specs=[
                pl.BlockSpec((None, Tc, hd, NP), lambda b, t: (b, t, 0, 0)),
                pl.BlockSpec((hd, KKP), lambda b, t: (0, 0)),
                pl.BlockSpec((hd, NP), lambda b, t: (0, 0)),
            ],
            out_specs=pl.BlockSpec((None, Tc, hd, NP), lambda b, t: (b, t, 0, 0)),
            scratch_shapes=[
                pltpu.VMEM((hd, EXT), jnp.float32),   # haloed flat state
                pltpu.VMEM((KKP, NP), jnp.float32),   # im2col stack
            ],
        ),
        compiler_params=pltpu.CompilerParams(
            # batch is independent (megacore on v7x when B >= 2); time chunks
            # carry state in scratch and must run sequentially.
            # TODO(synk): for B == 1 deployments on v7x, split H across the two
            # TensorCores with a per-step halo exchange to use both cores.
            dimension_semantics=("parallel", "arbitrary"),
        ),
    )(u, w2, mask)

    # strip the lane pad + spatial halo in the wrapper (layout plumbing only)
    y = y[..., :Hp * Wp].reshape(B, T, hd, Hp, Wp)
    return y[:, :, :, ph:ph + H, pw:pw + W]               # (B, T, Hd, H, W)


def conv_rnn_forward(x, params, batch_first=False, return_all_layers=False,
                     time_chunk=None):
    """Mirrors ConvRNN.forward. x: (t,b,c,h,w) if not batch_first else (b,t,c,h,w)."""
    if not batch_first:
        x = jnp.transpose(x, (1, 0, 2, 3, 4))            # (B, T, C, H, W)
    cur = jnp.transpose(x, (0, 1, 3, 4, 2))              # (B, T, H, W, C)

    layer_output_list, last_state_list = [], []
    for (wx_hwio, wh_hwio, bias, hd) in params:
        kh, kw = wx_hwio.shape[0], wx_hwio.shape[1]
        # only the gate (last Hd) output channels ever feed tanh -> slice them
        wx_gate = wx_hwio[..., 3 * hd:4 * hd]            # (kh,kw,cin,Hd)
        wh_gate = wh_hwio[..., 3 * hd:4 * hd]            # (kh,kw,hd, Hd)
        b_gate = bias[:, 3 * hd:4 * hd].reshape(hd)      # (Hd,)

        y = convrnn_layer(cur, wx_gate, wh_gate, b_gate, hd, kh, kw,
                          time_chunk=time_chunk)         # (B, T, Hd, H, W)
        cur = jnp.transpose(y, (0, 1, 3, 4, 2))          # next layer (B,T,H,W,Hd)
        h_last = y[:, -1]                                # (B, Hd, H, W)
        layer_output_list.append(y)
        last_state_list.append([h_last, h_last])         # c_next == h_next

    if not return_all_layers:
        layer_output_list = layer_output_list[-1:]
        last_state_list = last_state_list[-1:]
    return layer_output_list, last_state_list


def init_params(key, input_dim, hidden_dims, kernel_sizes, bias=True):
    """Deterministic Conv2d-style init. PyTorch weight is OIHW (4Hd, Cin+Hd, kh, kw).
    Full (4Hd) weights are kept so the reference can run the unmodified conv."""
    params = []
    cin = input_dim
    for hd, (kh, kw) in zip(hidden_dims, kernel_sizes):
        key, k1, k2 = jax.random.split(key, 3)
        fan_in = (cin + hd) * kh * kw
        bound = 1.0 / (fan_in ** 0.5)
        w_oihw = jax.random.uniform(k1, (4 * hd, cin + hd, kh, kw),
                                    jnp.float32, -bound, bound)
        b = (jax.random.uniform(k2, (4 * hd,), jnp.float32, -bound, bound)
             if bias else jnp.zeros((4 * hd,), jnp.float32))
        wx = jnp.transpose(w_oihw[:, :cin], (2, 3, 1, 0))   # (kh,kw,cin,4Hd) HWIO
        wh = jnp.transpose(w_oihw[:, cin:], (2, 3, 1, 0))   # (kh,kw,hd, 4Hd) HWIO
        params.append((wx, wh, b.reshape(1, 4 * hd), hd))
        cin = hd
    return params


def _reference_forward(x_tbchw, params):
    """Pure-JAX reference (full 4*Hd lax conv, then gate slice) for validation."""
    x = jnp.transpose(x_tbchw, (1, 0, 2, 3, 4))      # (B, T, C, H, W)
    cur = jnp.transpose(x, (1, 0, 3, 4, 2))          # (T, B, H, W, C)
    T = cur.shape[0]
    for (wx, wh, b, hd) in params:
        B, H, W = cur.shape[1], cur.shape[2], cur.shape[3]
        h = jnp.zeros((B, H, W, hd), jnp.float32)
        dn_x = lax.conv_dimension_numbers(cur[0].shape, wx.shape,
                                          ('NHWC', 'HWIO', 'NHWC'))
        dn_h = lax.conv_dimension_numbers(h.shape, wh.shape,
                                          ('NHWC', 'HWIO', 'NHWC'))
        outs = []
        for t in range(T):
            cc = lax.conv_general_dilated(cur[t], wx, (1, 1), 'SAME',
                                          dimension_numbers=dn_x)
            cc = cc + lax.conv_general_dilated(h, wh, (1, 1), 'SAME',
                                               dimension_numbers=dn_h)
            cc = cc + b.reshape(1, 1, 1, -1)
            h = jnp.tanh(cc[..., 3 * hd:4 * hd])
            outs.append(h)
        cur = jnp.stack(outs, axis=0)
    return jnp.transpose(cur, (1, 0, 4, 2, 3))       # (B, T, Hd, H, W)


if __name__ == "__main__":
    # ConvRNN(input_size=(16,16), input_dim=4, hidden_dim=32, kernel_size=(3,3),
    #         num_layers=2, batch_first=False, bias=True)
    T, B, C, H, W = 8, 2, 4, 16, 16
    hidden_dims = [32, 32]
    kernel_sizes = [(3, 3), (3, 3)]

    key = jax.random.PRNGKey(0)
    key, kx = jax.random.split(key)
    x = jax.random.normal(kx, (T, B, C, H, W), jnp.float32)   # (t, b, c, h, w)

    params = init_params(key, C, hidden_dims, kernel_sizes, bias=True)

    # time_chunk=4 exercises the chunked (VMEM-bounded) recurrence path.
    layer_outputs, last_states = conv_rnn_forward(x, params, batch_first=False,
                                                  return_all_layers=False,
                                                  time_chunk=4)
    out = jax.block_until_ready(layer_outputs[0])             # (B, T, Hd, H, W)
    h_last, c_last = last_states[0]
    jax.block_until_ready(h_last)
    jax.block_until_ready(c_last)

    ref = _reference_forward(x, params)
    assert out.shape == (B, T, hidden_dims[-1], H, W)
    assert h_last.shape == (B, hidden_dims[-1], H, W)
    assert jnp.allclose(out, ref, atol=1e-4, rtol=1e-4), "mismatch vs JAX reference"
    assert jnp.allclose(h_last, ref[:, -1], atol=1e-4, rtol=1e-4)
    assert jnp.allclose(c_last, h_last)   # c_next == h_next in this cell

    print("KERNEL_OK")
</pallas_src>

<mosaic_0001>
module attributes {stable_mosaic.version = 11 : i64} {
  func.func @convrnn_recurrence_kernel(%arg0: i32, %arg1: i32, %arg2: memref<1x4x32x384xf32, #tpu.memory_space<vmem>>, %arg3: memref<32x384xf32, #tpu.memory_space<vmem>>, %arg4: memref<32x384xf32, #tpu.memory_space<vmem>>, %arg5: memref<1x4x32x384xf32, #tpu.memory_space<vmem>>, %arg6: memref<32x640xf32, #tpu.memory_space<vmem>>, %arg7: memref<384x384xf32, #tpu.memory_space<vmem>>) attributes {dimension_semantics = [#tpu.dimension_semantics<parallel>, #tpu.dimension_semantics<arbitrary>], iteration_bounds = array<i64: 2, 2>, scalar_prefetch = 0 : i64, scratch_operands = 2 : i64, tpu.core_type = #tpu.core_type<tc>, window_params = [{transform_indices = @transform_0, window_bounds = array<i64: 1, 4, 32, 384>}, {pipeline_mode = #tpu.pipeline_mode<synchronous>, transform_indices = @transform_1, window_bounds = array<i64: 32, 384>}, {pipeline_mode = #tpu.pipeline_mode<synchronous>, transform_indices = @transform_2, window_bounds = array<i64: 32, 384>}, {transform_indices = @transform_3, window_bounds = array<i64: 1, 4, 32, 384>}]} {
    %cst = arith.constant 0.000000e+00 : f32
    %0 = vector.broadcast %cst : f32 to vector<96x384xf32>
    %c288 = arith.constant 288 : index
    %c0 = arith.constant 0 : index
    %1 = vector.load %arg7[%c288, %c0] : memref<384x384xf32, #tpu.memory_space<vmem>>, vector<96x384xf32>
    tpu.vector_store %arg7[%c288, %c0], %0 {strides = array<i32>} : memref<384x384xf32, #tpu.memory_space<vmem>>, vector<96x384xf32>,
    %c0_i32 = arith.constant 0 : i32
    %2 = arith.cmpi eq, %arg1, %c0_i32 : i32
    %3 = arith.extui %2 : i1 to i32
    %c0_i32_0 = arith.constant 0 : i32
    %4 = arith.cmpi ne, %3, %c0_i32_0 : i32
    scf.if %4 {
      %cst_190 = arith.constant 0.000000e+00 : f32
      %137 = vector.broadcast %cst_190 : f32 to vector<32x640xf32>
      %c0_191 = arith.constant 0 : index
      %c0_192 = arith.constant 0 : index
      %138 = vector.load %arg6[%c0_191, %c0_192] : memref<32x640xf32, #tpu.memory_space<vmem>>, vector<32x640xf32>
      tpu.vector_store %arg6[%c0_191, %c0_192], %137 {strides = array<i32>} : memref<32x640xf32, #tpu.memory_space<vmem>>, vector<32x640xf32>,
    } else {
    }
    %c0_i32_1 = arith.constant 0 : i32
    %c0_2 = arith.constant 0 : index
    %c109 = arith.constant 109 : index
    %5 = vector.load %arg6[%c0_2, %c109] : memref<32x640xf32, #tpu.memory_space<vmem>>, vector<32x384xf32>
    %c0_3 = arith.constant 0 : index
    %c0_4 = arith.constant 0 : index
    %6 = vector.load %arg7[%c0_3, %c0_4] : memref<384x384xf32, #tpu.memory_space<vmem>>, vector<32x384xf32>
    tpu.vector_store %arg7[%c0_3, %c0_4], %5 {strides = array<i32>} : memref<384x384xf32, #tpu.memory_space<vmem>>, vector<32x384xf32>,
    %c0_5 = arith.constant 0 : index
    %c110 = arith.constant 110 : index
    %7 = vector.load %arg6[%c0_5, %c110] : memref<32x640xf32, #tpu.memory_space<vmem>>, vector<32x384xf32>
    %c32 = arith.constant 32 : index
    %c0_6 = arith.constant 0 : index
    %8 = vector.load %arg7[%c32, %c0_6] : memref<384x384xf32, #tpu.memory_space<vmem>>, vector<32x384xf32>
    tpu.vector_store %arg7[%c32, %c0_6], %7 {strides = array<i32>} : memref<384x384xf32, #tpu.memory_space<vmem>>, vector<32x384xf32>,
    %c0_7 = arith.constant 0 : index
    %c111 = arith.constant 111 : index
    %9 = vector.load %arg6[%c0_7, %c111] : memref<32x640xf32, #tpu.memory_space<vmem>>, vector<32x384xf32>
    %c64 = arith.constant 64 : index
    %c0_8 = arith.constant 0 : index
    %10 = vector.load %arg7[%c64, %c0_8] : memref<384x384xf32, #tpu.memory_space<vmem>>, vector<32x384xf32>
    tpu.vector_store %arg7[%c64, %c0_8], %9 {strides = array<i32>} : memref<384x384xf32, #tpu.memory_space<vmem>>, vector<32x384xf32>,
    %c0_9 = arith.constant 0 : index
    %c127 = arith.constant 127 : index
    %11 = vector.load %arg6[%c0_9, %c127] : memref<32x640xf32, #tpu.memory_space<vmem>>, vector<32x384xf32>
    %c96 = arith.constant 96 : index
    %c0_10 = arith.constant 0 : index
    %12 = vector.load %arg7[%c96, %c0_10] : memref<384x384xf32, #tpu.memory_space<vmem>>, vector<32x384xf32>
    tpu.vector_store %arg7[%c96, %c0_10], %11 {strides = array<i32>} : memref<384x384xf32, #tpu.memory_space<vmem>>, vector<32x384xf32>,
    %c0_11 = arith.constant 0 : index
    %c128 = arith.constant 128 : index
    %13 = vector.load %arg6[%c0_11, %c128] : memref<32x640xf32, #tpu.memory_space<vmem>>, vector<32x384xf32>
    %c128_12 = arith.constant 128 : index
    %c0_13 = arith.constant 0 : index
    %14 = vector.load %arg7[%c128_12, %c0_13] : memref<384x384xf32, #tpu.memory_space<vmem>>, vector<32x384xf32>
    tpu.vector_store %arg7[%c128_12, %c0_13], %13 {strides = array<i32>} : memref<384x384xf32, #tpu.memory_space<vmem>>, vector<32x384xf32>,
    %c0_14 = arith.constant 0 : index
    %c129 = arith.constant 129 : index
    %15 = vector.load %arg6[%c0_14, %c129] : memref<32x640xf32, #tpu.memory_space<vmem>>, vector<32x384xf32>
    %c160 = arith.constant 160 : index
    %c0_15 = arith.constant 0 : index
    %16 = vector.load %arg7[%c160, %c0_15] : memref<384x384xf32, #tpu.memory_space<vmem>>, vector<32x384xf32>
    tpu.vector_store %arg7[%c160, %c0_15], %15 {strides = array<i32>} : memref<384x384xf32, #tpu.memory_space<vmem>>, vector<32x384xf32>,
    %c0_16 = arith.constant 0 : index
    %c145 = arith.constant 145 : index
    %17 = vector.load %arg6[%c0_16, %c145] : memref<32x640xf32, #tpu.memory_space<vmem>>, vector<32x384xf32>
    %c192 = arith.constant 192 : index
    %c0_17 = arith.constant 0 : index
    %18 = vector.load %arg7[%c192, %c0_17] : memref<384x384xf32, #tpu.memory_space<vmem>>, vector<32x384xf32>
    tpu.vector_store %arg7[%c192, %c0_17], %17 {strides = array<i32>} : memref<384x384xf32, #tpu.memory_space<vmem>>, vector<32x384xf32>,
    %c0_18 = arith.constant 0 : index
    %c146 = arith.constant 146 : index
    %19 = vector.load %arg6[%c0_18, %c146] : memref<32x640xf32, #tpu.memory_space<vmem>>, vector<32x384xf32>
    %c224 = arith.constant 224 : index
    %c0_19 = arith.constant 0 : index
    %20 = vector.load %arg7[%c224, %c0_19] : memref<384x384xf32, #tpu.memory_space<vmem>>, vector<32x384xf32>
    tpu.vector_store %arg7[%c224, %c0_19], %19 {strides = array<i32>} : memref<384x384xf32, #tpu.memory_space<vmem>>, vector<32x384xf32>,
    %c0_20 = arith.constant 0 : index
    %c147 = arith.constant 147 : index
    %21 = vector.load %arg6[%c0_20, %c147] : memref<32x640xf32, #tpu.memory_space<vmem>>, vector<32x384xf32>
    %c256 = arith.constant 256 : index
    %c0_21 = arith.constant 0 : index
    %22 = vector.load %arg7[%c256, %c0_21] : memref<384x384xf32, #tpu.memory_space<vmem>>, vector<32x384xf32>
    tpu.vector_store %arg7[%c256, %c0_21], %21 {strides = array<i32>} : memref<384x384xf32, #tpu.memory_space<vmem>>, vector<32x384xf32>,
    %c0_22 = arith.constant 0 : index
    %c0_23 = arith.constant 0 : index
    %23 = vector.load %arg3[%c0_22, %c0_23] : memref<32x384xf32, #tpu.memory_space<vmem>>, vector<32x384xf32>
    %c0_24 = arith.constant 0 : index
    %c0_25 = arith.constant 0 : index
    %24 = vector.load %arg7[%c0_24, %c0_25] : memref<384x384xf32, #tpu.memory_space<vmem>>, vector<384x384xf32>
    %cst_26 = arith.constant dense<0.000000e+00> : vector<32x384xf32>
    %25 = tpu.matmul %23, %24, %cst_26 {dimension_numbers = #tpu.dot_dimension_numbers<[1], [0], [0], [1], [0, 0, 1, 1], [], []>} : vector<32x384xf32>, vector<384x384xf32>, vector<32x384xf32> -> vector<32x384xf32>
    %c0_27 = arith.constant 0 : index
    %26 = arith.index_cast %c0_i32_1 : i32 to index
    %c0_28 = arith.constant 0 : index
    %c0_29 = arith.constant 0 : index
    %27 = vector.load %arg2[%c0_27, %26, %c0_28, %c0_29] : memref<1x4x32x384xf32, #tpu.memory_space<vmem>>, vector<1x1x32x384xf32>
    %28 = vector.shape_cast %27 : vector<1x1x32x384xf32> to vector<32x384xf32>
    %29 = arith.addf %25, %28 : vector<32x384xf32>
    %30 = math.tanh %29 : vector<32x384xf32>
    %c0_30 = arith.constant 0 : index
    %c0_31 = arith.constant 0 : index
    %31 = vector.load %arg4[%c0_30, %c0_31] : memref<32x384xf32, #tpu.memory_space<vmem>>, vector<32x384xf32>
    %32 = arith.mulf %30, %31 : vector<32x384xf32>
    %c0_32 = arith.constant 0 : index
    %33 = arith.index_cast %c0_i32_1 : i32 to index
    %c0_33 = arith.constant 0 : index
    %c0_34 = arith.constant 0 : index
    %34 = vector.load %arg5[%c0_32, %33, %c0_33, %c0_34] : memref<1x4x32x384xf32, #tpu.memory_space<vmem>>, vector<1x1x32x384xf32>
    %35 = vector.shape_cast %34 : vector<1x1x32x384xf32> to vector<32x384xf32>
    %36 = vector.shape_cast %32 : vector<32x384xf32> to vector<1x1x32x384xf32>
    tpu.vector_store %arg5[%c0_32, %33, %c0_33, %c0_34], %36 {strides = array<i32>} : memref<1x4x32x384xf32, #tpu.memory_space<vmem>>, vector<1x1x32x384xf32>,
    %c0_35 = arith.constant 0 : index
    %c128_36 = arith.constant 128 : index
    %37 = vector.load %arg6[%c0_35, %c128_36] : memref<32x640xf32, #tpu.memory_space<vmem>>, vector<32x384xf32>
    tpu.vector_store %arg6[%c0_35, %c128_36], %32 {strides = array<i32>} : memref<32x640xf32, #tpu.memory_space<vmem>>, vector<32x384xf32>,
    %c1_i32 = arith.constant 1 : i32
    %c0_37 = arith.constant 0 : index
    %c109_38 = arith.constant 109 : index
    %38 = vector.load %arg6[%c0_37, %c109_38] : memref<32x640xf32, #tpu.memory_space<vmem>>, vector<32x384xf32>
    %c0_39 = arith.constant 0 : index
    %c0_40 = arith.constant 0 : index
    %39 = vector.load %arg7[%c0_39, %c0_40] : memref<384x384xf32, #tpu.memory_space<vmem>>, vector<32x384xf32>
    tpu.vector_store %arg7[%c0_39, %c0_40], %38 {strides = array<i32>} : memref<384x384xf32, #tpu.memory_space<vmem>>, vector<32x384xf32>,
    %c0_41 = arith.constant 0 : index
    %c110_42 = arith.constant 110 : index
    %40 = vector.load %arg6[%c0_41, %c110_42] : memref<32x640xf32, #tpu.memory_space<vmem>>, vector<32x384xf32>
    %c32_43 = arith.constant 32 : index
    %c0_44 = arith.constant 0 : index
    %41 = vector.load %arg7[%c32_43, %c0_44] : memref<384x384xf32, #tpu.memory_space<vmem>>, vector<32x384xf32>
    tpu.vector_store %arg7[%c32_43, %c0_44], %40 {strides = array<i32>} : memref<384x384xf32, #tpu.memory_space<vmem>>, vector<32x384xf32>,
    %c0_45 = arith.constant 0 : index
    %c111_46 = arith.constant 111 : index
    %42 = vector.load %arg6[%c0_45, %c111_46] : memref<32x640xf32, #tpu.memory_space<vmem>>, vector<32x384xf32>
    %c64_47 = arith.constant 64 : index
    %c0_48 = arith.constant 0 : index
    %43 = vector.load %arg7[%c64_47, %c0_48] : memref<384x384xf32, #tpu.memory_space<vmem>>, vector<32x384xf32>
    tpu.vector_store %arg7[%c64_47, %c0_48], %42 {strides = array<i32>} : memref<384x384xf32, #tpu.memory_space<vmem>>, vector<32x384xf32>,
    %c0_49 = arith.constant 0 : index
    %c127_50 = arith.constant 127 : index
    %44 = vector.load %arg6[%c0_49, %c127_50] : memref<32x640xf32, #tpu.memory_space<vmem>>, vector<32x384xf32>
    %c96_51 = arith.constant 96 : index
    %c0_52 = arith.constant 0 : index
    %45 = vector.load %arg7[%c96_51, %c0_52] : memref<384x384xf32, #tpu.memory_space<vmem>>, vector<32x384xf32>
    tpu.vector_store %arg7[%c96_51, %c0_52], %44 {strides = array<i32>} : memref<384x384xf32, #tpu.memory_space<vmem>>, vector<32x384xf32>,
    %c0_53 = arith.constant 0 : index
    %c128_54 = arith.constant 128 : index
    %46 = vector.load %arg6[%c0_53, %c128_54] : memref<32x640xf32, #tpu.memory_space<vmem>>, vector<32x384xf32>
    %c128_55 = arith.constant 128 : index
    %c0_56 = arith.constant 0 : index
    %47 = vector.load %arg7[%c128_55, %c0_56] : memref<384x384xf32, #tpu.memory_space<vmem>>, vector<32x384xf32>
    tpu.vector_store %arg7[%c128_55, %c0_56], %46 {strides = array<i32>} : memref<384x384xf32, #tpu.memory_space<vmem>>, vector<32x384xf32>,
    %c0_57 = arith.constant 0 : index
    %c129_58 = arith.constant 129 : index
    %48 = vector.load %arg6[%c0_57, %c129_58] : memref<32x640xf32, #tpu.memory_space<vmem>>, vector<32x384xf32>
    %c160_59 = arith.constant 160 : index
    %c0_60 = arith.constant 0 : index
    %49 = vector.load %arg7[%c160_59, %c0_60] : memref<384x384xf32, #tpu.memory_space<vmem>>, vector<32x384xf32>
    tpu.vector_store %arg7[%c160_59, %c0_60], %48 {strides = array<i32>} : memref<384x384xf32, #tpu.memory_space<vmem>>, vector<32x384xf32>,
    %c0_61 = arith.constant 0 : index
    %c145_62 = arith.constant 145 : index
    %50 = vector.load %arg6[%c0_61, %c145_62] : memref<32x640xf32, #tpu.memory_space<vmem>>, vector<32x384xf32>
    %c192_63 = arith.constant 192 : index
    %c0_64 = arith.constant 0 : index
    %51 = vector.load %arg7[%c192_63, %c0_64] : memref<384x384xf32, #tpu.memory_space<vmem>>, vector<32x384xf32>
    tpu.vector_store %arg7[%c192_63, %c0_64], %50 {strides = array<i32>} : memref<384x384xf32, #tpu.memory_space<vmem>>, vector<32x384xf32>,
    %c0_65 = arith.constant 0 : index
    %c146_66 = arith.constant 146 : index
    %52 = vector.load %arg6[%c0_65, %c146_66] : memref<32x640xf32, #tpu.memory_space<vmem>>, vector<32x384xf32>
    %c224_67 = arith.constant 224 : index
    %c0_68 = arith.constant 0 : index
    %53 = vector.load %arg7[%c224_67, %c0_68] : memref<384x384xf32, #tpu.memory_space<vmem>>, vector<32x384xf32>
    tpu.vector_store %arg7[%c224_67, %c0_68], %52 {strides = array<i32>} : memref<384x384xf32, #tpu.memory_space<vmem>>, vector<32x384xf32>,
    %c0_69 = arith.constant 0 : index
    %c147_70 = arith.constant 147 : index
    %54 = vector.load %arg6[%c0_69, %c147_70] : memref<32x640xf32, #tpu.memory_space<vmem>>, vector<32x384xf32>
    %c256_71 = arith.constant 256 : index
    %c0_72 = arith.constant 0 : index
    %55 = vector.load %arg7[%c256_71, %c0_72] : memref<384x384xf32, #tpu.memory_space<vmem>>, vector<32x384xf32>
    tpu.vector_store %arg7[%c256_71, %c0_72], %54 {strides = array<i32>} : memref<384x384xf32, #tpu.memory_space<vmem>>, vector<32x384xf32>,
    %c0_73 = arith.constant 0 : index
    %c0_74 = arith.constant 0 : index
    %56 = vector.load %arg3[%c0_73, %c0_74] : memref<32x384xf32, #tpu.memory_space<vmem>>, vector<32x384xf32>
    %c0_75 = arith.constant 0 : index
    %c0_76 = arith.constant 0 : index
    %57 = vector.load %arg7[%c0_75, %c0_76] : memref<384x384xf32, #tpu.memory_space<vmem>>, vector<384x384xf32>
    %cst_77 = arith.constant dense<0.000000e+00> : vector<32x384xf32>
    %58 = tpu.matmul %56, %57, %cst_77 {dimension_numbers = #tpu.dot_dimension_numbers<[1], [0], [0], [1], [0, 0, 1, 1], [], []>} : vector<32x384xf32>, vector<384x384xf32>, vector<32x384xf32> -> vector<32x384xf32>
    %c0_78 = arith.constant 0 : index
    %59 = arith.index_cast %c1_i32 : i32 to index
    %c0_79 = arith.constant 0 : index
    %c0_80 = arith.constant 0 : index
    %60 = vector.load %arg2[%c0_78, %59, %c0_79, %c0_80] : memref<1x4x32x384xf32, #tpu.memory_space<vmem>>, vector<1x1x32x384xf32>
    %61 = vector.shape_cast %60 : vector<1x1x32x384xf32> to vector<32x384xf32>
    %62 = arith.addf %58, %61 : vector<32x384xf32>
    %63 = math.tanh %62 : vector<32x384xf32>
    %c0_81 = arith.constant 0 : index
    %c0_82 = arith.constant 0 : index
    %64 = vector.load %arg4[%c0_81, %c0_82] : memref<32x384xf32, #tpu.memory_space<vmem>>, vector<32x384xf32>
    %65 = arith.mulf %63, %64 : vector<32x384xf32>
    %c0_83 = arith.constant 0 : index
    %66 = arith.index_cast %c1_i32 : i32 to index
    %c0_84 = arith.constant 0 : index
    %c0_85 = arith.constant 0 : index
    %67 = vector.load %arg5[%c0_83, %66, %c0_84, %c0_85] : memref<1x4x32x384xf32, #tpu.memory_space<vmem>>, vector<1x1x32x384xf32>
    %68 = vector.shape_cast %67 : vector<1x1x32x384xf32> to vector<32x384xf32>
    %69 = vector.shape_cast %65 : vector<32x384xf32> to vector<1x1x32x384xf32>
    tpu.vector_store %arg5[%c0_83, %66, %c0_84, %c0_85], %69 {strides = array<i32>} : memref<1x4x32x384xf32, #tpu.memory_space<vmem>>, vector<1x1x32x384xf32>,
    %c0_86 = arith.constant 0 : index
    %c128_87 = arith.constant 128 : index
    %70 = vector.load %arg6[%c0_86, %c128_87] : memref<32x640xf32, #tpu.memory_space<vmem>>, vector<32x384xf32>
    tpu.vector_store %arg6[%c0_86, %c128_87], %65 {strides = array<i32>} : memref<32x640xf32, #tpu.memory_space<vmem>>, vector<32x384xf32>,
    %c2_i32 = arith.constant 2 : i32
    %c0_88 = arith.constant 0 : index
    %c109_89 = arith.constant 109 : index
    %71 = vector.load %arg6[%c0_88, %c109_89] : memref<32x640xf32, #tpu.memory_space<vmem>>, vector<32x384xf32>
    %c0_90 = arith.constant 0 : index
    %c0_91 = arith.constant 0 : index
    %72 = vector.load %arg7[%c0_90, %c0_91] : memref<384x384xf32, #tpu.memory_space<vmem>>, vector<32x384xf32>
    tpu.vector_store %arg7[%c0_90, %c0_91], %71 {strides = array<i32>} : memref<384x384xf32, #tpu.memory_space<vmem>>, vector<32x384xf32>,
    %c0_92 = arith.constant 0 : index
    %c110_93 = arith.constant 110 : index
    %73 = vector.load %arg6[%c0_92, %c110_93] : memref<32x640xf32, #tpu.memory_space<vmem>>, vector<32x384xf32>
    %c32_94 = arith.constant 32 : index
    %c0_95 = arith.constant 0 : index
    %74 = vector.load %arg7[%c32_94, %c0_95] : memref<384x384xf32, #tpu.memory_space<vmem>>, vector<32x384xf32>
    tpu.vector_store %arg7[%c32_94, %c0_95], %73 {strides = array<i32>} : memref<384x384xf32, #tpu.memory_space<vmem>>, vector<32x384xf32>,
    %c0_96 = arith.constant 0 : index
    %c111_97 = arith.constant 111 : index
    %75 = vector.load %arg6[%c0_96, %c111_97] : memref<32x640xf32, #tpu.memory_space<vmem>>, vector<32x384xf32>
    %c64_98 = arith.constant 64 : index
    %c0_99 = arith.constant 0 : index
    %76 = vector.load %arg7[%c64_98, %c0_99] : memref<384x384xf32, #tpu.memory_space<vmem>>, vector<32x384xf32>
    tpu.vector_store %arg7[%c64_98, %c0_99], %75 {strides = array<i32>} : memref<384x384xf32, #tpu.memory_space<vmem>>, vector<32x384xf32>,
    %c0_100 = arith.constant 0 : index
    %c127_101 = arith.constant 127 : index
    %77 = vector.load %arg6[%c0_100, %c127_101] : memref<32x640xf32, #tpu.memory_space<vmem>>, vector<32x384xf32>
    %c96_102 = arith.constant 96 : index
    %c0_103 = arith.constant 0 : index
    %78 = vector.load %arg7[%c96_102, %c0_103] : memref<384x384xf32, #tpu.memory_space<vmem>>, vector<32x384xf32>
    tpu.vector_store %arg7[%c96_102, %c0_103], %77 {strides = array<i32>} : memref<384x384xf32, #tpu.memory_space<vmem>>, vector<32x384xf32>,
    %c0_104 = arith.constant 0 : index
    %c128_105 = arith.constant 128 : index
    %79 = vector.load %arg6[%c0_104, %c128_105] : memref<32x640xf32, #tpu.memory_space<vmem>>, vector<32x384xf32>
    %c128_106 = arith.constant 128 : index
    %c0_107 = arith.constant 0 : index
    %80 = vector.load %arg7[%c128_106, %c0_107] : memref<384x384xf32, #tpu.memory_space<vmem>>, vector<32x384xf32>
    tpu.vector_store %arg7[%c128_106, %c0_107], %79 {strides = array<i32>} : memref<384x384xf32, #tpu.memory_space<vmem>>, vector<32x384xf32>,
    %c0_108 = arith.constant 0 : index
    %c129_109 = arith.constant 129 : index
    %81 = vector.load %arg6[%c0_108, %c129_109] : memref<32x640xf32, #tpu.memory_space<vmem>>, vector<32x384xf32>
    %c160_110 = arith.constant 160 : index
    %c0_111 = arith.constant 0 : index
    %82 = vector.load %arg7[%c160_110, %c0_111] : memref<384x384xf32, #tpu.memory_space<vmem>>, vector<32x384xf32>
    tpu.vector_store %arg7[%c160_110, %c0_111], %81 {strides = array<i32>} : memref<384x384xf32, #tpu.memory_space<vmem>>, vector<32x384xf32>,
    %c0_112 = arith.constant 0 : index
    %c145_113 = arith.constant 145 : index
    %83 = vector.load %arg6[%c0_112, %c145_113] : memref<32x640xf32, #tpu.memory_space<vmem>>, vector<32x384xf32>
    %c192_114 = arith.constant 192 : index
    %c0_115 = arith.constant 0 : index
    %84 = vector.load %arg7[%c192_114, %c0_115] : memref<384x384xf32, #tpu.memory_space<vmem>>, vector<32x384xf32>
    tpu.vector_store %arg7[%c192_114, %c0_115], %83 {strides = array<i32>} : memref<384x384xf32, #tpu.memory_space<vmem>>, vector<32x384xf32>,
    %c0_116 = arith.constant 0 : index
    %c146_117 = arith.constant 146 : index
    %85 = vector.load %arg6[%c0_116, %c146_117] : memref<32x640xf32, #tpu.memory_space<vmem>>, vector<32x384xf32>
    %c224_118 = arith.constant 224 : index
    %c0_119 = arith.constant 0 : index
    %86 = vector.load %arg7[%c224_118, %c0_119] : memref<384x384xf32, #tpu.memory_space<vmem>>, vector<32x384xf32>
    tpu.vector_store %arg7[%c224_118, %c0_119], %85 {strides = array<i32>} : memref<384x384xf32, #tpu.memory_space<vmem>>, vector<32x384xf32>,
    %c0_120 = arith.constant 0 : index
    %c147_121 = arith.constant 147 : index
    %87 = vector.load %arg6[%c0_120, %c147_121] : memref<32x640xf32, #tpu.memory_space<vmem>>, vector<32x384xf32>
    %c256_122 = arith.constant 256 : index
    %c0_123 = arith.constant 0 : index
    %88 = vector.load %arg7[%c256_122, %c0_123] : memref<384x384xf32, #tpu.memory_space<vmem>>, vector<32x384xf32>
    tpu.vector_store %arg7[%c256_122, %c0_123], %87 {strides = array<i32>} : memref<384x384xf32, #tpu.memory_space<vmem>>, vector<32x384xf32>,
    %c0_124 = arith.constant 0 : index
    %c0_125 = arith.constant 0 : index
    %89 = vector.load %arg3[%c0_124, %c0_125] : memref<32x384xf32, #tpu.memory_space<vmem>>, vector<32x384xf32>
    %c0_126 = arith.constant 0 : index
    %c0_127 = arith.constant 0 : index
    %90 = vector.load %arg7[%c0_126, %c0_127] : memref<384x384xf32, #tpu.memory_space<vmem>>, vector<384x384xf32>
    %cst_128 = arith.constant dense<0.000000e+00> : vector<32x384xf32>
    %91 = tpu.matmul %89, %90, %cst_128 {dimension_numbers = #tpu.dot_dimension_numbers<[1], [0], [0], [1], [0, 0, 1, 1], [], []>} : vector<32x384xf32>, vector<384x384xf32>, vector<32x384xf32> -> vector<32x384xf32>
    %c0_129 = arith.constant 0 : index
    %92 = arith.index_cast %c2_i32 : i32 to index
    %c0_130 = arith.constant 0 : index
    %c0_131 = arith.constant 0 : index
    %93 = vector.load %arg2[%c0_129, %92, %c0_130, %c0_131] : memref<1x4x32x384xf32, #tpu.memory_space<vmem>>, vector<1x1x32x384xf32>
    %94 = vector.shape_cast %93 : vector<1x1x32x384xf32> to vector<32x384xf32>
    %95 = arith.addf %91, %94 : vector<32x384xf32>
    %96 = math.tanh %95 : vector<32x384xf32>
    %c0_132 = arith.constant 0 : index
    %c0_133 = arith.constant 0 : index
    %97 = vector.load %arg4[%c0_132, %c0_133] : memref<32x384xf32, #tpu.memory_space<vmem>>, vector<32x384xf32>
    %98 = arith.mulf %96, %97 : vector<32x384xf32>
    %c0_134 = arith.constant 0 : index
    %99 = arith.index_cast %c2_i32 : i32 to index
    %c0_135 = arith.constant 0 : index
    %c0_136 = arith.constant 0 : index
    %100 = vector.load %arg5[%c0_134, %99, %c0_135, %c0_136] : memref<1x4x32x384xf32, #tpu.memory_space<vmem>>, vector<1x1x32x384xf32>
    %101 = vector.shape_cast %100 : vector<1x1x32x384xf32> to vector<32x384xf32>
    %102 = vector.shape_cast %98 : vector<32x384xf32> to vector<1x1x32x384xf32>
    tpu.vector_store %arg5[%c0_134, %99, %c0_135, %c0_136], %102 {strides = array<i32>} : memref<1x4x32x384xf32, #tpu.memory_space<vmem>>, vector<1x1x32x384xf32>,
    %c0_137 = arith.constant 0 : index
    %c128_138 = arith.constant 128 : index
    %103 = vector.load %arg6[%c0_137, %c128_138] : memref<32x640xf32, #tpu.memory_space<vmem>>, vector<32x384xf32>
    tpu.vector_store %arg6[%c0_137, %c128_138], %98 {strides = array<i32>} : memref<32x640xf32, #tpu.memory_space<vmem>>, vector<32x384xf32>,
    %c3_i32 = arith.constant 3 : i32
    %c0_139 = arith.constant 0 : index
    %c109_140 = arith.constant 109 : index
    %104 = vector.load %arg6[%c0_139, %c109_140] : memref<32x640xf32, #tpu.memory_space<vmem>>, vector<32x384xf32>
    %c0_141 = arith.constant 0 : index
    %c0_142 = arith.constant 0 : index
    %105 = vector.load %arg7[%c0_141, %c0_142] : memref<384x384xf32, #tpu.memory_space<vmem>>, vector<32x384xf32>
    tpu.vector_store %arg7[%c0_141, %c0_142], %104 {strides = array<i32>} : memref<384x384xf32, #tpu.memory_space<vmem>>, vector<32x384xf32>,
    %c0_143 = arith.constant 0 : index
    %c110_144 = arith.constant 110 : index
    %106 = vector.load %arg6[%c0_143, %c110_144] : memref<32x640xf32, #tpu.memory_space<vmem>>, vector<32x384xf32>
    %c32_145 = arith.constant 32 : index
    %c0_146 = arith.constant 0 : index
    %107 = vector.load %arg7[%c32_145, %c0_146] : memref<384x384xf32, #tpu.memory_space<vmem>>, vector<32x384xf32>
    tpu.vector_store %arg7[%c32_145, %c0_146], %106 {strides = array<i32>} : memref<384x384xf32, #tpu.memory_space<vmem>>, vector<32x384xf32>,
    %c0_147 = arith.constant 0 : index
    %c111_148 = arith.constant 111 : index
    %108 = vector.load %arg6[%c0_147, %c111_148] : memref<32x640xf32, #tpu.memory_space<vmem>>, vector<32x384xf32>
    %c64_149 = arith.constant 64 : index
    %c0_150 = arith.constant 0 : index
    %109 = vector.load %arg7[%c64_149, %c0_150] : memref<384x384xf32, #tpu.memory_space<vmem>>, vector<32x384xf32>
    tpu.vector_store %arg7[%c64_149, %c0_150], %108 {strides = array<i32>} : memref<384x384xf32, #tpu.memory_space<vmem>>, vector<32x384xf32>,
    %c0_151 = arith.constant 0 : index
    %c127_152 = arith.constant 127 : index
    %110 = vector.load %arg6[%c0_151, %c127_152] : memref<32x640xf32, #tpu.memory_space<vmem>>, vector<32x384xf32>
    %c96_153 = arith.constant 96 : index
    %c0_154 = arith.constant 0 : index
    %111 = vector.load %arg7[%c96_153, %c0_154] : memref<384x384xf32, #tpu.memory_space<vmem>>, vector<32x384xf32>
    tpu.vector_store %arg7[%c96_153, %c0_154], %110 {strides = array<i32>} : memref<384x384xf32, #tpu.memory_space<vmem>>, vector<32x384xf32>,
    %c0_155 = arith.constant 0 : index
    %c128_156 = arith.constant 128 : index
    %112 = vector.load %arg6[%c0_155, %c128_156] : memref<32x640xf32, #tpu.memory_space<vmem>>, vector<32x384xf32>
    %c128_157 = arith.constant 128 : index
    %c0_158 = arith.constant 0 : index
    %113 = vector.load %arg7[%c128_157, %c0_158] : memref<384x384xf32, #tpu.memory_space<vmem>>, vector<32x384xf32>
    tpu.vector_store %arg7[%c128_157, %c0_158], %112 {strides = array<i32>} : memref<384x384xf32, #tpu.memory_space<vmem>>, vector<32x384xf32>,
    %c0_159 = arith.constant 0 : index
    %c129_160 = arith.constant 129 : index
    %114 = vector.load %arg6[%c0_159, %c129_160] : memref<32x640xf32, #tpu.memory_space<vmem>>, vector<32x384xf32>
    %c160_161 = arith.constant 160 : index
    %c0_162 = arith.constant 0 : index
    %115 = vector.load %arg7[%c160_161, %c0_162] : memref<384x384xf32, #tpu.memory_space<vmem>>, vector<32x384xf32>
    tpu.vector_store %arg7[%c160_161, %c0_162], %114 {strides = array<i32>} : memref<384x384xf32, #tpu.memory_space<vmem>>, vector<32x384xf32>,
    %c0_163 = arith.constant 0 : index
    %c145_164 = arith.constant 145 : index
    %116 = vector.load %arg6[%c0_163, %c145_164] : memref<32x640xf32, #tpu.memory_space<vmem>>, vector<32x384xf32>
    %c192_165 = arith.constant 192 : index
    %c0_166 = arith.constant 0 : index
    %117 = vector.load %arg7[%c192_165, %c0_166] : memref<384x384xf32, #tpu.memory_space<vmem>>, vector<32x384xf32>
    tpu.vector_store %arg7[%c192_165, %c0_166], %116 {strides = array<i32>} : memref<384x384xf32, #tpu.memory_space<vmem>>, vector<32x384xf32>,
    %c0_167 = arith.constant 0 : index
    %c146_168 = arith.constant 146 : index
    %118 = vector.load %arg6[%c0_167, %c146_168] : memref<32x640xf32, #tpu.memory_space<vmem>>, vector<32x384xf32>
    %c224_169 = arith.constant 224 : index
    %c0_170 = arith.constant 0 : index
    %119 = vector.load %arg7[%c224_169, %c0_170] : memref<384x384xf32, #tpu.memory_space<vmem>>, vector<32x384xf32>
    tpu.vector_store %arg7[%c224_169, %c0_170], %118 {strides = array<i32>} : memref<384x384xf32, #tpu.memory_space<vmem>>, vector<32x384xf32>,
    %c0_171 = arith.constant 0 : index
    %c147_172 = arith.constant 147 : index
    %120 = vector.load %arg6[%c0_171, %c147_172] : memref<32x640xf32, #tpu.memory_space<vmem>>, vector<32x384xf32>
    %c256_173 = arith.constant 256 : index
    %c0_174 = arith.constant 0 : index
    %121 = vector.load %arg7[%c256_173, %c0_174] : memref<384x384xf32, #tpu.memory_space<vmem>>, vector<32x384xf32>
    tpu.vector_store %arg7[%c256_173, %c0_174], %120 {strides = array<i32>} : memref<384x384xf32, #tpu.memory_space<vmem>>, vector<32x384xf32>,
    %c0_175 = arith.constant 0 : index
    %c0_176 = arith.constant 0 : index
    %122 = vector.load %arg3[%c0_175, %c0_176] : memref<32x384xf32, #tpu.memory_space<vmem>>, vector<32x384xf32>
    %c0_177 = arith.constant 0 : index
    %c0_178 = arith.constant 0 : index
    %123 = vector.load %arg7[%c0_177, %c0_178] : memref<384x384xf32, #tpu.memory_space<vmem>>, vector<384x384xf32>
    %cst_179 = arith.constant dense<0.000000e+00> : vector<32x384xf32>
    %124 = tpu.matmul %122, %123, %cst_179 {dimension_numbers = #tpu.dot_dimension_numbers<[1], [0], [0], [1], [0, 0, 1, 1], [], []>} : vector<32x384xf32>, vector<384x384xf32>, vector<32x384xf32> -> vector<32x384xf32>
    %c0_180 = arith.constant 0 : index
    %125 = arith.index_cast %c3_i32 : i32 to index
    %c0_181 = arith.constant 0 : index
    %c0_182 = arith.constant 0 : index
    %126 = vector.load %arg2[%c0_180, %125, %c0_181, %c0_182] : memref<1x4x32x384xf32, #tpu.memory_space<vmem>>, vector<1x1x32x384xf32>
    %127 = vector.shape_cast %126 : vector<1x1x32x384xf32> to vector<32x384xf32>
    %128 = arith.addf %124, %127 : vector<32x384xf32>
    %129 = math.tanh %128 : vector<32x384xf32>
    %c0_183 = arith.constant 0 : index
    %c0_184 = arith.constant 0 : index
    %130 = vector.load %arg4[%c0_183, %c0_184] : memref<32x384xf32, #tpu.memory_space<vmem>>, vector<32x384xf32>
    %131 = arith.mulf %129, %130 : vector<32x384xf32>
    %c0_185 = arith.constant 0 : index
    %132 = arith.index_cast %c3_i32 : i32 to index
    %c0_186 = arith.constant 0 : index
    %c0_187 = arith.constant 0 : index
    %133 = vector.load %arg5[%c0_185, %132, %c0_186, %c0_187] : memref<1x4x32x384xf32, #tpu.memory_space<vmem>>, vector<1x1x32x384xf32>
    %134 = vector.shape_cast %133 : vector<1x1x32x384xf32> to vector<32x384xf32>
    %135 = vector.shape_cast %131 : vector<32x384xf32> to vector<1x1x32x384xf32>
    tpu.vector_store %arg5[%c0_185, %132, %c0_186, %c0_187], %135 {strides = array<i32>} : memref<1x4x32x384xf32, #tpu.memory_space<vmem>>, vector<1x1x32x384xf32>,
    %c0_188 = arith.constant 0 : index
    %c128_189 = arith.constant 128 : index
    %136 = vector.load %arg6[%c0_188, %c128_189] : memref<32x640xf32, #tpu.memory_space<vmem>>, vector<32x384xf32>
    tpu.vector_store %arg6[%c0_188, %c128_189], %131 {strides = array<i32>} : memref<32x640xf32, #tpu.memory_space<vmem>>, vector<32x384xf32>,
    %c4_i32 = arith.constant 4 : i32
    return
  }
  func.func @transform_0(%arg0: i32, %arg1: i32) -> (i32, i32, i32, i32) {
    %c0_i32 = arith.constant 0 : i32
    %c0_i32_0 = arith.constant 0 : i32
    %c0_i32_1 = arith.constant 0 : i32
    return %arg0, %arg1, %c0_i32, %c0_i32_0 : i32, i32, i32, i32
  }
  func.func @transform_1(%arg0: i32, %arg1: i32) -> (i32, i32) {
    %c0_i32 = arith.constant 0 : i32
    %c0_i32_0 = arith.constant 0 : i32
    %c0_i32_1 = arith.constant 0 : i32
    return %c0_i32, %c0_i32_0 : i32, i32
  }
  func.func @transform_2(%arg0: i32, %arg1: i32) -> (i32, i32) {
    %c0_i32 = arith.constant 0 : i32
    %c0_i32_0 = arith.constant 0 : i32
    %c0_i32_1 = arith.constant 0 : i32
    return %c0_i32, %c0_i32_0 : i32, i32
  }
  func.func @transform_3(%arg0: i32, %arg1: i32) -> (i32, i32, i32, i32) {
    %c0_i32 = arith.constant 0 : i32
    %c0_i32_0 = arith.constant 0 : i32
    %c0_i32_1 = arith.constant 0 : i32
    return %arg0, %arg1, %c0_i32, %c0_i32_0 : i32, i32, i32, i32
  }
}

</mosaic_0001>

<llo_original>
// kernel: tpu_custom_call.1
$region0: #{tpu_custom_call.1}
  #allocation0 [shape = 'u32[]', space=smem, size = 0x4, offset = 0x4, fixed_abs, tag = 'smem constant byte address 0x4 - core index']
  #allocation1 [shape = 'u32[72,128]{1,0:T(1,128)}', space=vmem, size = 0x9000, scoped, tag = 'internal scratch']
  #allocation2 [shape = 'f32[32,640]{1,0:T(8,128)}', space=vmem, size = 0x14000, scoped, tag = 'scratch operand']
  #allocation3 [shape = 'f32[384,384]{1,0:T(8,128)}', space=vmem, size = 0x90000, scoped, tag = 'scratch operand']
  %s0 = inlined_call_operand.hbm [shape: f32[2,8,32,384], index: 0, kind: input, shape index: {}]
  %s1 = inlined_call_operand.hbm [shape: f32[32,384], index: 1, kind: input, shape index: {}]
  %s2 = inlined_call_operand.hbm [shape: f32[32,384], index: 2, kind: input, shape index: {}]
  %s3 = inlined_call_operand.hbm [shape: f32[2,8,32,384], index: 3, kind: output, shape index: {}]
  %s4 = sld [smem:[#allocation0]]
  $region61: #{tpu_custom_call.1} parent=0
    _
  %s6 = ssub.s32 1, %s4
  %s7 = scalar_select 0, %s6, %s4
  $region1: #{tpu_custom_call.1} parent=0
    #allocation4 [shape = 'u8[393216]{0}', space=vmem, size = 0x60000, scoped, tag = 'input window, operand 0']
    #allocation5 [shape = 's32[2]{0}', space=sflag, size = 0x8, scoped, tag = 'scoped memory for tpu_custom_call.1']
    #allocation6 [shape = 's32[2]{0}', space=sflag, size = 0x8, scoped, tag = 'scoped memory for tpu_custom_call.1']
    #allocation7 [shape = 'u8[49152]{0}', space=vmem, size = 0xc000, scoped, tag = 'input window, operand 1, single buffered']
    #allocation8 [shape = 's32[1]{0}', space=sflag, size = 0x4, scoped, tag = 'scoped memory for tpu_custom_call.1']
    #allocation9 [shape = 'u8[49152]{0}', space=vmem, size = 0xc000, scoped, tag = 'input window, operand 2, single buffered']
    #allocation10 [shape = 'u8[393216]{0}', space=vmem, size = 0x60000, scoped, tag = 'output window, operand 0']
    %8 = vsyncpa [#allocation5], 0
    %s9 = scalar_lea.sflag [#allocation5], 1
    %10 = vsyncpa %s9, 0
    %11 = vsyncpa [#allocation8], 0
    %12 = vsyncpa [#allocation6], 0
    %s13 = scalar_lea.sflag [#allocation6], 1
    %14 = vsyncpa %s13, 0
    loop: start=0, step=1, limit=6
    $region2: #{tpu_custom_call.1} parent=1 // loop_pre_header
      _
    $region3: #{tpu_custom_call.1} parent=1 // loop_header
      %s16 = sphi 0, %s20
      %p17 = scmp.ge.s32.totalorder %s16, 6
      %s23 = sphi 0, %s35
      %s24 = sphi 0, %s31
      %s25 = sphi 0, %s23
      %s26 = sphi 0, %s24
      %s27 = sphi 0, %s25
      %s28 = sphi 0, %s26
      %s40 = sphi 0, %s42
      %s43 = sphi 0, %s40
      %s44 = sphi 0, %s43
      %s60 = sphi 0, %s44
      %s64 = sphi 0, %s64
      %s66 = sphi 0, %s64
      %s67 = sphi 0, %s66
      %s81 = sphi 0, %s67
      %s85 = sphi 0, %s85
      %s87 = sphi 0, %s85
      %s88 = sphi 0, %s87
      %s102 = sphi 0, %s88
      %s110 = sphi 0, %s112
      %s113 = sphi 0, %s110
      %s114 = sphi 0, %s113
      %s130 = sphi 0, %s114
    $region4: #{tpu_custom_call.1} parent=1 // loop_header_branch
      %19 = sbr.rel (%p17) target = $region8
    $region5: #{tpu_custom_call.1} parent=1 // loop_body
      %s21 = ssub.s32 %s16, 1
      %s22 = ssub.s32 %s16, 2
      %s29 = sadd.s32 1, %s24
      %p30 = scmp.ge.s32.totalorder %s29, 2
      %s31 = scalar_select %p30, 0, %s29
      %s32 = sadd.s32 1, %s23
      %s33 = scalar_select %p30, %s32, %s23
      %p34 = scmp.ge.s32.totalorder %s33, 2
      %s35 = scalar_select %p34, 0, %s33
      %s36 = ssub.s32 %s23, %s35
      %s37 = ssub.s32 %s24, %s31
      %s38 = sor.u32 %s36, %s37
      %p39 = scmp.eq.s32.totalorder %s38, 0
      %s41 = sadd.s32 %s40, 1
      %s42 = scalar_select %p39, %s40, %s41
      %p45 = pneg %p39
      %p46 = scmp.eq.s32.totalorder %s16, 3
      %p47 = por %p45, %p46
      %p48 = scmp.ne.s32.totalorder %s40, %s43
      %p49 = scmp.eq.s32.totalorder %s16, 0
      %p50 = por %p48, %p49
      %p51 = scmp.ne.s32.totalorder %s40, %s43
      %p52 = scmp.eq.s32.totalorder %s21, 3
      %p53 = por %p51, %p52
      %p54 = scmp.ne.s32.totalorder %s43, %s44
      %p55 = scmp.eq.s32.totalorder %s21, 0
      %p56 = por %p54, %p55
      %p57 = scmp.ne.s32.totalorder %s43, %s44
      %p58 = scmp.eq.s32.totalorder %s22, 3
      %p59 = por %p57, %p58
      %p61 = scmp.ne.s32.totalorder %s44, %s60
      %p62 = scmp.eq.s32.totalorder %s22, 0
      %p63 = por %p61, %p62
      %s65 = sadd.s32 %s64, 1
      %p68 = scmp.eq.s32.totalorder %s16, 3
      %p69 = scmp.ne.s32.totalorder %s64, %s66
      %p70 = scmp.eq.s32.totalorder %s16, 0
      %p71 = por %p69, %p70
      %p72 = scmp.ne.s32.totalorder %s64, %s66
      %p73 = scmp.eq.s32.totalorder %s21, 3
      %p74 = por %p72, %p73
      %p75 = scmp.ne.s32.totalorder %s66, %s67
      %p76 = scmp.eq.s32.totalorder %s21, 0
      %p77 = por %p75, %p76
      %p78 = scmp.ne.s32.totalorder %s66, %s67
      %p79 = scmp.eq.s32.totalorder %s22, 3
      %p80 = por %p78, %p79
      %p82 = scmp.ne.s32.totalorder %s67, %s81
      %p83 = scmp.eq.s32.totalorder %s22, 0
      %p84 = por %p82, %p83
      %s86 = sadd.s32 %s85, 1
      %p89 = scmp.eq.s32.totalorder %s16, 3
      %p90 = scmp.ne.s32.totalorder %s85, %s87
      %p91 = scmp.eq.s32.totalorder %s16, 0
      %p92 = por %p90, %p91
      %p93 = scmp.ne.s32.totalorder %s85, %s87
      %p94 = scmp.eq.s32.totalorder %s21, 3
      %p95 = por %p93, %p94
      %p96 = scmp.ne.s32.totalorder %s87, %s88
      %p97 = scmp.eq.s32.totalorder %s21, 0
      %p98 = por %p96, %p97
      %p99 = scmp.ne.s32.totalorder %s87, %s88
      %p100 = scmp.eq.s32.totalorder %s22, 3
      %p101 = por %p99, %p100
      %p103 = scmp.ne.s32.totalorder %s88, %s102
      %p104 = scmp.eq.s32.totalorder %s22, 0
      %p105 = por %p103, %p104
      %s106 = ssub.s32 %s23, %s35
      %s107 = ssub.s32 %s24, %s31
      %s108 = sor.u32 %s106, %s107
      %p109 = scmp.eq.s32.totalorder %s108, 0
      %s111 = sadd.s32 %s110, 1
      %s112 = scalar_select %p109, %s110, %s111
      %p115 = pneg %p109
      %p116 = scmp.eq.s32.totalorder %s16, 3
      %p117 = por %p115, %p116
      %p118 = scmp.ne.s32.totalorder %s110, %s113
      %p119 = scmp.eq.s32.totalorder %s16, 0
      %p120 = por %p118, %p119
      %p121 = scmp.ne.s32.totalorder %s110, %s113
      %p122 = scmp.eq.s32.totalorder %s21, 3
      %p123 = por %p121, %p122
      %p124 = scmp.ne.s32.totalorder %s113, %s114
      %p125 = scmp.eq.s32.totalorder %s21, 0
      %p126 = por %p124, %p125
      %p127 = scmp.ne.s32.totalorder %s113, %s114
      %p128 = scmp.eq.s32.totalorder %s22, 3
      %p129 = por %p127, %p128
      %p131 = scmp.ne.s32.totalorder %s114, %s130
      %p132 = scmp.eq.s32.totalorder %s22, 0
      %p133 = por %p131, %p132
      %p134 = scmp.le.s32.totalorder 1, %s16
      %p135 = scmp.lt.s32.totalorder %s16, 5
      %p136 = pnand %p134, %p135
      %p137 = pneg %p136
      // Predicated region
      $region9: #{tpu_custom_call.1} parent=5 // pred_check
        _
      $region10: #{tpu_custom_call.1} parent=5 // pred_check_branch
        %139 = sbr.rel (%p136) target = $region12
      $region11: #{tpu_custom_call.1} parent=5 // pred_region
        %s140 = ssub.s32 %s16, 1
        // Predicated region
        $region13: #{tpu_custom_call.1} parent=11 // pred_check
          %p141 = pneg %p77
        $region14: #{tpu_custom_call.1} parent=11 // pred_check_branch
          %143 = sbr.rel (%p141) target = $region16
        $region15: #{tpu_custom_call.1} parent=11 // pred_region
          %145 = vsyncadd [#allocation8], 0
          %s146 = sshll.u32 %s1, 4
          %s147 = int_to_ptr.hbm [resolvable:$true] %s146
          %s148 = sshll.u32 [#allocation7], 4
          %s149 = int_to_ptr.vmem [resolvable:$true] %s148
          %154 = dma.hbm_to_vmem [thread:$0]  %s147, 1536, %s149, [#allocation8], 384, 384, 24
        $region16: #{tpu_custom_call.1} parent=11 // pred_fallthru
          _
        // Predicated region
        $region17: #{tpu_custom_call.1} parent=11 // pred_check
          %p155 = pneg %p98
        $region18: #{tpu_custom_call.1} parent=11 // pred_check_branch
          %157 = sbr.rel (%p155) target = $region20
        $region19: #{tpu_custom_call.1} parent=11 // pred_region
          %159 = vsyncadd [#allocation8], 0
          %s160 = sshll.u32 %s2, 4
          %s161 = int_to_ptr.hbm [resolvable:$true] %s160
          %s162 = sshll.u32 [#allocation9], 4
          %s163 = int_to_ptr.vmem [resolvable:$true] %s162
          %168 = dma.hbm_to_vmem [thread:$0]  %s161, 1536, %s163, [#allocation8], 384, 384, 24
        $region20: #{tpu_custom_call.1} parent=11 // pred_fallthru
          _
      $region12: #{tpu_custom_call.1} parent=5 // pred_fallthru
        _
      %p169 = scmp.lt.s32.totalorder %s16, 4
      // Predicated region
      $region21: #{tpu_custom_call.1} parent=5 // pred_check
        %p170 = pneg %p169
      $region22: #{tpu_custom_call.1} parent=5 // pred_check_branch
        %172 = sbr.rel (%p170) target = $region24
      $region23: #{tpu_custom_call.1} parent=5 // pred_region
        // Predicated region
        $region25: #{tpu_custom_call.1} parent=23 // pred_check
          %p173 = pneg %p50
        $region26: #{tpu_custom_call.1} parent=23 // pred_check_branch
          %175 = sbr.rel (%p173) target = $region28
        $region27: #{tpu_custom_call.1} parent=23 // pred_region
          %s176 = sand.u32 %s40, 1
          %s177 = scalar_lea.sflag [#allocation5], %s176
          %s178 = sand.u32 %s40, 1
          %s179 = smul.addr %s178, 384
          %s180 = scalar_lea.vmem [#allocation4], %s179
          %s181 = smul.u32 4, %s24
          %183 = vsyncadd %s177, 0
          %s184 = smul.addr %s181, 12
          %s185 = smul.addr %s23, 96
          %s186 = sadd.s32 %s184, %s185
          %s187 = smul.addr %s186, 8
          %s188 = scalar_lea.hbm %s0, %s187
          %s189 = sshll.u32 %s188, 4
          %s190 = int_to_ptr.hbm [resolvable:$true] %s189
          %s191 = sshll.u32 %s180, 4
          %s192 = int_to_ptr.vmem [resolvable:$true] %s191
          %197 = dma.hbm_to_vmem [thread:$0]  %s190, 6144, %s192, %s177, 384, 384, 24
        $region28: #{tpu_custom_call.1} parent=23 // pred_fallthru
          _
      $region24: #{tpu_custom_call.1} parent=5 // pred_fallthru
        _
      %p198 = scmp.le.s32.totalorder 1, %s16
      %p199 = scmp.lt.s32.totalorder %s16, 5
      %p200 = pnand %p198, %p199
      %p201 = pneg %p200
      // Predicated region
      $region29: #{tpu_custom_call.1} parent=5 // pred_check
        _
      $region30: #{tpu_custom_call.1} parent=5 // pred_check_branch
        %203 = sbr.rel (%p200) target = $region32
      $region31: #{tpu_custom_call.1} parent=5 // pred_region
        %s204 = ssub.s32 %s16, 1
        %s205 = sand.u32 %s43, 1
        %s206 = scalar_lea.sflag [#allocation5], %s205
        %s207 = sand.u32 %s43, 1
        %s208 = smul.addr %s207, 384
        %s209 = scalar_lea.vmem [#allocation4], %s208
        // Predicated region
        $region33: #{tpu_custom_call.1} parent=31 // pred_check
          %p210 = pneg %p56
        $region34: #{tpu_custom_call.1} parent=31 // pred_check_branch
          %212 = sbr.rel (%p210) target = $region36
        $region35: #{tpu_custom_call.1} parent=31 // pred_region
          %214 = dma.done %s206, 6144
        $region36: #{tpu_custom_call.1} parent=31 // pred_fallthru
          _
        // Predicated region
        $region37: #{tpu_custom_call.1} parent=31 // pred_check
          %p215 = pneg %p77
        $region38: #{tpu_custom_call.1} parent=31 // pred_check_branch
          %217 = sbr.rel (%p215) target = $region40
        $region39: #{tpu_custom_call.1} parent=31 // pred_region
          %219 = dma.done [#allocation8], 1536
        $region40: #{tpu_custom_call.1} parent=31 // pred_fallthru
          _
        // Predicated region
        $region41: #{tpu_custom_call.1} parent=31 // pred_check
          %p220 = pneg %p98
        $region42: #{tpu_custom_call.1} parent=31 // pred_check_branch
          %222 = sbr.rel (%p220) target = $region44
        $region43: #{tpu_custom_call.1} parent=31 // pred_region
          %224 = dma.done [#allocation8], 1536
        $region44: #{tpu_custom_call.1} parent=31 // pred_fallthru
          _
        %s225 = sand.u32 %s43, 1
        %s226 = scalar_lea.sflag [#allocation5], %s225
        %s227 = sand.u32 %s43, 1
        %s228 = smul.addr %s227, 384
        %s229 = scalar_lea.vmem [#allocation4], %s228
        %p230 = pneg %p56
        %p231 = pneg %p53
        %p232 = pneg %p77
        %p233 = pneg %p74
        %p234 = pneg %p98
        %p235 = pneg %p95
        %p236 = pneg %p126
        %p237 = pneg %p123
        %s238 = sand.u32 %s113, 1
        %s239 = scalar_lea.sflag [#allocation6], %s238
        %s240 = sand.u32 %s113, 1
        %s241 = smul.addr %s240, 384
        %s242 = scalar_lea.vmem [#allocation10], %s241
        %s243 = smul.u32 4, %s26
        %s244 = smul.u32 4, %s26
        %245 = vst [vmem:[#allocation3 + $0x360] sm:$0xff] 0.0
        %246 = vst [vmem:[#allocation3 + $0x368] sm:$0xff] 0.0
        %247 = vst [vmem:[#allocation3 + $0x370] sm:$0xff] 0.0
        %248 = vst [vmem:[#allocation3 + $0x378] sm:$0xff] 0.0
        %249 = vst [vmem:[#allocation3 + $0x380] sm:$0xff] 0.0
        %250 = vst [vmem:[#allocation3 + $0x388] sm:$0xff] 0.0
        %251 = vst [vmem:[#allocation3 + $0x390] sm:$0xff] 0.0
        %252 = vst [vmem:[#allocation3 + $0x398] sm:$0xff] 0.0
        %253 = vst [vmem:[#allocation3 + $0x3a0] sm:$0xff] 0.0
        %254 = vst [vmem:[#allocation3 + $0x3a8] sm:$0xff] 0.0
        %255 = vst [vmem:[#allocation3 + $0x3b0] sm:$0xff] 0.0
        %256 = vst [vmem:[#allocation3 + $0x3b8] sm:$0xff] 0.0
        %257 = vst [vmem:[#allocation3 + $0x3c0] sm:$0xff] 0.0
        %258 = vst [vmem:[#allocation3 + $0x3c8] sm:$0xff] 0.0
        %259 = vst [vmem:[#allocation3 + $0x3d0] sm:$0xff] 0.0
        %260 = vst [vmem:[#allocation3 + $0x3d8] sm:$0xff] 0.0
        %261 = vst [vmem:[#allocation3 + $0x3e0] sm:$0xff] 0.0
        %262 = vst [vmem:[#allocation3 + $0x3e8] sm:$0xff] 0.0
        %263 = vst [vmem:[#allocation3 + $0x3f0] sm:$0xff] 0.0
        %264 = vst [vmem:[#allocation3 + $0x3f8] sm:$0xff] 0.0
        %265 = vst [vmem:[#allocation3 + $0x400] sm:$0xff] 0.0
        %266 = vst [vmem:[#allocation3 + $0x408] sm:$0xff] 0.0
        %267 = vst [vmem:[#allocation3 + $0x410] sm:$0xff] 0.0
        %268 = vst [vmem:[#allocation3 + $0x418] sm:$0xff] 0.0
        %269 = vst [vmem:[#allocation3 + $0x420] sm:$0xff] 0.0
        %270 = vst [vmem:[#allocation3 + $0x428] sm:$0xff] 0.0
        %271 = vst [vmem:[#allocation3 + $0x430] sm:$0xff] 0.0
        %272 = vst [vmem:[#allocation3 + $0x438] sm:$0xff] 0.0
        %273 = vst [vmem:[#allocation3 + $0x440] sm:$0xff] 0.0
        %274 = vst [vmem:[#allocation3 + $0x448] sm:$0xff] 0.0
        %275 = vst [vmem:[#allocation3 + $0x450] sm:$0xff] 0.0
        %276 = vst [vmem:[#allocation3 + $0x458] sm:$0xff] 0.0
        %277 = vst [vmem:[#allocation3 + $0x460] sm:$0xff] 0.0
        %278 = vst [vmem:[#allocation3 + $0x468] sm:$0xff] 0.0
        %279 = vst [vmem:[#allocation3 + $0x470] sm:$0xff] 0.0
        %280 = vst [vmem:[#allocation3 + $0x478] sm:$0xff] 0.0
        %p281 = scmp.eq.s32.totalorder %s26, 0
        // Predicated region
        $region45: #{tpu_custom_call.1} parent=31 // pred_check
          %p282 = pneg %p281
        $region46: #{tpu_custom_call.1} parent=31 // pred_check_branch
          %284 = sbr.rel (%p282) target = $region48
        $region47: #{tpu_custom_call.1} parent=31 // pred_region
          %285 = vst [vmem:[#allocation2] sm:$0xff] 0.0
          %286 = vst [vmem:[#allocation2 + $0x8] sm:$0xff] 0.0
          %287 = vst [vmem:[#allocation2 + $0x10] sm:$0xff] 0.0
          %288 = vst [vmem:[#allocation2 + $0x18] sm:$0xff] 0.0
          %289 = vst [vmem:[#allocation2 + $0x20] sm:$0xff] 0.0
          %290 = vst [vmem:[#allocation2 + $0x28] sm:$0xff] 0.0
          %291 = vst [vmem:[#allocation2 + $0x30] sm:$0xff] 0.0
          %292 = vst [vmem:[#allocation2 + $0x38] sm:$0xff] 0.0
          %293 = vst [vmem:[#allocation2 + $0x40] sm:$0xff] 0.0
          %294 = vst [vmem:[#allocation2 + $0x48] sm:$0xff] 0.0
          %295 = vst [vmem:[#allocation2 + $0x50] sm:$0xff] 0.0
          %296 = vst [vmem:[#allocation2 + $0x58] sm:$0xff] 0.0
          %297 = vst [vmem:[#allocation2 + $0x60] sm:$0xff] 0.0
          %298 = vst [vmem:[#allocation2 + $0x68] sm:$0xff] 0.0
          %299 = vst [vmem:[#allocation2 + $0x70] sm:$0xff] 0.0
          %300 = vst [vmem:[#allocation2 + $0x78] sm:$0xff] 0.0
          %301 = vst [vmem:[#allocation2 + $0x80] sm:$0xff] 0.0
          %302 = vst [vmem:[#allocation2 + $0x88] sm:$0xff] 0.0
          %303 = vst [vmem:[#allocation2 + $0x90] sm:$0xff] 0.0
          %304 = vst [vmem:[#allocation2 + $0x98] sm:$0xff] 0.0
        $region48: #{tpu_custom_call.1} parent=31 // pred_fallthru
          _
        %v305 = vld [vmem:[#allocation2] sm:$0xff]
        %v306 = vld [vmem:[#allocation2 + $0x8] sm:$0xff]
        %v307 = vld [vmem:[#allocation2 + $0x10] sm:$0xff]
        %v308 = vld [vmem:[#allocation2 + $0x18] sm:$0xff]
        %v309 = vld [vmem:[#allocation2 + $0x28] sm:$0xff]
        %v310 = vld [vmem:[#allocation2 + $0x30] sm:$0xff]
        %v311 = vld [vmem:[#allocation2 + $0x38] sm:$0xff]
        %v312 = vld [vmem:[#allocation2 + $0x40] sm:$0xff]
        %v313 = vld [vmem:[#allocation2 + $0x50] sm:$0xff]
        %v314 = vld [vmem:[#allocation2 + $0x58] sm:$0xff]
        %v315 = vld [vmem:[#allocation2 + $0x60] sm:$0xff]
        %v316 = vld [vmem:[#allocation2 + $0x68] sm:$0xff]
        %v317 = vld [vmem:[#allocation2 + $0x78] sm:$0xff]
        %v318 = vld [vmem:[#allocation2 + $0x80] sm:$0xff]
        %v319 = vld [vmem:[#allocation2 + $0x88] sm:$0xff]
        %v320 = vld [vmem:[#allocation2 + $0x90] sm:$0xff]
        %337 = vrot.lane.b32.xlu0 %v305, 19
        %v338 = vpop.permute.xlu0 %337
        %339 = vrot.lane.b32.xlu0 %v306, 19
        %v340 = vpop.permute.xlu0 %339
        %341 = vrot.lane.b32.xlu0 %v307, 19
        %v342 = vpop.permute.xlu0 %341
        %343 = vrot.lane.b32.xlu0 %v308, 19
        %v344 = vpop.permute.xlu0 %343
        %345 = vrot.lane.b32.xlu0 %v309, 19
        %v346 = vpop.permute.xlu0 %345
        %347 = vrot.lane.b32.xlu0 %v310, 19
        %v348 = vpop.permute.xlu0 %347
        %349 = vrot.lane.b32.xlu0 %v311, 19
        %v350 = vpop.permute.xlu0 %349
        %351 = vrot.lane.b32.xlu0 %v312, 19
        %v352 = vpop.permute.xlu0 %351
        %353 = vrot.lane.b32.xlu0 %v313, 19
        %v354 = vpop.permute.xlu0 %353
        %355 = vrot.lane.b32.xlu0 %v314, 19
        %v356 = vpop.permute.xlu0 %355
        %357 = vrot.lane.b32.xlu0 %v315, 19
        %v358 = vpop.permute.xlu0 %357
        %359 = vrot.lane.b32.xlu0 %v316, 19
        %v360 = vpop.permute.xlu0 %359
        %361 = vrot.lane.b32.xlu0 %v317, 19
        %v362 = vpop.permute.xlu0 %361
        %363 = vrot.lane.b32.xlu0 %v318, 19
        %v364 = vpop.permute.xlu0 %363
        %365 = vrot.lane.b32.xlu0 %v319, 19
        %v366 = vpop.permute.xlu0 %365
        %367 = vrot.lane.b32.xlu0 %v320, 19
        %v368 = vpop.permute.xlu0 %367
        %vm369 = vcmask 154624
        %v370 = vsel %vm369, %v338, %v340
        %v371 = vsel %vm369, %v340, %v342
        %v372 = vsel %vm369, %v342, %v344
        %v373 = vsel %vm369, %v346, %v348
        %v374 = vsel %vm369, %v348, %v350
        %v375 = vsel %vm369, %v350, %v352
        %v376 = vsel %vm369, %v354, %v356
        %v377 = vsel %vm369, %v356, %v358
        %v378 = vsel %vm369, %v358, %v360
        %v379 = vsel %vm369, %v362, %v364
        %v380 = vsel %vm369, %v364, %v366
        %v381 = vsel %vm369, %v366, %v368
        %394 = vst [vmem:[#allocation3] sm:$0xff] %v370
        %395 = vst [vmem:[#allocation3 + $0x8] sm:$0xff] %v371
        %396 = vst [vmem:[#allocation3 + $0x10] sm:$0xff] %v372
        %397 = vst [vmem:[#allocation3 + $0x18] sm:$0xff] %v373
        %398 = vst [vmem:[#allocation3 + $0x20] sm:$0xff] %v374
        %399 = vst [vmem:[#allocation3 + $0x28] sm:$0xff] %v375
        %400 = vst [vmem:[#allocation3 + $0x30] sm:$0xff] %v376
        %401 = vst [vmem:[#allocation3 + $0x38] sm:$0xff] %v377
        %402 = vst [vmem:[#allocation3 + $0x40] sm:$0xff] %v378
        %403 = vst [vmem:[#allocation3 + $0x48] sm:$0xff] %v379
        %404 = vst [vmem:[#allocation3 + $0x50] sm:$0xff] %v380
        %405 = vst [vmem:[#allocation3 + $0x58] sm:$0xff] %v381
        %v406 = vld [vmem:[#allocation2] sm:$0xff]
        %v407 = vld [vmem:[#allocation2 + $0x8] sm:$0xff]
        %v408 = vld [vmem:[#allocation2 + $0x10] sm:$0xff]
        %v409 = vld [vmem:[#allocation2 + $0x18] sm:$0xff]
        %v410 = vld [vmem:[#allocation2 + $0x28] sm:$0xff]
        %v411 = vld [vmem:[#allocation2 + $0x30] sm:$0xff]
        %v412 = vld [vmem:[#allocation2 + $0x38] sm:$0xff]
        %v413 = vld [vmem:[#allocation2 + $0x40] sm:$0xff]
        %v414 = vld [vmem:[#allocation2 + $0x50] sm:$0xff]
        %v415 = vld [vmem:[#allocation2 + $0x58] sm:$0xff]
        %v416 = vld [vmem:[#allocation2 + $0x60] sm:$0xff]
        %v417 = vld [vmem:[#allocation2 + $0x68] sm:$0xff]
        %v418 = vld [vmem:[#allocation2 + $0x78] sm:$0xff]
        %v419 = vld [vmem:[#allocation2 + $0x80] sm:$0xff]
        %v420 = vld [vmem:[#allocation2 + $0x88] sm:$0xff]
        %v421 = vld [vmem:[#allocation2 + $0x90] sm:$0xff]
        %438 = vrot.lane.b32.xlu0 %v406, 18
        %v439 = vpop.permute.xlu0 %438
        %440 = vrot.lane.b32.xlu0 %v407, 18
        %v441 = vpop.permute.xlu0 %440
        %442 = vrot.lane.b32.xlu0 %v408, 18
        %v443 = vpop.permute.xlu0 %442
        %444 = vrot.lane.b32.xlu0 %v409, 18
        %v445 = vpop.permute.xlu0 %444
        %446 = vrot.lane.b32.xlu0 %v410, 18
        %v447 = vpop.permute.xlu0 %446
        %448 = vrot.lane.b32.xlu0 %v411, 18
        %v449 = vpop.permute.xlu0 %448
        %450 = vrot.lane.b32.xlu0 %v412, 18
        %v451 = vpop.permute.xlu0 %450
        %452 = vrot.lane.b32.xlu0 %v413, 18
        %v453 = vpop.permute.xlu0 %452
        %454 = vrot.lane.b32.xlu0 %v414, 18
        %v455 = vpop.permute.xlu0 %454
        %456 = vrot.lane.b32.xlu0 %v415, 18
        %v457 = vpop.permute.xlu0 %456
        %458 = vrot.lane.b32.xlu0 %v416, 18
        %v459 = vpop.permute.xlu0 %458
        %460 = vrot.lane.b32.xlu0 %v417, 18
        %v461 = vpop.permute.xlu0 %460
        %462 = vrot.lane.b32.xlu0 %v418, 18
        %v463 = vpop.permute.xlu0 %462
        %464 = vrot.lane.b32.xlu0 %v419, 18
        %v465 = vpop.permute.xlu0 %464
        %466 = vrot.lane.b32.xlu0 %v420, 18
        %v467 = vpop.permute.xlu0 %466
        %468 = vrot.lane.b32.xlu0 %v421, 18
        %v469 = vpop.permute.xlu0 %468
        %vm470 = vcmask 146432
        %v471 = vsel %vm470, %v439, %v441
        %v472 = vsel %vm470, %v441, %v443
        %v473 = vsel %vm470, %v443, %v445
        %v474 = vsel %vm470, %v447, %v449
        %v475 = vsel %vm470, %v449, %v451
        %v476 = vsel %vm470, %v451, %v453
        %v477 = vsel %vm470, %v455, %v457
        %v478 = vsel %vm470, %v457, %v459
        %v479 = vsel %vm470, %v459, %v461
        %v480 = vsel %vm470, %v463, %v465
        %v481 = vsel %vm470, %v465, %v467
        %v482 = vsel %vm470, %v467, %v469
        %495 = vst [vmem:[#allocation3 + $0x60] sm:$0xff] %v471
        %496 = vst [vmem:[#allocation3 + $0x68] sm:$0xff] %v472
        %497 = vst [vmem:[#allocation3 + $0x70] sm:$0xff] %v473
        %498 = vst [vmem:[#allocation3 + $0x78] sm:$0xff] %v474
        %499 = vst [vmem:[#allocation3 + $0x80] sm:$0xff] %v475
        %500 = vst [vmem:[#allocation3 + $0x88] sm:$0xff] %v476
        %501 = vst [vmem:[#allocation3 + $0x90] sm:$0xff] %v477
        %502 = vst [vmem:[#allocation3 + $0x98] sm:$0xff] %v478
        %503 = vst [vmem:[#allocation3 + $0xa0] sm:$0xff] %v479
        %504 = vst [vmem:[#allocation3 + $0xa8] sm:$0xff] %v480
        %505 = vst [vmem:[#allocation3 + $0xb0] sm:$0xff] %v481
        %506 = vst [vmem:[#allocation3 + $0xb8] sm:$0xff] %v482
        %v507 = vld [vmem:[#allocation2] sm:$0xff]
        %v508 = vld [vmem:[#allocation2 + $0x8] sm:$0xff]
        %v509 = vld [vmem:[#allocation2 + $0x10] sm:$0xff]
        %v510 = vld [vmem:[#allocation2 + $0x18] sm:$0xff]
        %v511 = vld [vmem:[#allocation2 + $0x28] sm:$0xff]
        %v512 = vld [vmem:[#allocation2 + $0x30] sm:$0xff]
        %v513 = vld [vmem:[#allocation2 + $0x38] sm:$0xff]
        %v514 = vld [vmem:[#allocation2 + $0x40] sm:$0xff]
        %v515 = vld [vmem:[#allocation2 + $0x50] sm:$0xff]
        %v516 = vld [vmem:[#allocation2 + $0x58] sm:$0xff]
        %v517 = vld [vmem:[#allocation2 + $0x60] sm:$0xff]
        %v518 = vld [vmem:[#allocation2 + $0x68] sm:$0xff]
        %v519 = vld [vmem:[#allocation2 + $0x78] sm:$0xff]
        %v520 = vld [vmem:[#allocation2 + $0x80] sm:$0xff]
        %v521 = vld [vmem:[#allocation2 + $0x88] sm:$0xff]
        %v522 = vld [vmem:[#allocation2 + $0x90] sm:$0xff]
        %539 = vrot.lane.b32.xlu0 %v507, 17
        %v540 = vpop.permute.xlu0 %539
        %541 = vrot.lane.b32.xlu0 %v508, 17
        %v542 = vpop.permute.xlu0 %541
        %543 = vrot.lane.b32.xlu0 %v509, 17
        %v544 = vpop.permute.xlu0 %543
        %545 = vrot.lane.b32.xlu0 %v510, 17
        %v546 = vpop.permute.xlu0 %545
        %547 = vrot.lane.b32.xlu0 %v511, 17
        %v548 = vpop.permute.xlu0 %547
        %549 = vrot.lane.b32.xlu0 %v512, 17
        %v550 = vpop.permute.xlu0 %549
        %551 = vrot.lane.b32.xlu0 %v513, 17
        %v552 = vpop.permute.xlu0 %551
        %553 = vrot.lane.b32.xlu0 %v514, 17
        %v554 = vpop.permute.xlu0 %553
        %555 = vrot.lane.b32.xlu0 %v515, 17
        %v556 = vpop.permute.xlu0 %555
        %557 = vrot.lane.b32.xlu0 %v516, 17
        %v558 = vpop.permute.xlu0 %557
        %559 = vrot.lane.b32.xlu0 %v517, 17
        %v560 = vpop.permute.xlu0 %559
        %561 = vrot.lane.b32.xlu0 %v518, 17
        %v562 = vpop.permute.xlu0 %561
        %563 = vrot.lane.b32.xlu0 %v519, 17
        %v564 = vpop.permute.xlu0 %563
        %565 = vrot.lane.b32.xlu0 %v520, 17
        %v566 = vpop.permute.xlu0 %565
        %567 = vrot.lane.b32.xlu0 %v521, 17
        %v568 = vpop.permute.xlu0 %567
        %569 = vrot.lane.b32.xlu0 %v522, 17
        %v570 = vpop.permute.xlu0 %569
        %vm571 = vcmask 138240
        %v572 = vsel %vm571, %v540, %v542
        %v573 = vsel %vm571, %v542, %v544
        %v574 = vsel %vm571, %v544, %v546
        %v575 = vsel %vm571, %v548, %v550
        %v576 = vsel %vm571, %v550, %v552
        %v577 = vsel %vm571, %v552, %v554
        %v578 = vsel %vm571, %v556, %v558
        %v579 = vsel %vm571, %v558, %v560
        %v580 = vsel %vm571, %v560, %v562
        %v581 = vsel %vm571, %v564, %v566
        %v582 = vsel %vm571, %v566, %v568
        %v583 = vsel %vm571, %v568, %v570
        %596 = vst [vmem:[#allocation3 + $0xc0] sm:$0xff] %v572
        %597 = vst [vmem:[#allocation3 + $0xc8] sm:$0xff] %v573
        %598 = vst [vmem:[#allocation3 + $0xd0] sm:$0xff] %v574
        %599 = vst [vmem:[#allocation3 + $0xd8] sm:$0xff] %v575
        %600 = vst [vmem:[#allocation3 + $0xe0] sm:$0xff] %v576
        %601 = vst [vmem:[#allocation3 + $0xe8] sm:$0xff] %v577
        %602 = vst [vmem:[#allocation3 + $0xf0] sm:$0xff] %v578
        %603 = vst [vmem:[#allocation3 + $0xf8] sm:$0xff] %v579
        %604 = vst [vmem:[#allocation3 + $0x100] sm:$0xff] %v580
        %605 = vst [vmem:[#allocation3 + $0x108] sm:$0xff] %v581
        %606 = vst [vmem:[#allocation3 + $0x110] sm:$0xff] %v582
        %607 = vst [vmem:[#allocation3 + $0x118] sm:$0xff] %v583
        %v608 = vld [vmem:[#allocation2] sm:$0xff]
        %v609 = vld [vmem:[#allocation2 + $0x8] sm:$0xff]
        %v610 = vld [vmem:[#allocation2 + $0x10] sm:$0xff]
        %v611 = vld [vmem:[#allocation2 + $0x18] sm:$0xff]
        %v612 = vld [vmem:[#allocation2 + $0x28] sm:$0xff]
        %v613 = vld [vmem:[#allocation2 + $0x30] sm:$0xff]
        %v614 = vld [vmem:[#allocation2 + $0x38] sm:$0xff]
        %v615 = vld [vmem:[#allocation2 + $0x40] sm:$0xff]
        %v616 = vld [vmem:[#allocation2 + $0x50] sm:$0xff]
        %v617 = vld [vmem:[#allocation2 + $0x58] sm:$0xff]
        %v618 = vld [vmem:[#allocation2 + $0x60] sm:$0xff]
        %v619 = vld [vmem:[#allocation2 + $0x68] sm:$0xff]
        %v620 = vld [vmem:[#allocation2 + $0x78] sm:$0xff]
        %v621 = vld [vmem:[#allocation2 + $0x80] sm:$0xff]
        %v622 = vld [vmem:[#allocation2 + $0x88] sm:$0xff]
        %v623 = vld [vmem:[#allocation2 + $0x90] sm:$0xff]
        %640 = vrot.lane.b32.xlu0 %v608, 1
        %v641 = vpop.permute.xlu0 %640
        %642 = vrot.lane.b32.xlu0 %v609, 1
        %v643 = vpop.permute.xlu0 %642
        %644 = vrot.lane.b32.xlu0 %v610, 1
        %v645 = vpop.permute.xlu0 %644
        %646 = vrot.lane.b32.xlu0 %v611, 1
        %v647 = vpop.permute.xlu0 %646
        %648 = vrot.lane.b32.xlu0 %v612, 1
        %v649 = vpop.permute.xlu0 %648
        %650 = vrot.lane.b32.xlu0 %v613, 1
        %v651 = vpop.permute.xlu0 %650
        %652 = vrot.lane.b32.xlu0 %v614, 1
        %v653 = vpop.permute.xlu0 %652
        %654 = vrot.lane.b32.xlu0 %v615, 1
        %v655 = vpop.permute.xlu0 %654
        %656 = vrot.lane.b32.xlu0 %v616, 1
        %v657 = vpop.permute.xlu0 %656
        %658 = vrot.lane.b32.xlu0 %v617, 1
        %v659 = vpop.permute.xlu0 %658
        %660 = vrot.lane.b32.xlu0 %v618, 1
        %v661 = vpop.permute.xlu0 %660
        %662 = vrot.lane.b32.xlu0 %v619, 1
        %v663 = vpop.permute.xlu0 %662
        %664 = vrot.lane.b32.xlu0 %v620, 1
        %v665 = vpop.permute.xlu0 %664
        %666 = vrot.lane.b32.xlu0 %v621, 1
        %v667 = vpop.permute.xlu0 %666
        %668 = vrot.lane.b32.xlu0 %v622, 1
        %v669 = vpop.permute.xlu0 %668
        %670 = vrot.lane.b32.xlu0 %v623, 1
        %v671 = vpop.permute.xlu0 %670
        %vm672 = vcmask 7168
        %v673 = vsel %vm672, %v641, %v643
        %v674 = vsel %vm672, %v643, %v645
        %v675 = vsel %vm672, %v645, %v647
        %v676 = vsel %vm672, %v649, %v651
        %v677 = vsel %vm672, %v651, %v653
        %v678 = vsel %vm672, %v653, %v655
        %v679 = vsel %vm672, %v657, %v659
        %v680 = vsel %vm672, %v659, %v661
        %v681 = vsel %vm672, %v661, %v663
        %v682 = vsel %vm672, %v665, %v667
        %v683 = vsel %vm672, %v667, %v669
        %v684 = vsel %vm672, %v669, %v671
        %697 = vst [vmem:[#allocation3 + $0x120] sm:$0xff] %v673
        %698 = vst [vmem:[#allocation3 + $0x128] sm:$0xff] %v674
        %699 = vst [vmem:[#allocation3 + $0x130] sm:$0xff] %v675
        %700 = vst [vmem:[#allocation3 + $0x138] sm:$0xff] %v676
        %701 = vst [vmem:[#allocation3 + $0x140] sm:$0xff] %v677
        %702 = vst [vmem:[#allocation3 + $0x148] sm:$0xff] %v678
        %703 = vst [vmem:[#allocation3 + $0x150] sm:$0xff] %v679
        %704 = vst [vmem:[#allocation3 + $0x158] sm:$0xff] %v680
        %705 = vst [vmem:[#allocation3 + $0x160] sm:$0xff] %v681
        %706 = vst [vmem:[#allocation3 + $0x168] sm:$0xff] %v682
        %707 = vst [vmem:[#allocation3 + $0x170] sm:$0xff] %v683
        %708 = vst [vmem:[#allocation3 + $0x178] sm:$0xff] %v684
        %v709 = vld [vmem:[#allocation2 + $0x8] sm:$0xff]
        %v710 = vld [vmem:[#allocation2 + $0x10] sm:$0xff]
        %v711 = vld [vmem:[#allocation2 + $0x18] sm:$0xff]
        %v712 = vld [vmem:[#allocation2 + $0x30] sm:$0xff]
        %v713 = vld [vmem:[#allocation2 + $0x38] sm:$0xff]
        %v714 = vld [vmem:[#allocation2 + $0x40] sm:$0xff]
        %v715 = vld [vmem:[#allocation2 + $0x58] sm:$0xff]
        %v716 = vld [vmem:[#allocation2 + $0x60] sm:$0xff]
        %v717 = vld [vmem:[#allocation2 + $0x68] sm:$0xff]
        %v718 = vld [vmem:[#allocation2 + $0x80] sm:$0xff]
        %v719 = vld [vmem:[#allocation2 + $0x88] sm:$0xff]
        %v720 = vld [vmem:[#allocation2 + $0x90] sm:$0xff]
        %721 = vst [vmem:[#allocation3 + $0x180] sm:$0xff] %v709
        %722 = vst [vmem:[#allocation3 + $0x188] sm:$0xff] %v710
        %723 = vst [vmem:[#allocation3 + $0x190] sm:$0xff] %v711
        %724 = vst [vmem:[#allocation3 + $0x198] sm:$0xff] %v712
        %725 = vst [vmem:[#allocation3 + $0x1a0] sm:$0xff] %v713
        %726 = vst [vmem:[#allocation3 + $0x1a8] sm:$0xff] %v714
        %727 = vst [vmem:[#allocation3 + $0x1b0] sm:$0xff] %v715
        %728 = vst [vmem:[#allocation3 + $0x1b8] sm:$0xff] %v716
        %729 = vst [vmem:[#allocation3 + $0x1c0] sm:$0xff] %v717
        %730 = vst [vmem:[#allocation3 + $0x1c8] sm:$0xff] %v718
        %731 = vst [vmem:[#allocation3 + $0x1d0] sm:$0xff] %v719
        %732 = vst [vmem:[#allocation3 + $0x1d8] sm:$0xff] %v720
        %v733 = vld [vmem:[#allocation2 + $0x8] sm:$0xff]
        %v734 = vld [vmem:[#allocation2 + $0x10] sm:$0xff]
        %v735 = vld [vmem:[#allocation2 + $0x18] sm:$0xff]
        %v736 = vld [vmem:[#allocation2 + $0x20] sm:$0xff]
        %v737 = vld [vmem:[#allocation2 + $0x30] sm:$0xff]
        %v738 = vld [vmem:[#allocation2 + $0x38] sm:$0xff]
        %v739 = vld [vmem:[#allocation2 + $0x40] sm:$0xff]
        %v740 = vld [vmem:[#allocation2 + $0x48] sm:$0xff]
        %v741 = vld [vmem:[#allocation2 + $0x58] sm:$0xff]
        %v742 = vld [vmem:[#allocation2 + $0x60] sm:$0xff]
        %v743 = vld [vmem:[#allocation2 + $0x68] sm:$0xff]
        %v744 = vld [vmem:[#allocation2 + $0x70] sm:$0xff]
        %v745 = vld [vmem:[#allocation2 + $0x80] sm:$0xff]
        %v746 = vld [vmem:[#allocation2 + $0x88] sm:$0xff]
        %v747 = vld [vmem:[#allocation2 + $0x90] sm:$0xff]
        %v748 = vld [vmem:[#allocation2 + $0x98] sm:$0xff]
        %765 = vrot.lane.b32.xlu0 %v733, 127
        %v766 = vpop.permute.xlu0 %765
        %767 = vrot.lane.b32.xlu0 %v734, 127
        %v768 = vpop.permute.xlu0 %767
        %769 = vrot.lane.b32.xlu0 %v735, 127
        %v770 = vpop.permute.xlu0 %769
        %771 = vrot.lane.b32.xlu0 %v736, 127
        %v772 = vpop.permute.xlu0 %771
        %773 = vrot.lane.b32.xlu0 %v737, 127
        %v774 = vpop.permute.xlu0 %773
        %775 = vrot.lane.b32.xlu0 %v738, 127
        %v776 = vpop.permute.xlu0 %775
        %777 = vrot.lane.b32.xlu0 %v739, 127
        %v778 = vpop.permute.xlu0 %777
        %779 = vrot.lane.b32.xlu0 %v740, 127
        %v780 = vpop.permute.xlu0 %779
        %781 = vrot.lane.b32.xlu0 %v741, 127
        %v782 = vpop.permute.xlu0 %781
        %783 = vrot.lane.b32.xlu0 %v742, 127
        %v784 = vpop.permute.xlu0 %783
        %785 = vrot.lane.b32.xlu0 %v743, 127
        %v786 = vpop.permute.xlu0 %785
        %787 = vrot.lane.b32.xlu0 %v744, 127
        %v788 = vpop.permute.xlu0 %787
        %789 = vrot.lane.b32.xlu0 %v745, 127
        %v790 = vpop.permute.xlu0 %789
        %791 = vrot.lane.b32.xlu0 %v746, 127
        %v792 = vpop.permute.xlu0 %791
        %793 = vrot.lane.b32.xlu0 %v747, 127
        %v794 = vpop.permute.xlu0 %793
        %795 = vrot.lane.b32.xlu0 %v748, 127
        %v796 = vpop.permute.xlu0 %795
        %vm797 = vcmask 1039360
        %v798 = vsel %vm797, %v766, %v768
        %v799 = vsel %vm797, %v768, %v770
        %v800 = vsel %vm797, %v770, %v772
        %v801 = vsel %vm797, %v774, %v776
        %v802 = vsel %vm797, %v776, %v778
        %v803 = vsel %vm797, %v778, %v780
        %v804 = vsel %vm797, %v782, %v784
        %v805 = vsel %vm797, %v784, %v786
        %v806 = vsel %vm797, %v786, %v788
        %v807 = vsel %vm797, %v790, %v792
        %v808 = vsel %vm797, %v792, %v794
        %v809 = vsel %vm797, %v794, %v796
        %822 = vst [vmem:[#allocation3 + $0x1e0] sm:$0xff] %v798
        %823 = vst [vmem:[#allocation3 + $0x1e8] sm:$0xff] %v799
        %824 = vst [vmem:[#allocation3 + $0x1f0] sm:$0xff] %v800
        %825 = vst [vmem:[#allocation3 + $0x1f8] sm:$0xff] %v801
        %826 = vst [vmem:[#allocation3 + $0x200] sm:$0xff] %v802
        %827 = vst [vmem:[#allocation3 + $0x208] sm:$0xff] %v803
        %828 = vst [vmem:[#allocation3 + $0x210] sm:$0xff] %v804
        %829 = vst [vmem:[#allocation3 + $0x218] sm:$0xff] %v805
        %830 = vst [vmem:[#allocation3 + $0x220] sm:$0xff] %v806
        %831 = vst [vmem:[#allocation3 + $0x228] sm:$0xff] %v807
        %832 = vst [vmem:[#allocation3 + $0x230] sm:$0xff] %v808
        %833 = vst [vmem:[#allocation3 + $0x238] sm:$0xff] %v809
        %v834 = vld [vmem:[#allocation2 + $0x8] sm:$0xff]
        %v835 = vld [vmem:[#allocation2 + $0x10] sm:$0xff]
        %v836 = vld [vmem:[#allocation2 + $0x18] sm:$0xff]
        %v837 = vld [vmem:[#allocation2 + $0x20] sm:$0xff]
        %v838 = vld [vmem:[#allocation2 + $0x30] sm:$0xff]
        %v839 = vld [vmem:[#allocation2 + $0x38] sm:$0xff]
        %v840 = vld [vmem:[#allocation2 + $0x40] sm:$0xff]
        %v841 = vld [vmem:[#allocation2 + $0x48] sm:$0xff]
        %v842 = vld [vmem:[#allocation2 + $0x58] sm:$0xff]
        %v843 = vld [vmem:[#allocation2 + $0x60] sm:$0xff]
        %v844 = vld [vmem:[#allocation2 + $0x68] sm:$0xff]
        %v845 = vld [vmem:[#allocation2 + $0x70] sm:$0xff]
        %v846 = vld [vmem:[#allocation2 + $0x80] sm:$0xff]
        %v847 = vld [vmem:[#allocation2 + $0x88] sm:$0xff]
        %v848 = vld [vmem:[#allocation2 + $0x90] sm:$0xff]
        %v849 = vld [vmem:[#allocation2 + $0x98] sm:$0xff]
        %866 = vrot.lane.b32.xlu0 %v834, 111
        %v867 = vpop.permute.xlu0 %866
        %868 = vrot.lane.b32.xlu0 %v835, 111
        %v869 = vpop.permute.xlu0 %868
        %870 = vrot.lane.b32.xlu0 %v836, 111
        %v871 = vpop.permute.xlu0 %870
        %872 = vrot.lane.b32.xlu0 %v837, 111
        %v873 = vpop.permute.xlu0 %872
        %874 = vrot.lane.b32.xlu0 %v838, 111
        %v875 = vpop.permute.xlu0 %874
        %876 = vrot.lane.b32.xlu0 %v839, 111
        %v877 = vpop.permute.xlu0 %876
        %878 = vrot.lane.b32.xlu0 %v840, 111
        %v879 = vpop.permute.xlu0 %878
        %880 = vrot.lane.b32.xlu0 %v841, 111
        %v881 = vpop.permute.xlu0 %880
        %882 = vrot.lane.b32.xlu0 %v842, 111
        %v883 = vpop.permute.xlu0 %882
        %884 = vrot.lane.b32.xlu0 %v843, 111
        %v885 = vpop.permute.xlu0 %884
        %886 = vrot.lane.b32.xlu0 %v844, 111
        %v887 = vpop.permute.xlu0 %886
        %888 = vrot.lane.b32.xlu0 %v845, 111
        %v889 = vpop.permute.xlu0 %888
        %890 = vrot.lane.b32.xlu0 %v846, 111
        %v891 = vpop.permute.xlu0 %890
        %892 = vrot.lane.b32.xlu0 %v847, 111
        %v893 = vpop.permute.xlu0 %892
        %894 = vrot.lane.b32.xlu0 %v848, 111
        %v895 = vpop.permute.xlu0 %894
        %896 = vrot.lane.b32.xlu0 %v849, 111
        %v897 = vpop.permute.xlu0 %896
        %vm898 = vcmask 908288
        %v899 = vsel %vm898, %v867, %v869
        %v900 = vsel %vm898, %v869, %v871
        %v901 = vsel %vm898, %v871, %v873
        %v902 = vsel %vm898, %v875, %v877
        %v903 = vsel %vm898, %v877, %v879
        %v904 = vsel %vm898, %v879, %v881
        %v905 = vsel %vm898, %v883, %v885
        %v906 = vsel %vm898, %v885, %v887
        %v907 = vsel %vm898, %v887, %v889
        %v908 = vsel %vm898, %v891, %v893
        %v909 = vsel %vm898, %v893, %v895
        %v910 = vsel %vm898, %v895, %v897
        %923 = vst [vmem:[#allocation3 + $0x240] sm:$0xff] %v899
        %924 = vst [vmem:[#allocation3 + $0x248] sm:$0xff] %v900
        %925 = vst [vmem:[#allocation3 + $0x250] sm:$0xff] %v901
        %926 = vst [vmem:[#allocation3 + $0x258] sm:$0xff] %v902
        %927 = vst [vmem:[#allocation3 + $0x260] sm:$0xff] %v903
        %928 = vst [vmem:[#allocation3 + $0x268] sm:$0xff] %v904
        %929 = vst [vmem:[#allocation3 + $0x270] sm:$0xff] %v905
        %930 = vst [vmem:[#allocation3 + $0x278] sm:$0xff] %v906
        %931 = vst [vmem:[#allocation3 + $0x280] sm:$0xff] %v907
        %932 = vst [vmem:[#allocation3 + $0x288] sm:$0xff] %v908
        %933 = vst [vmem:[#allocation3 + $0x290] sm:$0xff] %v909
        %934 = vst [vmem:[#allocation3 + $0x298] sm:$0xff] %v910
        %v935 = vld [vmem:[#allocation2 + $0x8] sm:$0xff]
        %v936 = vld [vmem:[#allocation2 + $0x10] sm:$0xff]
        %v937 = vld [vmem:[#allocation2 + $0x18] sm:$0xff]
        %v938 = vld [vmem:[#allocation2 + $0x20] sm:$0xff]
        %v939 = vld [vmem:[#allocation2 + $0x30] sm:$0xff]
        %v940 = vld [vmem:[#allocation2 + $0x38] sm:$0xff]
        %v941 = vld [vmem:[#allocation2 + $0x40] sm:$0xff]
        %v942 = vld [vmem:[#allocation2 + $0x48] sm:$0xff]
        %v943 = vld [vmem:[#allocation2 + $0x58] sm:$0xff]
        %v944 = vld [vmem:[#allocation2 + $0x60] sm:$0xff]
        %v945 = vld [vmem:[#allocation2 + $0x68] sm:$0xff]
        %v946 = vld [vmem:[#allocation2 + $0x70] sm:$0xff]
        %v947 = vld [vmem:[#allocation2 + $0x80] sm:$0xff]
        %v948 = vld [vmem:[#allocation2 + $0x88] sm:$0xff]
        %v949 = vld [vmem:[#allocation2 + $0x90] sm:$0xff]
        %v950 = vld [vmem:[#allocation2 + $0x98] sm:$0xff]
        %967 = vrot.lane.b32.xlu0 %v935, 110
        %v968 = vpop.permute.xlu0 %967
        %969 = vrot.lane.b32.xlu0 %v936, 110
        %v970 = vpop.permute.xlu0 %969
        %971 = vrot.lane.b32.xlu0 %v937, 110
        %v972 = vpop.permute.xlu0 %971
        %973 = vrot.lane.b32.xlu0 %v938, 110
        %v974 = vpop.permute.xlu0 %973
        %975 = vrot.lane.b32.xlu0 %v939, 110
        %v976 = vpop.permute.xlu0 %975
        %977 = vrot.lane.b32.xlu0 %v940, 110
        %v978 = vpop.permute.xlu0 %977
        %979 = vrot.lane.b32.xlu0 %v941, 110
        %v980 = vpop.permute.xlu0 %979
        %981 = vrot.lane.b32.xlu0 %v942, 110
        %v982 = vpop.permute.xlu0 %981
        %983 = vrot.lane.b32.xlu0 %v943, 110
        %v984 = vpop.permute.xlu0 %983
        %985 = vrot.lane.b32.xlu0 %v944, 110
        %v986 = vpop.permute.xlu0 %985
        %987 = vrot.lane.b32.xlu0 %v945, 110
        %v988 = vpop.permute.xlu0 %987
        %989 = vrot.lane.b32.xlu0 %v946, 110
        %v990 = vpop.permute.xlu0 %989
        %991 = vrot.lane.b32.xlu0 %v947, 110
        %v992 = vpop.permute.xlu0 %991
        %993 = vrot.lane.b32.xlu0 %v948, 110
        %v994 = vpop.permute.xlu0 %993
        %995 = vrot.lane.b32.xlu0 %v949, 110
        %v996 = vpop.permute.xlu0 %995
        %997 = vrot.lane.b32.xlu0 %v950, 110
        %v998 = vpop.permute.xlu0 %997
        %vm999 = vcmask 900096
        %v1000 = vsel %vm999, %v968, %v970
        %v1001 = vsel %vm999, %v970, %v972
        %v1002 = vsel %vm999, %v972, %v974
        %v1003 = vsel %vm999, %v976, %v978
        %v1004 = vsel %vm999, %v978, %v980
        %v1005 = vsel %vm999, %v980, %v982
        %v1006 = vsel %vm999, %v984, %v986
        %v1007 = vsel %vm999, %v986, %v988
        %v1008 = vsel %vm999, %v988, %v990
        %v1009 = vsel %vm999, %v992, %v994
        %v1010 = vsel %vm999, %v994, %v996
        %v1011 = vsel %vm999, %v996, %v998
        %1024 = vst [vmem:[#allocation3 + $0x2a0] sm:$0xff] %v1000
        %1025 = vst [vmem:[#allocation3 + $0x2a8] sm:$0xff] %v1001
        %1026 = vst [vmem:[#allocation3 + $0x2b0] sm:$0xff] %v1002
        %1027 = vst [vmem:[#allocation3 + $0x2b8] sm:$0xff] %v1003
        %1028 = vst [vmem:[#allocation3 + $0x2c0] sm:$0xff] %v1004
        %1029 = vst [vmem:[#allocation3 + $0x2c8] sm:$0xff] %v1005
        %1030 = vst [vmem:[#allocation3 + $0x2d0] sm:$0xff] %v1006
        %1031 = vst [vmem:[#allocation3 + $0x2d8] sm:$0xff] %v1007
        %1032 = vst [vmem:[#allocation3 + $0x2e0] sm:$0xff] %v1008
        %1033 = vst [vmem:[#allocation3 + $0x2e8] sm:$0xff] %v1009
        %1034 = vst [vmem:[#allocation3 + $0x2f0] sm:$0xff] %v1010
        %1035 = vst [vmem:[#allocation3 + $0x2f8] sm:$0xff] %v1011
        %v1036 = vld [vmem:[#allocation2 + $0x8] sm:$0xff]
        %v1037 = vld [vmem:[#allocation2 + $0x10] sm:$0xff]
        %v1038 = vld [vmem:[#allocation2 + $0x18] sm:$0xff]
        %v1039 = vld [vmem:[#allocation2 + $0x20] sm:$0xff]
        %v1040 = vld [vmem:[#allocation2 + $0x30] sm:$0xff]
        %v1041 = vld [vmem:[#allocation2 + $0x38] sm:$0xff]
        %v1042 = vld [vmem:[#allocation2 + $0x40] sm:$0xff]
        %v1043 = vld [vmem:[#allocation2 + $0x48] sm:$0xff]
        %v1044 = vld [vmem:[#allocation2 + $0x58] sm:$0xff]
        %v1045 = vld [vmem:[#allocation2 + $0x60] sm:$0xff]
        %v1046 = vld [vmem:[#allocation2 + $0x68] sm:$0xff]
        %v1047 = vld [vmem:[#allocation2 + $0x70] sm:$0xff]
        %v1048 = vld [vmem:[#allocation2 + $0x80] sm:$0xff]
        %v1049 = vld [vmem:[#allocation2 + $0x88] sm:$0xff]
        %v1050 = vld [vmem:[#allocation2 + $0x90] sm:$0xff]
        %v1051 = vld [vmem:[#allocation2 + $0x98] sm:$0xff]
        %1068 = vrot.lane.b32.xlu0 %v1036, 109
        %v1069 = vpop.permute.xlu0 %1068
        %1070 = vrot.lane.b32.xlu0 %v1037, 109
        %v1071 = vpop.permute.xlu0 %1070
        %1072 = vrot.lane.b32.xlu0 %v1038, 109
        %v1073 = vpop.permute.xlu0 %1072
        %1074 = vrot.lane.b32.xlu0 %v1039, 109
        %v1075 = vpop.permute.xlu0 %1074
        %1076 = vrot.lane.b32.xlu0 %v1040, 109
        %v1077 = vpop.permute.xlu0 %1076
        %1078 = vrot.lane.b32.xlu0 %v1041, 109
        %v1079 = vpop.permute.xlu0 %1078
        %1080 = vrot.lane.b32.xlu0 %v1042, 109
        %v1081 = vpop.permute.xlu0 %1080
        %1082 = vrot.lane.b32.xlu0 %v1043, 109
        %v1083 = vpop.permute.xlu0 %1082
        %1084 = vrot.lane.b32.xlu0 %v1044, 109
        %v1085 = vpop.permute.xlu0 %1084
        %1086 = vrot.lane.b32.xlu0 %v1045, 109
        %v1087 = vpop.permute.xlu0 %1086
        %1088 = vrot.lane.b32.xlu0 %v1046, 109
        %v1089 = vpop.permute.xlu0 %1088
        %1090 = vrot.lane.b32.xlu0 %v1047, 109
        %v1091 = vpop.permute.xlu0 %1090
        %1092 = vrot.lane.b32.xlu0 %v1048, 109
        %v1093 = vpop.permute.xlu0 %1092
        %1094 = vrot.lane.b32.xlu0 %v1049, 109
        %v1095 = vpop.permute.xlu0 %1094
        %1096 = vrot.lane.b32.xlu0 %v1050, 109
        %v1097 = vpop.permute.xlu0 %1096
        %1098 = vrot.lane.b32.xlu0 %v1051, 109
        %v1099 = vpop.permute.xlu0 %1098
        %vm1100 = vcmask 891904
        %v1101 = vsel %vm1100, %v1069, %v1071
        %v1102 = vsel %vm1100, %v1071, %v1073
        %v1103 = vsel %vm1100, %v1073, %v1075
        %v1104 = vsel %vm1100, %v1077, %v1079
        %v1105 = vsel %vm1100, %v1079, %v1081
        %v1106 = vsel %vm1100, %v1081, %v1083
        %v1107 = vsel %vm1100, %v1085, %v1087
        %v1108 = vsel %vm1100, %v1087, %v1089
        %v1109 = vsel %vm1100, %v1089, %v1091
        %v1110 = vsel %vm1100, %v1093, %v1095
        %v1111 = vsel %vm1100, %v1095, %v1097
        %v1112 = vsel %vm1100, %v1097, %v1099
        %1125 = vst [vmem:[#allocation3 + $0x300] sm:$0xff] %v1101
        %1126 = vst [vmem:[#allocation3 + $0x308] sm:$0xff] %v1102
        %1127 = vst [vmem:[#allocation3 + $0x310] sm:$0xff] %v1103
        %1128 = vst [vmem:[#allocation3 + $0x318] sm:$0xff] %v1104
        %1129 = vst [vmem:[#allocation3 + $0x320] sm:$0xff] %v1105
        %1130 = vst [vmem:[#allocation3 + $0x328] sm:$0xff] %v1106
        %1131 = vst [vmem:[#allocation3 + $0x330] sm:$0xff] %v1107
        %1132 = vst [vmem:[#allocation3 + $0x338] sm:$0xff] %v1108
        %1133 = vst [vmem:[#allocation3 + $0x340] sm:$0xff] %v1109
        %1134 = vst [vmem:[#allocation3 + $0x348] sm:$0xff] %v1110
        %1135 = vst [vmem:[#allocation3 + $0x350] sm:$0xff] %v1111
        %1136 = vst [vmem:[#allocation3 + $0x358] sm:$0xff] %v1112
        %v1137 = vld [vmem:[#allocation7] sm:$0xff]
        %v1138 = vld [vmem:[#allocation7 + $0x8] sm:$0xff]
        %v1139 = vld [vmem:[#allocation7 + $0x10] sm:$0xff]
        %v1140 = vld [vmem:[#allocation7 + $0x18] sm:$0xff]
        %v1141 = vld [vmem:[#allocation7 + $0x20] sm:$0xff]
        %v1142 = vld [vmem:[#allocation7 + $0x28] sm:$0xff]
        %v1143 = vld [vmem:[#allocation7 + $0x30] sm:$0xff]
        %v1144 = vld [vmem:[#allocation7 + $0x38] sm:$0xff]
        %v1145 = vld [vmem:[#allocation7 + $0x40] sm:$0xff]
        %v1146 = vld [vmem:[#allocation7 + $0x48] sm:$0xff]
        %v1147 = vld [vmem:[#allocation7 + $0x50] sm:$0xff]
        %v1148 = vld [vmem:[#allocation7 + $0x58] sm:$0xff]
        %v1149 = vld [vmem:[#allocation3] sm:$0xff]
        %v1150 = vld [vmem:[#allocation3 + $0x8] sm:$0xff]
        %v1151 = vld [vmem:[#allocation3 + $0x10] sm:$0xff]
        %v1152 = vld [vmem:[#allocation3 + $0x18] sm:$0xff]
        %v1153 = vld [vmem:[#allocation3 + $0x20] sm:$0xff]
        %v1154 = vld [vmem:[#allocation3 + $0x28] sm:$0xff]
        %v1155 = vld [vmem:[#allocation3 + $0x30] sm:$0xff]
        %v1156 = vld [vmem:[#allocation3 + $0x38] sm:$0xff]
        %v1157 = vld [vmem:[#allocation3 + $0x40] sm:$0xff]
        %v1158 = vld [vmem:[#allocation3 + $0x48] sm:$0xff]
        %v1159 = vld [vmem:[#allocation3 + $0x50] sm:$0xff]
        %v1160 = vld [vmem:[#allocation3 + $0x58] sm:$0xff]
        %v1161 = vld [vmem:[#allocation3 + $0x60] sm:$0xff]
        %v1162 = vld [vmem:[#allocation3 + $0x68] sm:$0xff]
        %v1163 = vld [vmem:[#allocation3 + $0x70] sm:$0xff]
        %v1164 = vld [vmem:[#allocation3 + $0x78] sm:$0xff]
        %v1165 = vld [vmem:[#allocation3 + $0x80] sm:$0xff]
        %v1166 = vld [vmem:[#allocation3 + $0x88] sm:$0xff]
        %v1167 = vld [vmem:[#allocation3 + $0x90] sm:$0xff]
        %v1168 = vld [vmem:[#allocation3 + $0x98] sm:$0xff]
        %v1169 = vld [vmem:[#allocation3 + $0xa0] sm:$0xff]
        %v1170 = vld [vmem:[#allocation3 + $0xa8] sm:$0xff]
        %v1171 = vld [vmem:[#allocation3 + $0xb0] sm:$0xff]
        %v1172 = vld [vmem:[#allocation3 + $0xb8] sm:$0xff]
        %v1173 = vld [vmem:[#allocation3 + $0xc0] sm:$0xff]
        %v1174 = vld [vmem:[#allocation3 + $0xc8] sm:$0xff]
        %v1175 = vld [vmem:[#allocation3 + $0xd0] sm:$0xff]
        %v1176 = vld [vmem:[#allocation3 + $0xd8] sm:$0xff]
        %v1177 = vld [vmem:[#allocation3 + $0xe0] sm:$0xff]
        %v1178 = vld [vmem:[#allocation3 + $0xe8] sm:$0xff]
        %v1179 = vld [vmem:[#allocation3 + $0xf0] sm:$0xff]
        %v1180 = vld [vmem:[#allocation3 + $0xf8] sm:$0xff]
        %v1181 = vld [vmem:[#allocation3 + $0x100] sm:$0xff]
        %v1182 = vld [vmem:[#allocation3 + $0x108] sm:$0xff]
        %v1183 = vld [vmem:[#allocation3 + $0x110] sm:$0xff]
        %v1184 = vld [vmem:[#allocation3 + $0x118] sm:$0xff]
        %v1185 = vld [vmem:[#allocation3 + $0x120] sm:$0xff]
        %v1186 = vld [vmem:[#allocation3 + $0x128] sm:$0xff]
        %v1187 = vld [vmem:[#allocation3 + $0x130] sm:$0xff]
        %v1188 = vld [vmem:[#allocation3 + $0x138] sm:$0xff]
        %v1189 = vld [vmem:[#allocation3 + $0x140] sm:$0xff]
        %v1190 = vld [vmem:[#allocation3 + $0x148] sm:$0xff]
        %v1191 = vld [vmem:[#allocation3 + $0x150] sm:$0xff]
        %v1192 = vld [vmem:[#allocation3 + $0x158] sm:$0xff]
        %v1193 = vld [vmem:[#allocation3 + $0x160] sm:$0xff]
        %v1194 = vld [vmem:[#allocation3 + $0x168] sm:$0xff]
        %v1195 = vld [vmem:[#allocation3 + $0x170] sm:$0xff]
        %v1196 = vld [vmem:[#allocation3 + $0x178] sm:$0xff]
        %v1197 = vld [vmem:[#allocation3 + $0x180] sm:$0xff]
        %v1198 = vld [vmem:[#allocation3 + $0x188] sm:$0xff]
        %v1199 = vld [vmem:[#allocation3 + $0x190] sm:$0xff]
        %v1200 = vld [vmem:[#allocation3 + $0x198] sm:$0xff]
        %v1201 = vld [vmem:[#allocation3 + $0x1a0] sm:$0xff]
        %v1202 = vld [vmem:[#allocation3 + $0x1a8] sm:$0xff]
        %v1203 = vld [vmem:[#allocation3 + $0x1b0] sm:$0xff]
        %v1204 = vld [vmem:[#allocation3 + $0x1b8] sm:$0xff]
        %v1205 = vld [vmem:[#allocation3 + $0x1c0] sm:$0xff]
        %v1206 = vld [vmem:[#allocation3 + $0x1c8] sm:$0xff]
        %v1207 = vld [vmem:[#allocation3 + $0x1d0] sm:$0xff]
        %v1208 = vld [vmem:[#allocation3 + $0x1d8] sm:$0xff]
        %v1209 = vld [vmem:[#allocation3 + $0x1e0] sm:$0xff]
        %v1210 = vld [vmem:[#allocation3 + $0x1e8] sm:$0xff]
        %v1211 = vld [vmem:[#allocation3 + $0x1f0] sm:$0xff]
        %v1212 = vld [vmem:[#allocation3 + $0x1f8] sm:$0xff]
        %v1213 = vld [vmem:[#allocation3 + $0x200] sm:$0xff]
        %v1214 = vld [vmem:[#allocation3 + $0x208] sm:$0xff]
        %v1215 = vld [vmem:[#allocation3 + $0x210] sm:$0xff]
        %v1216 = vld [vmem:[#allocation3 + $0x218] sm:$0xff]
        %v1217 = vld [vmem:[#allocation3 + $0x220] sm:$0xff]
        %v1218 = vld [vmem:[#allocation3 + $0x228] sm:$0xff]
        %v1219 = vld [vmem:[#allocation3 + $0x230] sm:$0xff]
        %v1220 = vld [vmem:[#allocation3 + $0x238] sm:$0xff]
        %v1221 = vld [vmem:[#allocation3 + $0x240] sm:$0xff]
        %v1222 = vld [vmem:[#allocation3 + $0x248] sm:$0xff]
        %v1223 = vld [vmem:[#allocation3 + $0x250] sm:$0xff]
        %v1224 = vld [vmem:[#allocation3 + $0x258] sm:$0xff]
        %v1225 = vld [vmem:[#allocation3 + $0x260] sm:$0xff]
        %v1226 = vld [vmem:[#allocation3 + $0x268] sm:$0xff]
        %v1227 = vld [vmem:[#allocation3 + $0x270] sm:$0xff]
        %v1228 = vld [vmem:[#allocation3 + $0x278] sm:$0xff]
        %v1229 = vld [vmem:[#allocation3 + $0x280] sm:$0xff]
        %v1230 = vld [vmem:[#allocation3 + $0x288] sm:$0xff]
        %v1231 = vld [vmem:[#allocation3 + $0x290] sm:$0xff]
        %v1232 = vld [vmem:[#allocation3 + $0x298] sm:$0xff]
        %v1233 = vld [vmem:[#allocation3 + $0x2a0] sm:$0xff]
        %v1234 = vld [vmem:[#allocation3 + $0x2a8] sm:$0xff]
        %v1235 = vld [vmem:[#allocation3 + $0x2b0] sm:$0xff]
        %v1236 = vld [vmem:[#allocation3 + $0x2b8] sm:$0xff]
        %v1237 = vld [vmem:[#allocation3 + $0x2c0] sm:$0xff]
        %v1238 = vld [vmem:[#allocation3 + $0x2c8] sm:$0xff]
        %v1239 = vld [vmem:[#allocation3 + $0x2d0] sm:$0xff]
        %v1240 = vld [vmem:[#allocation3 + $0x2d8] sm:$0xff]
        %v1241 = vld [vmem:[#allocation3 + $0x2e0] sm:$0xff]
        %v1242 = vld [vmem:[#allocation3 + $0x2e8] sm:$0xff]
        %v1243 = vld [vmem:[#allocation3 + $0x2f0] sm:$0xff]
        %v1244 = vld [vmem:[#allocation3 + $0x2f8] sm:$0xff]
        %v1245 = vld [vmem:[#allocation3 + $0x300] sm:$0xff]
        %v1246 = vld [vmem:[#allocation3 + $0x308] sm:$0xff]
        %v1247 = vld [vmem:[#allocation3 + $0x310] sm:$0xff]
        %v1248 = vld [vmem:[#allocation3 + $0x318] sm:$0xff]
        %v1249 = vld [vmem:[#allocation3 + $0x320] sm:$0xff]
        %v1250 = vld [vmem:[#allocation3 + $0x328] sm:$0xff]
        %v1251 = vld [vmem:[#allocation3 + $0x330] sm:$0xff]
        %v1252 = vld [vmem:[#allocation3 + $0x338] sm:$0xff]
        %v1253 = vld [vmem:[#allocation3 + $0x340] sm:$0xff]
        %v1254 = vld [vmem:[#allocation3 + $0x348] sm:$0xff]
        %v1255 = vld [vmem:[#allocation3 + $0x350] sm:$0xff]
        %v1256 = vld [vmem:[#allocation3 + $0x358] sm:$0xff]
        %v1257 = vld [vmem:[#allocation3 + $0x360] sm:$0xff]
        %v1258 = vld [vmem:[#allocation3 + $0x368] sm:$0xff]
        %v1259 = vld [vmem:[#allocation3 + $0x370] sm:$0xff]
        %v1260 = vld [vmem:[#allocation3 + $0x378] sm:$0xff]
        %v1261 = vld [vmem:[#allocation3 + $0x380] sm:$0xff]
        %v1262 = vld [vmem:[#allocation3 + $0x388] sm:$0xff]
        %v1263 = vld [vmem:[#allocation3 + $0x390] sm:$0xff]
        %v1264 = vld [vmem:[#allocation3 + $0x398] sm:$0xff]
        %v1265 = vld [vmem:[#allocation3 + $0x3a0] sm:$0xff]
        %v1266 = vld [vmem:[#allocation3 + $0x3a8] sm:$0xff]
        %v1267 = vld [vmem:[#allocation3 + $0x3b0] sm:$0xff]
        %v1268 = vld [vmem:[#allocation3 + $0x3b8] sm:$0xff]
        %v1269 = vld [vmem:[#allocation3 + $0x3c0] sm:$0xff]
        %v1270 = vld [vmem:[#allocation3 + $0x3c8] sm:$0xff]
        %v1271 = vld [vmem:[#allocation3 + $0x3d0] sm:$0xff]
        %v1272 = vld [vmem:[#allocation3 + $0x3d8] sm:$0xff]
        %v1273 = vld [vmem:[#allocation3 + $0x3e0] sm:$0xff]
        %v1274 = vld [vmem:[#allocation3 + $0x3e8] sm:$0xff]
        %v1275 = vld [vmem:[#allocation3 + $0x3f0] sm:$0xff]
        %v1276 = vld [vmem:[#allocation3 + $0x3f8] sm:$0xff]
        %v1277 = vld [vmem:[#allocation3 + $0x400] sm:$0xff]
        %v1278 = vld [vmem:[#allocation3 + $0x408] sm:$0xff]
        %v1279 = vld [vmem:[#allocation3 + $0x410] sm:$0xff]
        %v1280 = vld [vmem:[#allocation3 + $0x418] sm:$0xff]
        %v1281 = vld [vmem:[#allocation3 + $0x420] sm:$0xff]
        %v1282 = vld [vmem:[#allocation3 + $0x428] sm:$0xff]
        %v1283 = vld [vmem:[#allocation3 + $0x430] sm:$0xff]
        %v1284 = vld [vmem:[#allocation3 + $0x438] sm:$0xff]
        %v1285 = vld [vmem:[#allocation3 + $0x440] sm:$0xff]
        %v1286 = vld [vmem:[#allocation3 + $0x448] sm:$0xff]
        %v1287 = vld [vmem:[#allocation3 + $0x450] sm:$0xff]
        %v1288 = vld [vmem:[#allocation3 + $0x458] sm:$0xff]
        %v1289 = vld [vmem:[#allocation3 + $0x460] sm:$0xff]
        %v1290 = vld [vmem:[#allocation3 + $0x468] sm:$0xff]
        %v1291 = vld [vmem:[#allocation3 + $0x470] sm:$0xff]
        %v1292 = vld [vmem:[#allocation3 + $0x478] sm:$0xff]
        %v1293 = vld [vmem:[%s209] sm:$0xff]
        %v1294 = vld [vmem:[%s209 + $0x8] sm:$0xff]
        %v1295 = vld [vmem:[%s209 + $0x10] sm:$0xff]
        %v1296 = vld [vmem:[%s209 + $0x18] sm:$0xff]
        %v1297 = vld [vmem:[%s209 + $0x20] sm:$0xff]
        %v1298 = vld [vmem:[%s209 + $0x28] sm:$0xff]
        %v1299 = vld [vmem:[%s209 + $0x30] sm:$0xff]
        %v1300 = vld [vmem:[%s209 + $0x38] sm:$0xff]
        %v1301 = vld [vmem:[%s209 + $0x40] sm:$0xff]
        %v1302 = vld [vmem:[%s209 + $0x48] sm:$0xff]
        %v1303 = vld [vmem:[%s209 + $0x50] sm:$0xff]
        %v1304 = vld [vmem:[%s209 + $0x58] sm:$0xff]
        %1305 = vmatpush.msra.mxu0 %v1194
        %1306 = vmatpush.msra.mxu0 %v1191
        %1307 = vmatpush.msra.mxu0 %v1188
        %1308 = vmatpush.msra.mxu0 %v1185
        %1309 = vmatpush.msra.mxu0 %v1182
        %1310 = vmatpush.msra.mxu0 %v1179
        %1311 = vmatpush.msra.mxu0 %v1176
        %1312 = vmatpush.msra.mxu0 %v1173
        %1313 = vmatpush.msra.mxu0 %v1170
        %1314 = vmatpush.msra.mxu0 %v1167
        %1315 = vmatpush.msra.mxu0 %v1164
        %1316 = vmatpush.msra.mxu0 %v1161
        %1317 = vmatpush.msra.mxu0 %v1158
        %1318 = vmatpush.msra.mxu0 %v1155
        %1319 = vmatpush.msra.mxu0 %v1152
        %1320 = vmatpush.msra.mxu0 %v1149
        %1321 = vmatmul.f32.gmra.mxu0 %v1137
        %v1322 = vpop.f32.mrf.mxu0
        %v1323 = vadd.f32 %v1293, %v1322
        %1324 = vmatmul.f32.gmra.mxu0 %v1140
        %v1325 = vpop.f32.mrf.mxu0
        %v1326 = vadd.f32 %v1296, %v1325
        %1327 = vmatmul.f32.gmra.mxu0 %v1143
        %v1328 = vpop.f32.mrf.mxu0
        %v1329 = vadd.f32 %v1299, %v1328
        %1330 = vmatmul.f32.gmra.mxu0 %v1146
        %v1331 = vpop.f32.mrf.mxu0
        %v1332 = vadd.f32 %v1302, %v1331
        %1333 = vdwg.mxu0
        %1334 = vmatpush.msra.mxu0 %v1242
        %1335 = vmatpush.msra.mxu0 %v1239
        %1336 = vmatpush.msra.mxu0 %v1236
        %1337 = vmatpush.msra.mxu0 %v1233
        %1338 = vmatpush.msra.mxu0 %v1230
        %1339 = vmatpush.msra.mxu0 %v1227
        %1340 = vmatpush.msra.mxu0 %v1224
        %1341 = vmatpush.msra.mxu0 %v1221
        %1342 = vmatpush.msra.mxu0 %v1218
        %1343 = vmatpush.msra.mxu0 %v1215
        %1344 = vmatpush.msra.mxu0 %v1212
        %1345 = vmatpush.msra.mxu0 %v1209
        %1346 = vmatpush.msra.mxu0 %v1206
        %1347 = vmatpush.msra.mxu0 %v1203
        %1348 = vmatpush.msra.mxu0 %v1200
        %1349 = vmatpush.msra.mxu0 %v1197
        %1350 = vmatmul.f32.gmra.mxu0 %v1138
        %v1351 = vpop.f32.mrf.mxu0
        %v1352 = vadd.f32 %v1323, %v1351
        %1353 = vmatmul.f32.gmra.mxu0 %v1141
        %v1354 = vpop.f32.mrf.mxu0
        %v1355 = vadd.f32 %v1326, %v1354
        %1356 = vmatmul.f32.gmra.mxu0 %v1144
        %v1357 = vpop.f32.mrf.mxu0
        %v1358 = vadd.f32 %v1329, %v1357
        %1359 = vmatmul.f32.gmra.mxu0 %v1147
        %v1360 = vpop.f32.mrf.mxu0
        %v1361 = vadd.f32 %v1332, %v1360
        %1362 = vdwg.mxu0
        %1363 = vmatpush.msra.mxu0 %v1290
        %1364 = vmatpush.msra.mxu0 %v1287
        %1365 = vmatpush.msra.mxu0 %v1284
        %1366 = vmatpush.msra.mxu0 %v1281
        %1367 = vmatpush.msra.mxu0 %v1278
        %1368 = vmatpush.msra.mxu0 %v1275
        %1369 = vmatpush.msra.mxu0 %v1272
        %1370 = vmatpush.msra.mxu0 %v1269
        %1371 = vmatpush.msra.mxu0 %v1266
        %1372 = vmatpush.msra.mxu0 %v1263
        %1373 = vmatpush.msra.mxu0 %v1260
        %1374 = vmatpush.msra.mxu0 %v1257
        %1375 = vmatpush.msra.mxu0 %v1254
        %1376 = vmatpush.msra.mxu0 %v1251
        %1377 = vmatpush.msra.mxu0 %v1248
        %1378 = vmatpush.msra.mxu0 %v1245
        %1379 = vmatmul.f32.gmra.mxu0 %v1139
        %v1380 = vpop.f32.mrf.mxu0
        %v1381 = vadd.f32 %v1352, %v1380
        %1382 = vmatmul.f32.gmra.mxu0 %v1142
        %v1383 = vpop.f32.mrf.mxu0
        %v1384 = vadd.f32 %v1355, %v1383
        %1385 = vmatmul.f32.gmra.mxu0 %v1145
        %v1386 = vpop.f32.mrf.mxu0
        %v1387 = vadd.f32 %v1358, %v1386
        %1388 = vmatmul.f32.gmra.mxu0 %v1148
        %v1389 = vpop.f32.mrf.mxu0
        %v1390 = vadd.f32 %v1361, %v1389
        %1391 = vdwg.mxu0
        %1392 = vmatpush.msra.mxu0 %v1195
        %1393 = vmatpush.msra.mxu0 %v1192
        %1394 = vmatpush.msra.mxu0 %v1189
        %1395 = vmatpush.msra.mxu0 %v1186
        %1396 = vmatpush.msra.mxu0 %v1183
        %1397 = vmatpush.msra.mxu0 %v1180
        %1398 = vmatpush.msra.mxu0 %v1177
        %1399 = vmatpush.msra.mxu0 %v1174
        %1400 = vmatpush.msra.mxu0 %v1171
        %1401 = vmatpush.msra.mxu0 %v1168
        %1402 = vmatpush.msra.mxu0 %v1165
        %1403 = vmatpush.msra.mxu0 %v1162
        %1404 = vmatpush.msra.mxu0 %v1159
        %1405 = vmatpush.msra.mxu0 %v1156
        %1406 = vmatpush.msra.mxu0 %v1153
        %1407 = vmatpush.msra.mxu0 %v1150
        %1408 = vmatmul.f32.gmra.mxu0 %v1137
        %v1409 = vpop.f32.mrf.mxu0
        %v1410 = vadd.f32 %v1294, %v1409
        %1411 = vmatmul.f32.gmra.mxu0 %v1140
        %v1412 = vpop.f32.mrf.mxu0
        %v1413 = vadd.f32 %v1297, %v1412
        %1414 = vmatmul.f32.gmra.mxu0 %v1143
        %v1415 = vpop.f32.mrf.mxu0
        %v1416 = vadd.f32 %v1300, %v1415
        %1417 = vmatmul.f32.gmra.mxu0 %v1146
        %v1418 = vpop.f32.mrf.mxu0
        %v1419 = vadd.f32 %v1303, %v1418
        %1420 = vdwg.mxu0
        %1421 = vmatpush.msra.mxu0 %v1243
        %1422 = vmatpush.msra.mxu0 %v1240
        %1423 = vmatpush.msra.mxu0 %v1237
        %1424 = vmatpush.msra.mxu0 %v1234
        %1425 = vmatpush.msra.mxu0 %v1231
        %1426 = vmatpush.msra.mxu0 %v1228
        %1427 = vmatpush.msra.mxu0 %v1225
        %1428 = vmatpush.msra.mxu0 %v1222
        %1429 = vmatpush.msra.mxu0 %v1219
        %1430 = vmatpush.msra.mxu0 %v1216
        %1431 = vmatpush.msra.mxu0 %v1213
        %1432 = vmatpush.msra.mxu0 %v1210
        %1433 = vmatpush.msra.mxu0 %v1207
        %1434 = vmatpush.msra.mxu0 %v1204
        %1435 = vmatpush.msra.mxu0 %v1201
        %1436 = vmatpush.msra.mxu0 %v1198
        %1437 = vmatmul.f32.gmra.mxu0 %v1138
        %v1438 = vpop.f32.mrf.mxu0
        %v1439 = vadd.f32 %v1410, %v1438
        %1440 = vmatmul.f32.gmra.mxu0 %v1141
        %v1441 = vpop.f32.mrf.mxu0
        %v1442 = vadd.f32 %v1413, %v1441
        %1443 = vmatmul.f32.gmra.mxu0 %v1144
        %v1444 = vpop.f32.mrf.mxu0
        %v1445 = vadd.f32 %v1416, %v1444
        %1446 = vmatmul.f32.gmra.mxu0 %v1147
        %v1447 = vpop.f32.mrf.mxu0
        %v1448 = vadd.f32 %v1419, %v1447
        %1449 = vdwg.mxu0
        %1450 = vmatpush.msra.mxu0 %v1291
        %1451 = vmatpush.msra.mxu0 %v1288
        %1452 = vmatpush.msra.mxu0 %v1285
        %1453 = vmatpush.msra.mxu0 %v1282
        %1454 = vmatpush.msra.mxu0 %v1279
        %1455 = vmatpush.msra.mxu0 %v1276
        %1456 = vmatpush.msra.mxu0 %v1273
        %1457 = vmatpush.msra.mxu0 %v1270
        %1458 = vmatpush.msra.mxu0 %v1267
        %1459 = vmatpush.msra.mxu0 %v1264
        %1460 = vmatpush.msra.mxu0 %v1261
        %1461 = vmatpush.msra.mxu0 %v1258
        %1462 = vmatpush.msra.mxu0 %v1255
        %1463 = vmatpush.msra.mxu0 %v1252
        %1464 = vmatpush.msra.mxu0 %v1249
        %1465 = vmatpush.msra.mxu0 %v1246
        %1466 = vmatmul.f32.gmra.mxu0 %v1139
        %v1467 = vpop.f32.mrf.mxu0
        %v1468 = vadd.f32 %v1439, %v1467
        %1469 = vmatmul.f32.gmra.mxu0 %v1142
        %v1470 = vpop.f32.mrf.mxu0
        %v1471 = vadd.f32 %v1442, %v1470
        %1472 = vmatmul.f32.gmra.mxu0 %v1145
        %v1473 = vpop.f32.mrf.mxu0
        %v1474 = vadd.f32 %v1445, %v1473
        %1475 = vmatmul.f32.gmra.mxu0 %v1148
        %v1476 = vpop.f32.mrf.mxu0
        %v1477 = vadd.f32 %v1448, %v1476
        %1478 = vdwg.mxu0
        %1479 = vmatpush.msra.mxu0 %v1196
        %1480 = vmatpush.msra.mxu0 %v1193
        %1481 = vmatpush.msra.mxu0 %v1190
        %1482 = vmatpush.msra.mxu0 %v1187
        %1483 = vmatpush.msra.mxu0 %v1184
        %1484 = vmatpush.msra.mxu0 %v1181
        %1485 = vmatpush.msra.mxu0 %v1178
        %1486 = vmatpush.msra.mxu0 %v1175
        %1487 = vmatpush.msra.mxu0 %v1172
        %1488 = vmatpush.msra.mxu0 %v1169
        %1489 = vmatpush.msra.mxu0 %v1166
        %1490 = vmatpush.msra.mxu0 %v1163
        %1491 = vmatpush.msra.mxu0 %v1160
        %1492 = vmatpush.msra.mxu0 %v1157
        %1493 = vmatpush.msra.mxu0 %v1154
        %1494 = vmatpush.msra.mxu0 %v1151
        %1495 = vmatmul.f32.gmra.mxu0 %v1137
        %v1496 = vpop.f32.mrf.mxu0
        %v1497 = vadd.f32 %v1295, %v1496
        %1498 = vmatmul.f32.gmra.mxu0 %v1140
        %v1499 = vpop.f32.mrf.mxu0
        %v1500 = vadd.f32 %v1298, %v1499
        %1501 = vmatmul.f32.gmra.mxu0 %v1143
        %v1502 = vpop.f32.mrf.mxu0
        %v1503 = vadd.f32 %v1301, %v1502
        %1504 = vmatmul.f32.gmra.mxu0 %v1146
        %v1505 = vpop.f32.mrf.mxu0
        %v1506 = vadd.f32 %v1304, %v1505
        %1507 = vdwg.mxu0
        %1508 = vmatpush.msra.mxu0 %v1244
        %1509 = vmatpush.msra.mxu0 %v1241
        %1510 = vmatpush.msra.mxu0 %v1238
        %1511 = vmatpush.msra.mxu0 %v1235
        %1512 = vmatpush.msra.mxu0 %v1232
        %1513 = vmatpush.msra.mxu0 %v1229
        %1514 = vmatpush.msra.mxu0 %v1226
        %1515 = vmatpush.msra.mxu0 %v1223
        %1516 = vmatpush.msra.mxu0 %v1220
        %1517 = vmatpush.msra.mxu0 %v1217
        %1518 = vmatpush.msra.mxu0 %v1214
        %1519 = vmatpush.msra.mxu0 %v1211
        %1520 = vmatpush.msra.mxu0 %v1208
        %1521 = vmatpush.msra.mxu0 %v1205
        %1522 = vmatpush.msra.mxu0 %v1202
        %1523 = vmatpush.msra.mxu0 %v1199
        %1524 = vmatmul.f32.gmra.mxu0 %v1138
        %v1525 = vpop.f32.mrf.mxu0
        %v1526 = vadd.f32 %v1497, %v1525
        %1527 = vmatmul.f32.gmra.mxu0 %v1141
        %v1528 = vpop.f32.mrf.mxu0
        %v1529 = vadd.f32 %v1500, %v1528
        %1530 = vmatmul.f32.gmra.mxu0 %v1144
        %v1531 = vpop.f32.mrf.mxu0
        %v1532 = vadd.f32 %v1503, %v1531
        %1533 = vmatmul.f32.gmra.mxu0 %v1147
        %v1534 = vpop.f32.mrf.mxu0
        %v1535 = vadd.f32 %v1506, %v1534
        %1536 = vdwg.mxu0
        %1537 = vmatpush.msra.mxu0 %v1292
        %1538 = vmatpush.msra.mxu0 %v1289
        %1539 = vmatpush.msra.mxu0 %v1286
        %1540 = vmatpush.msra.mxu0 %v1283
        %1541 = vmatpush.msra.mxu0 %v1280
        %1542 = vmatpush.msra.mxu0 %v1277
        %1543 = vmatpush.msra.mxu0 %v1274
        %1544 = vmatpush.msra.mxu0 %v1271
        %1545 = vmatpush.msra.mxu0 %v1268
        %1546 = vmatpush.msra.mxu0 %v1265
        %1547 = vmatpush.msra.mxu0 %v1262
        %1548 = vmatpush.msra.mxu0 %v1259
        %1549 = vmatpush.msra.mxu0 %v1256
        %1550 = vmatpush.msra.mxu0 %v1253
        %1551 = vmatpush.msra.mxu0 %v1250
        %1552 = vmatpush.msra.mxu0 %v1247
        %1553 = vmatmul.f32.gmra.mxu0 %v1139
        %v1554 = vpop.f32.mrf.mxu0
        %v1555 = vadd.f32 %v1526, %v1554
        %1556 = vmatmul.f32.gmra.mxu0 %v1142
        %v1557 = vpop.f32.mrf.mxu0
        %v1558 = vadd.f32 %v1529, %v1557
        %1559 = vmatmul.f32.gmra.mxu0 %v1145
        %v1560 = vpop.f32.mrf.mxu0
        %v1561 = vadd.f32 %v1532, %v1560
        %1562 = vmatmul.f32.gmra.mxu0 %v1148
        %v1563 = vpop.f32.mrf.mxu0
        %v1564 = vadd.f32 %v1535, %v1563
        %1565 = vdwg.mxu0
        %v1566 = vtanh.pop %v1381
        %v1567 = vtanh.pop %v1468
        %v1568 = vtanh.pop %v1555
        %v1569 = vtanh.pop %v1384
        %v1570 = vtanh.pop %v1471
        %v1571 = vtanh.pop %v1558
        %v1572 = vtanh.pop %v1387
        %v1573 = vtanh.pop %v1474
        %v1574 = vtanh.pop %v1561
        %v1575 = vtanh.pop %v1390
        %v1576 = vtanh.pop %v1477
        %v1577 = vtanh.pop %v1564
        %v1578 = vld [vmem:[#allocation9] sm:$0xff]
        %v1579 = vld [vmem:[#allocation9 + $0x8] sm:$0xff]
        %v1580 = vld [vmem:[#allocation9 + $0x10] sm:$0xff]
        %v1581 = vld [vmem:[#allocation9 + $0x18] sm:$0xff]
        %v1582 = vld [vmem:[#allocation9 + $0x20] sm:$0xff]
        %v1583 = vld [vmem:[#allocation9 + $0x28] sm:$0xff]
        %v1584 = vld [vmem:[#allocation9 + $0x30] sm:$0xff]
        %v1585 = vld [vmem:[#allocation9 + $0x38] sm:$0xff]
        %v1586 = vld [vmem:[#allocation9 + $0x40] sm:$0xff]
        %v1587 = vld [vmem:[#allocation9 + $0x48] sm:$0xff]
        %v1588 = vld [vmem:[#allocation9 + $0x50] sm:$0xff]
        %v1589 = vld [vmem:[#allocation9 + $0x58] sm:$0xff]
        %v1590 = vmul.f32 %v1566, %v1578
        %v1591 = vmul.f32 %v1567, %v1579
        %v1592 = vmul.f32 %v1568, %v1580
        %v1593 = vmul.f32 %v1569, %v1581
        %v1594 = vmul.f32 %v1570, %v1582
        %v1595 = vmul.f32 %v1571, %v1583
        %v1596 = vmul.f32 %v1572, %v1584
        %v1597 = vmul.f32 %v1573, %v1585
        %v1598 = vmul.f32 %v1574, %v1586
        %v1599 = vmul.f32 %v1575, %v1587
        %v1600 = vmul.f32 %v1576, %v1588
        %v1601 = vmul.f32 %v1577, %v1589
        %1602 = vst [vmem:[%s242] sm:$0xff] %v1590
        %1603 = vst [vmem:[%s242 + $0x8] sm:$0xff] %v1591
        %1604 = vst [vmem:[%s242 + $0x10] sm:$0xff] %v1592
        %1605 = vst [vmem:[%s242 + $0x18] sm:$0xff] %v1593
        %1606 = vst [vmem:[%s242 + $0x20] sm:$0xff] %v1594
        %1607 = vst [vmem:[%s242 + $0x28] sm:$0xff] %v1595
        %1608 = vst [vmem:[%s242 + $0x30] sm:$0xff] %v1596
        %1609 = vst [vmem:[%s242 + $0x38] sm:$0xff] %v1597
        %1610 = vst [vmem:[%s242 + $0x40] sm:$0xff] %v1598
        %1611 = vst [vmem:[%s242 + $0x48] sm:$0xff] %v1599
        %1612 = vst [vmem:[%s242 + $0x50] sm:$0xff] %v1600
        %1613 = vst [vmem:[%s242 + $0x58] sm:$0xff] %v1601
        %1614 = vst [vmem:[#allocation2 + $0x8] sm:$0xff] %v1590
        %1615 = vst [vmem:[#allocation2 + $0x10] sm:$0xff] %v1591
        %1616 = vst [vmem:[#allocation2 + $0x18] sm:$0xff] %v1592
        %1617 = vst [vmem:[#allocation2 + $0x30] sm:$0xff] %v1593
        %1618 = vst [vmem:[#allocation2 + $0x38] sm:$0xff] %v1594
        %1619 = vst [vmem:[#allocation2 + $0x40] sm:$0xff] %v1595
        %1620 = vst [vmem:[#allocation2 + $0x58] sm:$0xff] %v1596
        %1621 = vst [vmem:[#allocation2 + $0x60] sm:$0xff] %v1597
        %1622 = vst [vmem:[#allocation2 + $0x68] sm:$0xff] %v1598
        %1623 = vst [vmem:[#allocation2 + $0x80] sm:$0xff] %v1599
        %1624 = vst [vmem:[#allocation2 + $0x88] sm:$0xff] %v1600
        %1625 = vst [vmem:[#allocation2 + $0x90] sm:$0xff] %v1601
        %v1626 = vld [vmem:[#allocation2] sm:$0xff]
        %v1627 = vld [vmem:[#allocation2 + $0x8] sm:$0xff]
        %v1628 = vld [vmem:[#allocation2 + $0x10] sm:$0xff]
        %v1629 = vld [vmem:[#allocation2 + $0x18] sm:$0xff]
        %v1630 = vld [vmem:[#allocation2 + $0x28] sm:$0xff]
        %v1631 = vld [vmem:[#allocation2 + $0x30] sm:$0xff]
        %v1632 = vld [vmem:[#allocation2 + $0x38] sm:$0xff]
        %v1633 = vld [vmem:[#allocation2 + $0x40] sm:$0xff]
        %v1634 = vld [vmem:[#allocation2 + $0x50] sm:$0xff]
        %v1635 = vld [vmem:[#allocation2 + $0x58] sm:$0xff]
        %v1636 = vld [vmem:[#allocation2 + $0x60] sm:$0xff]
        %v1637 = vld [vmem:[#allocation2 + $0x68] sm:$0xff]
        %v1638 = vld [vmem:[#allocation2 + $0x78] sm:$0xff]
        %v1639 = vld [vmem:[#allocation2 + $0x80] sm:$0xff]
        %v1640 = vld [vmem:[#allocation2 + $0x88] sm:$0xff]
        %v1641 = vld [vmem:[#allocation2 + $0x90] sm:$0xff]
        %1658 = vrot.lane.b32.xlu0 %v1626, 19
        %v1659 = vpop.permute.xlu0 %1658
        %1660 = vrot.lane.b32.xlu0 %v1627, 19
        %v1661 = vpop.permute.xlu0 %1660
        %1662 = vrot.lane.b32.xlu0 %v1628, 19
        %v1663 = vpop.permute.xlu0 %1662
        %1664 = vrot.lane.b32.xlu0 %v1629, 19
        %v1665 = vpop.permute.xlu0 %1664
        %1666 = vrot.lane.b32.xlu0 %v1630, 19
        %v1667 = vpop.permute.xlu0 %1666
        %1668 = vrot.lane.b32.xlu0 %v1631, 19
        %v1669 = vpop.permute.xlu0 %1668
        %1670 = vrot.lane.b32.xlu0 %v1632, 19
        %v1671 = vpop.permute.xlu0 %1670
        %1672 = vrot.lane.b32.xlu0 %v1633, 19
        %v1673 = vpop.permute.xlu0 %1672
        %1674 = vrot.lane.b32.xlu0 %v1634, 19
        %v1675 = vpop.permute.xlu0 %1674
        %1676 = vrot.lane.b32.xlu0 %v1635, 19
        %v1677 = vpop.permute.xlu0 %1676
        %1678 = vrot.lane.b32.xlu0 %v1636, 19
        %v1679 = vpop.permute.xlu0 %1678
        %1680 = vrot.lane.b32.xlu0 %v1637, 19
        %v1681 = vpop.permute.xlu0 %1680
        %1682 = vrot.lane.b32.xlu0 %v1638, 19
        %v1683 = vpop.permute.xlu0 %1682
        %1684 = vrot.lane.b32.xlu0 %v1639, 19
        %v1685 = vpop.permute.xlu0 %1684
        %1686 = vrot.lane.b32.xlu0 %v1640, 19
        %v1687 = vpop.permute.xlu0 %1686
        %1688 = vrot.lane.b32.xlu0 %v1641, 19
        %v1689 = vpop.permute.xlu0 %1688
        %v1690 = vsel %vm369, %v1659, %v1661
        %v1691 = vsel %vm369, %v1661, %v1663
        %v1692 = vsel %vm369, %v1663, %v1665
        %v1693 = vsel %vm369, %v1667, %v1669
        %v1694 = vsel %vm369, %v1669, %v1671
        %v1695 = vsel %vm369, %v1671, %v1673
        %v1696 = vsel %vm369, %v1675, %v1677
        %v1697 = vsel %vm369, %v1677, %v1679
        %v1698 = vsel %vm369, %v1679, %v1681
        %v1699 = vsel %vm369, %v1683, %v1685
        %v1700 = vsel %vm369, %v1685, %v1687
        %v1701 = vsel %vm369, %v1687, %v1689
        %1714 = vst [vmem:[#allocation3] sm:$0xff] %v1690
        %1715 = vst [vmem:[#allocation3 + $0x8] sm:$0xff] %v1691
        %1716 = vst [vmem:[#allocation3 + $0x10] sm:$0xff] %v1692
        %1717 = vst [vmem:[#allocation3 + $0x18] sm:$0xff] %v1693
        %1718 = vst [vmem:[#allocation3 + $0x20] sm:$0xff] %v1694
        %1719 = vst [vmem:[#allocation3 + $0x28] sm:$0xff] %v1695
        %1720 = vst [vmem:[#allocation3 + $0x30] sm:$0xff] %v1696
        %1721 = vst [vmem:[#allocation3 + $0x38] sm:$0xff] %v1697
        %1722 = vst [vmem:[#allocation3 + $0x40] sm:$0xff] %v1698
        %1723 = vst [vmem:[#allocation3 + $0x48] sm:$0xff] %v1699
        %1724 = vst [vmem:[#allocation3 + $0x50] sm:$0xff] %v1700
        %1725 = vst [vmem:[#allocation3 + $0x58] sm:$0xff] %v1701
        %v1726 = vld [vmem:[#allocation2] sm:$0xff]
        %v1727 = vld [vmem:[#allocation2 + $0x8] sm:$0xff]
        %v1728 = vld [vmem:[#allocation2 + $0x10] sm:$0xff]
        %v1729 = vld [vmem:[#allocation2 + $0x18] sm:$0xff]
        %v1730 = vld [vmem:[#allocation2 + $0x28] sm:$0xff]
        %v1731 = vld [vmem:[#allocation2 + $0x30] sm:$0xff]
        %v1732 = vld [vmem:[#allocation2 + $0x38] sm:$0xff]
        %v1733 = vld [vmem:[#allocation2 + $0x40] sm:$0xff]
        %v1734 = vld [vmem:[#allocation2 + $0x50] sm:$0xff]
        %v1735 = vld [vmem:[#allocation2 + $0x58] sm:$0xff]
        %v1736 = vld [vmem:[#allocation2 + $0x60] sm:$0xff]
        %v1737 = vld [vmem:[#allocation2 + $0x68] sm:$0xff]
        %v1738 = vld [vmem:[#allocation2 + $0x78] sm:$0xff]
        %v1739 = vld [vmem:[#allocation2 + $0x80] sm:$0xff]
        %v1740 = vld [vmem:[#allocation2 + $0x88] sm:$0xff]
        %v1741 = vld [vmem:[#allocation2 + $0x90] sm:$0xff]
        %1758 = vrot.lane.b32.xlu0 %v1726, 18
        %v1759 = vpop.permute.xlu0 %1758
        %1760 = vrot.lane.b32.xlu0 %v1727, 18
        %v1761 = vpop.permute.xlu0 %1760
        %1762 = vrot.lane.b32.xlu0 %v1728, 18
        %v1763 = vpop.permute.xlu0 %1762
        %1764 = vrot.lane.b32.xlu0 %v1729, 18
        %v1765 = vpop.permute.xlu0 %1764
        %1766 = vrot.lane.b32.xlu0 %v1730, 18
        %v1767 = vpop.permute.xlu0 %1766
        %1768 = vrot.lane.b32.xlu0 %v1731, 18
        %v1769 = vpop.permute.xlu0 %1768
        %1770 = vrot.lane.b32.xlu0 %v1732, 18
        %v1771 = vpop.permute.xlu0 %1770
        %1772 = vrot.lane.b32.xlu0 %v1733, 18
        %v1773 = vpop.permute.xlu0 %1772
        %1774 = vrot.lane.b32.xlu0 %v1734, 18
        %v1775 = vpop.permute.xlu0 %1774
        %1776 = vrot.lane.b32.xlu0 %v1735, 18
        %v1777 = vpop.permute.xlu0 %1776
        %1778 = vrot.lane.b32.xlu0 %v1736, 18
        %v1779 = vpop.permute.xlu0 %1778
        %1780 = vrot.lane.b32.xlu0 %v1737, 18
        %v1781 = vpop.permute.xlu0 %1780
        %1782 = vrot.lane.b32.xlu0 %v1738, 18
        %v1783 = vpop.permute.xlu0 %1782
        %1784 = vrot.lane.b32.xlu0 %v1739, 18
        %v1785 = vpop.permute.xlu0 %1784
        %1786 = vrot.lane.b32.xlu0 %v1740, 18
        %v1787 = vpop.permute.xlu0 %1786
        %1788 = vrot.lane.b32.xlu0 %v1741, 18
        %v1789 = vpop.permute.xlu0 %1788
        %v1790 = vsel %vm470, %v1759, %v1761
        %v1791 = vsel %vm470, %v1761, %v1763
        %v1792 = vsel %vm470, %v1763, %v1765
        %v1793 = vsel %vm470, %v1767, %v1769
        %v1794 = vsel %vm470, %v1769, %v1771
        %v1795 = vsel %vm470, %v1771, %v1773
        %v1796 = vsel %vm470, %v1775, %v1777
        %v1797 = vsel %vm470, %v1777, %v1779
        %v1798 = vsel %vm470, %v1779, %v1781
        %v1799 = vsel %vm470, %v1783, %v1785
        %v1800 = vsel %vm470, %v1785, %v1787
        %v1801 = vsel %vm470, %v1787, %v1789
        %1814 = vst [vmem:[#allocation3 + $0x60] sm:$0xff] %v1790
        %1815 = vst [vmem:[#allocation3 + $0x68] sm:$0xff] %v1791
        %1816 = vst [vmem:[#allocation3 + $0x70] sm:$0xff] %v1792
        %1817 = vst [vmem:[#allocation3 + $0x78] sm:$0xff] %v1793
        %1818 = vst [vmem:[#allocation3 + $0x80] sm:$0xff] %v1794
        %1819 = vst [vmem:[#allocation3 + $0x88] sm:$0xff] %v1795
        %1820 = vst [vmem:[#allocation3 + $0x90] sm:$0xff] %v1796
        %1821 = vst [vmem:[#allocation3 + $0x98] sm:$0xff] %v1797
        %1822 = vst [vmem:[#allocation3 + $0xa0] sm:$0xff] %v1798
        %1823 = vst [vmem:[#allocation3 + $0xa8] sm:$0xff] %v1799
        %1824 = vst [vmem:[#allocation3 + $0xb0] sm:$0xff] %v1800
        %1825 = vst [vmem:[#allocation3 + $0xb8] sm:$0xff] %v1801
        %v1826 = vld [vmem:[#allocation2] sm:$0xff]
        %v1827 = vld [vmem:[#allocation2 + $0x8] sm:$0xff]
        %v1828 = vld [vmem:[#allocation2 + $0x10] sm:$0xff]
        %v1829 = vld [vmem:[#allocation2 + $0x18] sm:$0xff]
        %v1830 = vld [vmem:[#allocation2 + $0x28] sm:$0xff]
        %v1831 = vld [vmem:[#allocation2 + $0x30] sm:$0xff]
        %v1832 = vld [vmem:[#allocation2 + $0x38] sm:$0xff]
        %v1833 = vld [vmem:[#allocation2 + $0x40] sm:$0xff]
        %v1834 = vld [vmem:[#allocation2 + $0x50] sm:$0xff]
        %v1835 = vld [vmem:[#allocation2 + $0x58] sm:$0xff]
        %v1836 = vld [vmem:[#allocation2 + $0x60] sm:$0xff]
        %v1837 = vld [vmem:[#allocation2 + $0x68] sm:$0xff]
        %v1838 = vld [vmem:[#allocation2 + $0x78] sm:$0xff]
        %v1839 = vld [vmem:[#allocation2 + $0x80] sm:$0xff]
        %v1840 = vld [vmem:[#allocation2 + $0x88] sm:$0xff]
        %v1841 = vld [vmem:[#allocation2 + $0x90] sm:$0xff]
        %1858 = vrot.lane.b32.xlu0 %v1826, 17
        %v1859 = vpop.permute.xlu0 %1858
        %1860 = vrot.lane.b32.xlu0 %v1827, 17
        %v1861 = vpop.permute.xlu0 %1860
        %1862 = vrot.lane.b32.xlu0 %v1828, 17
        %v1863 = vpop.permute.xlu0 %1862
        %1864 = vrot.lane.b32.xlu0 %v1829, 17
        %v1865 = vpop.permute.xlu0 %1864
        %1866 = vrot.lane.b32.xlu0 %v1830, 17
        %v1867 = vpop.permute.xlu0 %1866
        %1868 = vrot.lane.b32.xlu0 %v1831, 17
        %v1869 = vpop.permute.xlu0 %1868
        %1870 = vrot.lane.b32.xlu0 %v1832, 17
        %v1871 = vpop.permute.xlu0 %1870
        %1872 = vrot.lane.b32.xlu0 %v1833, 17
        %v1873 = vpop.permute.xlu0 %1872
        %1874 = vrot.lane.b32.xlu0 %v1834, 17
        %v1875 = vpop.permute.xlu0 %1874
        %1876 = vrot.lane.b32.xlu0 %v1835, 17
        %v1877 = vpop.permute.xlu0 %1876
        %1878 = vrot.lane.b32.xlu0 %v1836, 17
        %v1879 = vpop.permute.xlu0 %1878
        %1880 = vrot.lane.b32.xlu0 %v1837, 17
        %v1881 = vpop.permute.xlu0 %1880
        %1882 = vrot.lane.b32.xlu0 %v1838, 17
        %v1883 = vpop.permute.xlu0 %1882
        %1884 = vrot.lane.b32.xlu0 %v1839, 17
        %v1885 = vpop.permute.xlu0 %1884
        %1886 = vrot.lane.b32.xlu0 %v1840, 17
        %v1887 = vpop.permute.xlu0 %1886
        %1888 = vrot.lane.b32.xlu0 %v1841, 17
        %v1889 = vpop.permute.xlu0 %1888
        %v1890 = vsel %vm571, %v1859, %v1861
        %v1891 = vsel %vm571, %v1861, %v1863
        %v1892 = vsel %vm571, %v1863, %v1865
        %v1893 = vsel %vm571, %v1867, %v1869
        %v1894 = vsel %vm571, %v1869, %v1871
        %v1895 = vsel %vm571, %v1871, %v1873
        %v1896 = vsel %vm571, %v1875, %v1877
        %v1897 = vsel %vm571, %v1877, %v1879
        %v1898 = vsel %vm571, %v1879, %v1881
        %v1899 = vsel %vm571, %v1883, %v1885
        %v1900 = vsel %vm571, %v1885, %v1887
        %v1901 = vsel %vm571, %v1887, %v1889
        %1914 = vst [vmem:[#allocation3 + $0xc0] sm:$0xff] %v1890
        %1915 = vst [vmem:[#allocation3 + $0xc8] sm:$0xff] %v1891
        %1916 = vst [vmem:[#allocation3 + $0xd0] sm:$0xff] %v1892
        %1917 = vst [vmem:[#allocation3 + $0xd8] sm:$0xff] %v1893
        %1918 = vst [vmem:[#allocation3 + $0xe0] sm:$0xff] %v1894
        %1919 = vst [vmem:[#allocation3 + $0xe8] sm:$0xff] %v1895
        %1920 = vst [vmem:[#allocation3 + $0xf0] sm:$0xff] %v1896
        %1921 = vst [vmem:[#allocation3 + $0xf8] sm:$0xff] %v1897
        %1922 = vst [vmem:[#allocation3 + $0x100] sm:$0xff] %v1898
        %1923 = vst [vmem:[#allocation3 + $0x108] sm:$0xff] %v1899
        %1924 = vst [vmem:[#allocation3 + $0x110] sm:$0xff] %v1900
        %1925 = vst [vmem:[#allocation3 + $0x118] sm:$0xff] %v1901
        %v1926 = vld [vmem:[#allocation2] sm:$0xff]
        %v1927 = vld [vmem:[#allocation2 + $0x8] sm:$0xff]
        %v1928 = vld [vmem:[#allocation2 + $0x10] sm:$0xff]
        %v1929 = vld [vmem:[#allocation2 + $0x18] sm:$0xff]
        %v1930 = vld [vmem:[#allocation2 + $0x28] sm:$0xff]
        %v1931 = vld [vmem:[#allocation2 + $0x30] sm:$0xff]
        %v1932 = vld [vmem:[#allocation2 + $0x38] sm:$0xff]
        %v1933 = vld [vmem:[#allocation2 + $0x40] sm:$0xff]
        %v1934 = vld [vmem:[#allocation2 + $0x50] sm:$0xff]
        %v1935 = vld [vmem:[#allocation2 + $0x58] sm:$0xff]
        %v1936 = vld [vmem:[#allocation2 + $0x60] sm:$0xff]
        %v1937 = vld [vmem:[#allocation2 + $0x68] sm:$0xff]
        %v1938 = vld [vmem:[#allocation2 + $0x78] sm:$0xff]
        %v1939 = vld [vmem:[#allocation2 + $0x80] sm:$0xff]
        %v1940 = vld [vmem:[#allocation2 + $0x88] sm:$0xff]
        %v1941 = vld [vmem:[#allocation2 + $0x90] sm:$0xff]
        %1958 = vrot.lane.b32.xlu0 %v1926, 1
        %v1959 = vpop.permute.xlu0 %1958
        %1960 = vrot.lane.b32.xlu0 %v1927, 1
        %v1961 = vpop.permute.xlu0 %1960
        %1962 = vrot.lane.b32.xlu0 %v1928, 1
        %v1963 = vpop.permute.xlu0 %1962
        %1964 = vrot.lane.b32.xlu0 %v1929, 1
        %v1965 = vpop.permute.xlu0 %1964
        %1966 = vrot.lane.b32.xlu0 %v1930, 1
        %v1967 = vpop.permute.xlu0 %1966
        %1968 = vrot.lane.b32.xlu0 %v1931, 1
        %v1969 = vpop.permute.xlu0 %1968
        %1970 = vrot.lane.b32.xlu0 %v1932, 1
        %v1971 = vpop.permute.xlu0 %1970
        %1972 = vrot.lane.b32.xlu0 %v1933, 1
        %v1973 = vpop.permute.xlu0 %1972
        %1974 = vrot.lane.b32.xlu0 %v1934, 1
        %v1975 = vpop.permute.xlu0 %1974
        %1976 = vrot.lane.b32.xlu0 %v1935, 1
        %v1977 = vpop.permute.xlu0 %1976
        %1978 = vrot.lane.b32.xlu0 %v1936, 1
        %v1979 = vpop.permute.xlu0 %1978
        %1980 = vrot.lane.b32.xlu0 %v1937, 1
        %v1981 = vpop.permute.xlu0 %1980
        %1982 = vrot.lane.b32.xlu0 %v1938, 1
        %v1983 = vpop.permute.xlu0 %1982
        %1984 = vrot.lane.b32.xlu0 %v1939, 1
        %v1985 = vpop.permute.xlu0 %1984
        %1986 = vrot.lane.b32.xlu0 %v1940, 1
        %v1987 = vpop.permute.xlu0 %1986
        %1988 = vrot.lane.b32.xlu0 %v1941, 1
        %v1989 = vpop.permute.xlu0 %1988
        %v1990 = vsel %vm672, %v1959, %v1961
        %v1991 = vsel %vm672, %v1961, %v1963
        %v1992 = vsel %vm672, %v1963, %v1965
        %v1993 = vsel %vm672, %v1967, %v1969
        %v1994 = vsel %vm672, %v1969, %v1971
        %v1995 = vsel %vm672, %v1971, %v1973
        %v1996 = vsel %vm672, %v1975, %v1977
        %v1997 = vsel %vm672, %v1977, %v1979
        %v1998 = vsel %vm672, %v1979, %v1981
        %v1999 = vsel %vm672, %v1983, %v1985
        %v2000 = vsel %vm672, %v1985, %v1987
        %v2001 = vsel %vm672, %v1987, %v1989
        %2014 = vst [vmem:[#allocation3 + $0x120] sm:$0xff] %v1990
        %2015 = vst [vmem:[#allocation3 + $0x128] sm:$0xff] %v1991
        %2016 = vst [vmem:[#allocation3 + $0x130] sm:$0xff] %v1992
        %2017 = vst [vmem:[#allocation3 + $0x138] sm:$0xff] %v1993
        %2018 = vst [vmem:[#allocation3 + $0x140] sm:$0xff] %v1994
        %2019 = vst [vmem:[#allocation3 + $0x148] sm:$0xff] %v1995
        %2020 = vst [vmem:[#allocation3 + $0x150] sm:$0xff] %v1996
        %2021 = vst [vmem:[#allocation3 + $0x158] sm:$0xff] %v1997
        %2022 = vst [vmem:[#allocation3 + $0x160] sm:$0xff] %v1998
        %2023 = vst [vmem:[#allocation3 + $0x168] sm:$0xff] %v1999
        %2024 = vst [vmem:[#allocation3 + $0x170] sm:$0xff] %v2000
        %2025 = vst [vmem:[#allocation3 + $0x178] sm:$0xff] %v2001
        %v2026 = vld [vmem:[#allocation2 + $0x8] sm:$0xff]
        %v2027 = vld [vmem:[#allocation2 + $0x10] sm:$0xff]
        %v2028 = vld [vmem:[#allocation2 + $0x18] sm:$0xff]
        %v2029 = vld [vmem:[#allocation2 + $0x30] sm:$0xff]
        %v2030 = vld [vmem:[#allocation2 + $0x38] sm:$0xff]
        %v2031 = vld [vmem:[#allocation2 + $0x40] sm:$0xff]
        %v2032 = vld [vmem:[#allocation2 + $0x58] sm:$0xff]
        %v2033 = vld [vmem:[#allocation2 + $0x60] sm:$0xff]
        %v2034 = vld [vmem:[#allocation2 + $0x68] sm:$0xff]
        %v2035 = vld [vmem:[#allocation2 + $0x80] sm:$0xff]
        %v2036 = vld [vmem:[#allocation2 + $0x88] sm:$0xff]
        %v2037 = vld [vmem:[#allocation2 + $0x90] sm:$0xff]
        %2038 = vst [vmem:[#allocation3 + $0x180] sm:$0xff] %v2026
        %2039 = vst [vmem:[#allocation3 + $0x188] sm:$0xff] %v2027
        %2040 = vst [vmem:[#allocation3 + $0x190] sm:$0xff] %v2028
        %2041 = vst [vmem:[#allocation3 + $0x198] sm:$0xff] %v2029
        %2042 = vst [vmem:[#allocation3 + $0x1a0] sm:$0xff] %v2030
        %2043 = vst [vmem:[#allocation3 + $0x1a8] sm:$0xff] %v2031
        %2044 = vst [vmem:[#allocation3 + $0x1b0] sm:$0xff] %v2032
        %2045 = vst [vmem:[#allocation3 + $0x1b8] sm:$0xff] %v2033
        %2046 = vst [vmem:[#allocation3 + $0x1c0] sm:$0xff] %v2034
        %2047 = vst [vmem:[#allocation3 + $0x1c8] sm:$0xff] %v2035
        %2048 = vst [vmem:[#allocation3 + $0x1d0] sm:$0xff] %v2036
        %2049 = vst [vmem:[#allocation3 + $0x1d8] sm:$0xff] %v2037
        %v2050 = vld [vmem:[#allocation2 + $0x8] sm:$0xff]
        %v2051 = vld [vmem:[#allocation2 + $0x10] sm:$0xff]
        %v2052 = vld [vmem:[#allocation2 + $0x18] sm:$0xff]
        %v2053 = vld [vmem:[#allocation2 + $0x20] sm:$0xff]
        %v2054 = vld [vmem:[#allocation2 + $0x30] sm:$0xff]
        %v2055 = vld [vmem:[#allocation2 + $0x38] sm:$0xff]
        %v2056 = vld [vmem:[#allocation2 + $0x40] sm:$0xff]
        %v2057 = vld [vmem:[#allocation2 + $0x48] sm:$0xff]
        %v2058 = vld [vmem:[#allocation2 + $0x58] sm:$0xff]
        %v2059 = vld [vmem:[#allocation2 + $0x60] sm:$0xff]
        %v2060 = vld [vmem:[#allocation2 + $0x68] sm:$0xff]
        %v2061 = vld [vmem:[#allocation2 + $0x70] sm:$0xff]
        %v2062 = vld [vmem:[#allocation2 + $0x80] sm:$0xff]
        %v2063 = vld [vmem:[#allocation2 + $0x88] sm:$0xff]
        %v2064 = vld [vmem:[#allocation2 + $0x90] sm:$0xff]
        %v2065 = vld [vmem:[#allocation2 + $0x98] sm:$0xff]
        %2082 = vrot.lane.b32.xlu0 %v2050, 127
        %v2083 = vpop.permute.xlu0 %2082
        %2084 = vrot.lane.b32.xlu0 %v2051, 127
        %v2085 = vpop.permute.xlu0 %2084
        %2086 = vrot.lane.b32.xlu0 %v2052, 127
        %v2087 = vpop.permute.xlu0 %2086
        %2088 = vrot.lane.b32.xlu0 %v2053, 127
        %v2089 = vpop.permute.xlu0 %2088
        %2090 = vrot.lane.b32.xlu0 %v2054, 127
        %v2091 = vpop.permute.xlu0 %2090
        %2092 = vrot.lane.b32.xlu0 %v2055, 127
        %v2093 = vpop.permute.xlu0 %2092
        %2094 = vrot.lane.b32.xlu0 %v2056, 127
        %v2095 = vpop.permute.xlu0 %2094
        %2096 = vrot.lane.b32.xlu0 %v2057, 127
        %v2097 = vpop.permute.xlu0 %2096
        %2098 = vrot.lane.b32.xlu0 %v2058, 127
        %v2099 = vpop.permute.xlu0 %2098
        %2100 = vrot.lane.b32.xlu0 %v2059, 127
        %v2101 = vpop.permute.xlu0 %2100
        %2102 = vrot.lane.b32.xlu0 %v2060, 127
        %v2103 = vpop.permute.xlu0 %2102
        %2104 = vrot.lane.b32.xlu0 %v2061, 127
        %v2105 = vpop.permute.xlu0 %2104
        %2106 = vrot.lane.b32.xlu0 %v2062, 127
        %v2107 = vpop.permute.xlu0 %2106
        %2108 = vrot.lane.b32.xlu0 %v2063, 127
        %v2109 = vpop.permute.xlu0 %2108
        %2110 = vrot.lane.b32.xlu0 %v2064, 127
        %v2111 = vpop.permute.xlu0 %2110
        %2112 = vrot.lane.b32.xlu0 %v2065, 127
        %v2113 = vpop.permute.xlu0 %2112
        %v2114 = vsel %vm797, %v2083, %v2085
        %v2115 = vsel %vm797, %v2085, %v2087
        %v2116 = vsel %vm797, %v2087, %v2089
        %v2117 = vsel %vm797, %v2091, %v2093
        %v2118 = vsel %vm797, %v2093, %v2095
        %v2119 = vsel %vm797, %v2095, %v2097
        %v2120 = vsel %vm797, %v2099, %v2101
        %v2121 = vsel %vm797, %v2101, %v2103
        %v2122 = vsel %vm797, %v2103, %v2105
        %v2123 = vsel %vm797, %v2107, %v2109
        %v2124 = vsel %vm797, %v2109, %v2111
        %v2125 = vsel %vm797, %v2111, %v2113
        %2138 = vst [vmem:[#allocation3 + $0x1e0] sm:$0xff] %v2114
        %2139 = vst [vmem:[#allocation3 + $0x1e8] sm:$0xff] %v2115
        %2140 = vst [vmem:[#allocation3 + $0x1f0] sm:$0xff] %v2116
        %2141 = vst [vmem:[#allocation3 + $0x1f8] sm:$0xff] %v2117
        %2142 = vst [vmem:[#allocation3 + $0x200] sm:$0xff] %v2118
        %2143 = vst [vmem:[#allocation3 + $0x208] sm:$0xff] %v2119
        %2144 = vst [vmem:[#allocation3 + $0x210] sm:$0xff] %v2120
        %2145 = vst [vmem:[#allocation3 + $0x218] sm:$0xff] %v2121
        %2146 = vst [vmem:[#allocation3 + $0x220] sm:$0xff] %v2122
        %2147 = vst [vmem:[#allocation3 + $0x228] sm:$0xff] %v2123
        %2148 = vst [vmem:[#allocation3 + $0x230] sm:$0xff] %v2124
        %2149 = vst [vmem:[#allocation3 + $0x238] sm:$0xff] %v2125
        %v2150 = vld [vmem:[#allocation2 + $0x8] sm:$0xff]
        %v2151 = vld [vmem:[#allocation2 + $0x10] sm:$0xff]
        %v2152 = vld [vmem:[#allocation2 + $0x18] sm:$0xff]
        %v2153 = vld [vmem:[#allocation2 + $0x20] sm:$0xff]
        %v2154 = vld [vmem:[#allocation2 + $0x30] sm:$0xff]
        %v2155 = vld [vmem:[#allocation2 + $0x38] sm:$0xff]
        %v2156 = vld [vmem:[#allocation2 + $0x40] sm:$0xff]
        %v2157 = vld [vmem:[#allocation2 + $0x48] sm:$0xff]
        %v2158 = vld [vmem:[#allocation2 + $0x58] sm:$0xff]
        %v2159 = vld [vmem:[#allocation2 + $0x60] sm:$0xff]
        %v2160 = vld [vmem:[#allocation2 + $0x68] sm:$0xff]
        %v2161 = vld [vmem:[#allocation2 + $0x70] sm:$0xff]
        %v2162 = vld [vmem:[#allocation2 + $0x80] sm:$0xff]
        %v2163 = vld [vmem:[#allocation2 + $0x88] sm:$0xff]
        %v2164 = vld [vmem:[#allocation2 + $0x90] sm:$0xff]
        %v2165 = vld [vmem:[#allocation2 + $0x98] sm:$0xff]
        %2182 = vrot.lane.b32.xlu0 %v2150, 111
        %v2183 = vpop.permute.xlu0 %2182
        %2184 = vrot.lane.b32.xlu0 %v2151, 111
        %v2185 = vpop.permute.xlu0 %2184
        %2186 = vrot.lane.b32.xlu0 %v2152, 111
        %v2187 = vpop.permute.xlu0 %2186
        %2188 = vrot.lane.b32.xlu0 %v2153, 111
        %v2189 = vpop.permute.xlu0 %2188
        %2190 = vrot.lane.b32.xlu0 %v2154, 111
        %v2191 = vpop.permute.xlu0 %2190
        %2192 = vrot.lane.b32.xlu0 %v2155, 111
        %v2193 = vpop.permute.xlu0 %2192
        %2194 = vrot.lane.b32.xlu0 %v2156, 111
        %v2195 = vpop.permute.xlu0 %2194
        %2196 = vrot.lane.b32.xlu0 %v2157, 111
        %v2197 = vpop.permute.xlu0 %2196
        %2198 = vrot.lane.b32.xlu0 %v2158, 111
        %v2199 = vpop.permute.xlu0 %2198
        %2200 = vrot.lane.b32.xlu0 %v2159, 111
        %v2201 = vpop.permute.xlu0 %2200
        %2202 = vrot.lane.b32.xlu0 %v2160, 111
        %v2203 = vpop.permute.xlu0 %2202
        %2204 = vrot.lane.b32.xlu0 %v2161, 111
        %v2205 = vpop.permute.xlu0 %2204
        %2206 = vrot.lane.b32.xlu0 %v2162, 111
        %v2207 = vpop.permute.xlu0 %2206
        %2208 = vrot.lane.b32.xlu0 %v2163, 111
        %v2209 = vpop.permute.xlu0 %2208
        %2210 = vrot.lane.b32.xlu0 %v2164, 111
        %v2211 = vpop.permute.xlu0 %2210
        %2212 = vrot.lane.b32.xlu0 %v2165, 111
        %v2213 = vpop.permute.xlu0 %2212
        %v2214 = vsel %vm898, %v2183, %v2185
        %v2215 = vsel %vm898, %v2185, %v2187
        %v2216 = vsel %vm898, %v2187, %v2189
        %v2217 = vsel %vm898, %v2191, %v2193
        %v2218 = vsel %vm898, %v2193, %v2195
        %v2219 = vsel %vm898, %v2195, %v2197
        %v2220 = vsel %vm898, %v2199, %v2201
        %v2221 = vsel %vm898, %v2201, %v2203
        %v2222 = vsel %vm898, %v2203, %v2205
        %v2223 = vsel %vm898, %v2207, %v2209
        %v2224 = vsel %vm898, %v2209, %v2211
        %v2225 = vsel %vm898, %v2211, %v2213
        %2238 = vst [vmem:[#allocation3 + $0x240] sm:$0xff] %v2214
        %2239 = vst [vmem:[#allocation3 + $0x248] sm:$0xff] %v2215
        %2240 = vst [vmem:[#allocation3 + $0x250] sm:$0xff] %v2216
        %2241 = vst [vmem:[#allocation3 + $0x258] sm:$0xff] %v2217
        %2242 = vst [vmem:[#allocation3 + $0x260] sm:$0xff] %v2218
        %2243 = vst [vmem:[#allocation3 + $0x268] sm:$0xff] %v2219
        %2244 = vst [vmem:[#allocation3 + $0x270] sm:$0xff] %v2220
        %2245 = vst [vmem:[#allocation3 + $0x278] sm:$0xff] %v2221
        %2246 = vst [vmem:[#allocation3 + $0x280] sm:$0xff] %v2222
        %2247 = vst [vmem:[#allocation3 + $0x288] sm:$0xff] %v2223
        %2248 = vst [vmem:[#allocation3 + $0x290] sm:$0xff] %v2224
        %2249 = vst [vmem:[#allocation3 + $0x298] sm:$0xff] %v2225
        %v2250 = vld [vmem:[#allocation2 + $0x8] sm:$0xff]
        %v2251 = vld [vmem:[#allocation2 + $0x10] sm:$0xff]
        %v2252 = vld [vmem:[#allocation2 + $0x18] sm:$0xff]
        %v2253 = vld [vmem:[#allocation2 + $0x20] sm:$0xff]
        %v2254 = vld [vmem:[#allocation2 + $0x30] sm:$0xff]
        %v2255 = vld [vmem:[#allocation2 + $0x38] sm:$0xff]
        %v2256 = vld [vmem:[#allocation2 + $0x40] sm:$0xff]
        %v2257 = vld [vmem:[#allocation2 + $0x48] sm:$0xff]
        %v2258 = vld [vmem:[#allocation2 + $0x58] sm:$0xff]
        %v2259 = vld [vmem:[#allocation2 + $0x60] sm:$0xff]
        %v2260 = vld [vmem:[#allocation2 + $0x68] sm:$0xff]
        %v2261 = vld [vmem:[#allocation2 + $0x70] sm:$0xff]
        %v2262 = vld [vmem:[#allocation2 + $0x80] sm:$0xff]
        %v2263 = vld [vmem:[#allocation2 + $0x88] sm:$0xff]
        %v2264 = vld [vmem:[#allocation2 + $0x90] sm:$0xff]
        %v2265 = vld [vmem:[#allocation2 + $0x98] sm:$0xff]
        %2282 = vrot.lane.b32.xlu0 %v2250, 110
        %v2283 = vpop.permute.xlu0 %2282
        %2284 = vrot.lane.b32.xlu0 %v2251, 110
        %v2285 = vpop.permute.xlu0 %2284
        %2286 = vrot.lane.b32.xlu0 %v2252, 110
        %v2287 = vpop.permute.xlu0 %2286
        %2288 = vrot.lane.b32.xlu0 %v2253, 110
        %v2289 = vpop.permute.xlu0 %2288
        %2290 = vrot.lane.b32.xlu0 %v2254, 110
        %v2291 = vpop.permute.xlu0 %2290
        %2292 = vrot.lane.b32.xlu0 %v2255, 110
        %v2293 = vpop.permute.xlu0 %2292
        %2294 = vrot.lane.b32.xlu0 %v2256, 110
        %v2295 = vpop.permute.xlu0 %2294
        %2296 = vrot.lane.b32.xlu0 %v2257, 110
        %v2297 = vpop.permute.xlu0 %2296
        %2298 = vrot.lane.b32.xlu0 %v2258, 110
        %v2299 = vpop.permute.xlu0 %2298
        %2300 = vrot.lane.b32.xlu0 %v2259, 110
        %v2301 = vpop.permute.xlu0 %2300
        %2302 = vrot.lane.b32.xlu0 %v2260, 110
        %v2303 = vpop.permute.xlu0 %2302
        %2304 = vrot.lane.b32.xlu0 %v2261, 110
        %v2305 = vpop.permute.xlu0 %2304
        %2306 = vrot.lane.b32.xlu0 %v2262, 110
        %v2307 = vpop.permute.xlu0 %2306
        %2308 = vrot.lane.b32.xlu0 %v2263, 110
        %v2309 = vpop.permute.xlu0 %2308
        %2310 = vrot.lane.b32.xlu0 %v2264, 110
        %v2311 = vpop.permute.xlu0 %2310
        %2312 = vrot.lane.b32.xlu0 %v2265, 110
        %v2313 = vpop.permute.xlu0 %2312
        %v2314 = vsel %vm999, %v2283, %v2285
        %v2315 = vsel %vm999, %v2285, %v2287
        %v2316 = vsel %vm999, %v2287, %v2289
        %v2317 = vsel %vm999, %v2291, %v2293
        %v2318 = vsel %vm999, %v2293, %v2295
        %v2319 = vsel %vm999, %v2295, %v2297
        %v2320 = vsel %vm999, %v2299, %v2301
        %v2321 = vsel %vm999, %v2301, %v2303
        %v2322 = vsel %vm999, %v2303, %v2305
        %v2323 = vsel %vm999, %v2307, %v2309
        %v2324 = vsel %vm999, %v2309, %v2311
        %v2325 = vsel %vm999, %v2311, %v2313
        %2338 = vst [vmem:[#allocation3 + $0x2a0] sm:$0xff] %v2314
        %2339 = vst [vmem:[#allocation3 + $0x2a8] sm:$0xff] %v2315
        %2340 = vst [vmem:[#allocation3 + $0x2b0] sm:$0xff] %v2316
        %2341 = vst [vmem:[#allocation3 + $0x2b8] sm:$0xff] %v2317
        %2342 = vst [vmem:[#allocation3 + $0x2c0] sm:$0xff] %v2318
        %2343 = vst [vmem:[#allocation3 + $0x2c8] sm:$0xff] %v2319
        %2344 = vst [vmem:[#allocation3 + $0x2d0] sm:$0xff] %v2320
        %2345 = vst [vmem:[#allocation3 + $0x2d8] sm:$0xff] %v2321
        %2346 = vst [vmem:[#allocation3 + $0x2e0] sm:$0xff] %v2322
        %2347 = vst [vmem:[#allocation3 + $0x2e8] sm:$0xff] %v2323
        %2348 = vst [vmem:[#allocation3 + $0x2f0] sm:$0xff] %v2324
        %2349 = vst [vmem:[#allocation3 + $0x2f8] sm:$0xff] %v2325
        %v2350 = vld [vmem:[#allocation2 + $0x8] sm:$0xff]
        %v2351 = vld [vmem:[#allocation2 + $0x10] sm:$0xff]
        %v2352 = vld [vmem:[#allocation2 + $0x18] sm:$0xff]
        %v2353 = vld [vmem:[#allocation2 + $0x20] sm:$0xff]
        %v2354 = vld [vmem:[#allocation2 + $0x30] sm:$0xff]
        %v2355 = vld [vmem:[#allocation2 + $0x38] sm:$0xff]
        %v2356 = vld [vmem:[#allocation2 + $0x40] sm:$0xff]
        %v2357 = vld [vmem:[#allocation2 + $0x48] sm:$0xff]
        %v2358 = vld [vmem:[#allocation2 + $0x58] sm:$0xff]
        %v2359 = vld [vmem:[#allocation2 + $0x60] sm:$0xff]
        %v2360 = vld [vmem:[#allocation2 + $0x68] sm:$0xff]
        %v2361 = vld [vmem:[#allocation2 + $0x70] sm:$0xff]
        %v2362 = vld [vmem:[#allocation2 + $0x80] sm:$0xff]
        %v2363 = vld [vmem:[#allocation2 + $0x88] sm:$0xff]
        %v2364 = vld [vmem:[#allocation2 + $0x90] sm:$0xff]
        %v2365 = vld [vmem:[#allocation2 + $0x98] sm:$0xff]
        %2382 = vrot.lane.b32.xlu0 %v2350, 109
        %v2383 = vpop.permute.xlu0 %2382
        %2384 = vrot.lane.b32.xlu0 %v2351, 109
        %v2385 = vpop.permute.xlu0 %2384
        %2386 = vrot.lane.b32.xlu0 %v2352, 109
        %v2387 = vpop.permute.xlu0 %2386
        %2388 = vrot.lane.b32.xlu0 %v2353, 109
        %v2389 = vpop.permute.xlu0 %2388
        %2390 = vrot.lane.b32.xlu0 %v2354, 109
        %v2391 = vpop.permute.xlu0 %2390
        %2392 = vrot.lane.b32.xlu0 %v2355, 109
        %v2393 = vpop.permute.xlu0 %2392
        %2394 = vrot.lane.b32.xlu0 %v2356, 109
        %v2395 = vpop.permute.xlu0 %2394
        %2396 = vrot.lane.b32.xlu0 %v2357, 109
        %v2397 = vpop.permute.xlu0 %2396
        %2398 = vrot.lane.b32.xlu0 %v2358, 109
        %v2399 = vpop.permute.xlu0 %2398
        %2400 = vrot.lane.b32.xlu0 %v2359, 109
        %v2401 = vpop.permute.xlu0 %2400
        %2402 = vrot.lane.b32.xlu0 %v2360, 109
        %v2403 = vpop.permute.xlu0 %2402
        %2404 = vrot.lane.b32.xlu0 %v2361, 109
        %v2405 = vpop.permute.xlu0 %2404
        %2406 = vrot.lane.b32.xlu0 %v2362, 109
        %v2407 = vpop.permute.xlu0 %2406
        %2408 = vrot.lane.b32.xlu0 %v2363, 109
        %v2409 = vpop.permute.xlu0 %2408
        %2410 = vrot.lane.b32.xlu0 %v2364, 109
        %v2411 = vpop.permute.xlu0 %2410
        %2412 = vrot.lane.b32.xlu0 %v2365, 109
        %v2413 = vpop.permute.xlu0 %2412
        %v2414 = vsel %vm1100, %v2383, %v2385
        %v2415 = vsel %vm1100, %v2385, %v2387
        %v2416 = vsel %vm1100, %v2387, %v2389
        %v2417 = vsel %vm1100, %v2391, %v2393
        %v2418 = vsel %vm1100, %v2393, %v2395
        %v2419 = vsel %vm1100, %v2395, %v2397
        %v2420 = vsel %vm1100, %v2399, %v2401
        %v2421 = vsel %vm1100, %v2401, %v2403
        %v2422 = vsel %vm1100, %v2403, %v2405
        %v2423 = vsel %vm1100, %v2407, %v2409
        %v2424 = vsel %vm1100, %v2409, %v2411
        %v2425 = vsel %vm1100, %v2411, %v2413
        %2438 = vst [vmem:[#allocation3 + $0x300] sm:$0xff] %v2414
        %2439 = vst [vmem:[#allocation3 + $0x308] sm:$0xff] %v2415
        %2440 = vst [vmem:[#allocation3 + $0x310] sm:$0xff] %v2416
        %2441 = vst [vmem:[#allocation3 + $0x318] sm:$0xff] %v2417
        %2442 = vst [vmem:[#allocation3 + $0x320] sm:$0xff] %v2418
        %2443 = vst [vmem:[#allocation3 + $0x328] sm:$0xff] %v2419
        %2444 = vst [vmem:[#allocation3 + $0x330] sm:$0xff] %v2420
        %2445 = vst [vmem:[#allocation3 + $0x338] sm:$0xff] %v2421
        %2446 = vst [vmem:[#allocation3 + $0x340] sm:$0xff] %v2422
        %2447 = vst [vmem:[#allocation3 + $0x348] sm:$0xff] %v2423
        %2448 = vst [vmem:[#allocation3 + $0x350] sm:$0xff] %v2424
        %2449 = vst [vmem:[#allocation3 + $0x358] sm:$0xff] %v2425
        %v2450 = vld [vmem:[#allocation7] sm:$0xff]
        %v2451 = vld [vmem:[#allocation7 + $0x8] sm:$0xff]
        %v2452 = vld [vmem:[#allocation7 + $0x10] sm:$0xff]
        %v2453 = vld [vmem:[#allocation7 + $0x18] sm:$0xff]
        %v2454 = vld [vmem:[#allocation7 + $0x20] sm:$0xff]
        %v2455 = vld [vmem:[#allocation7 + $0x28] sm:$0xff]
        %v2456 = vld [vmem:[#allocation7 + $0x30] sm:$0xff]
        %v2457 = vld [vmem:[#allocation7 + $0x38] sm:$0xff]
        %v2458 = vld [vmem:[#allocation7 + $0x40] sm:$0xff]
        %v2459 = vld [vmem:[#allocation7 + $0x48] sm:$0xff]
        %v2460 = vld [vmem:[#allocation7 + $0x50] sm:$0xff]
        %v2461 = vld [vmem:[#allocation7 + $0x58] sm:$0xff]
        %v2462 = vld [vmem:[#allocation3] sm:$0xff]
        %v2463 = vld [vmem:[#allocation3 + $0x8] sm:$0xff]
        %v2464 = vld [vmem:[#allocation3 + $0x10] sm:$0xff]
        %v2465 = vld [vmem:[#allocation3 + $0x18] sm:$0xff]
        %v2466 = vld [vmem:[#allocation3 + $0x20] sm:$0xff]
        %v2467 = vld [vmem:[#allocation3 + $0x28] sm:$0xff]
        %v2468 = vld [vmem:[#allocation3 + $0x30] sm:$0xff]
        %v2469 = vld [vmem:[#allocation3 + $0x38] sm:$0xff]
        %v2470 = vld [vmem:[#allocation3 + $0x40] sm:$0xff]
        %v2471 = vld [vmem:[#allocation3 + $0x48] sm:$0xff]
        %v2472 = vld [vmem:[#allocation3 + $0x50] sm:$0xff]
        %v2473 = vld [vmem:[#allocation3 + $0x58] sm:$0xff]
        %v2474 = vld [vmem:[#allocation3 + $0x60] sm:$0xff]
        %v2475 = vld [vmem:[#allocation3 + $0x68] sm:$0xff]
        %v2476 = vld [vmem:[#allocation3 + $0x70] sm:$0xff]
        %v2477 = vld [vmem:[#allocation3 + $0x78] sm:$0xff]
        %v2478 = vld [vmem:[#allocation3 + $0x80] sm:$0xff]
        %v2479 = vld [vmem:[#allocation3 + $0x88] sm:$0xff]
        %v2480 = vld [vmem:[#allocation3 + $0x90] sm:$0xff]
        %v2481 = vld [vmem:[#allocation3 + $0x98] sm:$0xff]
        %v2482 = vld [vmem:[#allocation3 + $0xa0] sm:$0xff]
        %v2483 = vld [vmem:[#allocation3 + $0xa8] sm:$0xff]
        %v2484 = vld [vmem:[#allocation3 + $0xb0] sm:$0xff]
        %v2485 = vld [vmem:[#allocation3 + $0xb8] sm:$0xff]
        %v2486 = vld [vmem:[#allocation3 + $0xc0] sm:$0xff]
        %v2487 = vld [vmem:[#allocation3 + $0xc8] sm:$0xff]
        %v2488 = vld [vmem:[#allocation3 + $0xd0] sm:$0xff]
        %v2489 = vld [vmem:[#allocation3 + $0xd8] sm:$0xff]
        %v2490 = vld [vmem:[#allocation3 + $0xe0] sm:$0xff]
        %v2491 = vld [vmem:[#allocation3 + $0xe8] sm:$0xff]
        %v2492 = vld [vmem:[#allocation3 + $0xf0] sm:$0xff]
        %v2493 = vld [vmem:[#allocation3 + $0xf8] sm:$0xff]
        %v2494 = vld [vmem:[#allocation3 + $0x100] sm:$0xff]
        %v2495 = vld [vmem:[#allocation3 + $0x108] sm:$0xff]
        %v2496 = vld [vmem:[#allocation3 + $0x110] sm:$0xff]
        %v2497 = vld [vmem:[#allocation3 + $0x118] sm:$0xff]
        %v2498 = vld [vmem:[#allocation3 + $0x120] sm:$0xff]
        %v2499 = vld [vmem:[#allocation3 + $0x128] sm:$0xff]
        %v2500 = vld [vmem:[#allocation3 + $0x130] sm:$0xff]
        %v2501 = vld [vmem:[#allocation3 + $0x138] sm:$0xff]
        %v2502 = vld [vmem:[#allocation3 + $0x140] sm:$0xff]
        %v2503 = vld [vmem:[#allocation3 + $0x148] sm:$0xff]
        %v2504 = vld [vmem:[#allocation3 + $0x150] sm:$0xff]
        %v2505 = vld [vmem:[#allocation3 + $0x158] sm:$0xff]
        %v2506 = vld [vmem:[#allocation3 + $0x160] sm:$0xff]
        %v2507 = vld [vmem:[#allocation3 + $0x168] sm:$0xff]
        %v2508 = vld [vmem:[#allocation3 + $0x170] sm:$0xff]
        %v2509 = vld [vmem:[#allocation3 + $0x178] sm:$0xff]
        %v2510 = vld [vmem:[#allocation3 + $0x180] sm:$0xff]
        %v2511 = vld [vmem:[#allocation3 + $0x188] sm:$0xff]
        %v2512 = vld [vmem:[#allocation3 + $0x190] sm:$0xff]
        %v2513 = vld [vmem:[#allocation3 + $0x198] sm:$0xff]
        %v2514 = vld [vmem:[#allocation3 + $0x1a0] sm:$0xff]
        %v2515 = vld [vmem:[#allocation3 + $0x1a8] sm:$0xff]
        %v2516 = vld [vmem:[#allocation3 + $0x1b0] sm:$0xff]
        %v2517 = vld [vmem:[#allocation3 + $0x1b8] sm:$0xff]
        %v2518 = vld [vmem:[#allocation3 + $0x1c0] sm:$0xff]
        %v2519 = vld [vmem:[#allocation3 + $0x1c8] sm:$0xff]
        %v2520 = vld [vmem:[#allocation3 + $0x1d0] sm:$0xff]
        %v2521 = vld [vmem:[#allocation3 + $0x1d8] sm:$0xff]
        %v2522 = vld [vmem:[#allocation3 + $0x1e0] sm:$0xff]
        %v2523 = vld [vmem:[#allocation3 + $0x1e8] sm:$0xff]
        %v2524 = vld [vmem:[#allocation3 + $0x1f0] sm:$0xff]
        %v2525 = vld [vmem:[#allocation3 + $0x1f8] sm:$0xff]
        %v2526 = vld [vmem:[#allocation3 + $0x200] sm:$0xff]
        %v2527 = vld [vmem:[#allocation3 + $0x208] sm:$0xff]
        %v2528 = vld [vmem:[#allocation3 + $0x210] sm:$0xff]
        %v2529 = vld [vmem:[#allocation3 + $0x218] sm:$0xff]
        %v2530 = vld [vmem:[#allocation3 + $0x220] sm:$0xff]
        %v2531 = vld [vmem:[#allocation3 + $0x228] sm:$0xff]
        %v2532 = vld [vmem:[#allocation3 + $0x230] sm:$0xff]
        %v2533 = vld [vmem:[#allocation3 + $0x238] sm:$0xff]
        %v2534 = vld [vmem:[#allocation3 + $0x240] sm:$0xff]
        %v2535 = vld [vmem:[#allocation3 + $0x248] sm:$0xff]
        %v2536 = vld [vmem:[#allocation3 + $0x250] sm:$0xff]
        %v2537 = vld [vmem:[#allocation3 + $0x258] sm:$0xff]
        %v2538 = vld [vmem:[#allocation3 + $0x260] sm:$0xff]
        %v2539 = vld [vmem:[#allocation3 + $0x268] sm:$0xff]
        %v2540 = vld [vmem:[#allocation3 + $0x270] sm:$0xff]
        %v2541 = vld [vmem:[#allocation3 + $0x278] sm:$0xff]
        %v2542 = vld [vmem:[#allocation3 + $0x280] sm:$0xff]
        %v2543 = vld [vmem:[#allocation3 + $0x288] sm:$0xff]
        %v2544 = vld [vmem:[#allocation3 + $0x290] sm:$0xff]
        %v2545 = vld [vmem:[#allocation3 + $0x298] sm:$0xff]
        %v2546 = vld [vmem:[#allocation3 + $0x2a0] sm:$0xff]
        %v2547 = vld [vmem:[#allocation3 + $0x2a8] sm:$0xff]
        %v2548 = vld [vmem:[#allocation3 + $0x2b0] sm:$0xff]
        %v2549 = vld [vmem:[#allocation3 + $0x2b8] sm:$0xff]
        %v2550 = vld [vmem:[#allocation3 + $0x2c0] sm:$0xff]
        %v2551 = vld [vmem:[#allocation3 + $0x2c8] sm:$0xff]
        %v2552 = vld [vmem:[#allocation3 + $0x2d0] sm:$0xff]
        %v2553 = vld [vmem:[#allocation3 + $0x2d8] sm:$0xff]
        %v2554 = vld [vmem:[#allocation3 + $0x2e0] sm:$0xff]
        %v2555 = vld [vmem:[#allocation3 + $0x2e8] sm:$0xff]
        %v2556 = vld [vmem:[#allocation3 + $0x2f0] sm:$0xff]
        %v2557 = vld [vmem:[#allocation3 + $0x2f8] sm:$0xff]
        %v2558 = vld [vmem:[#allocation3 + $0x300] sm:$0xff]
        %v2559 = vld [vmem:[#allocation3 + $0x308] sm:$0xff]
        %v2560 = vld [vmem:[#allocation3 + $0x310] sm:$0xff]
        %v2561 = vld [vmem:[#allocation3 + $0x318] sm:$0xff]
        %v2562 = vld [vmem:[#allocation3 + $0x320] sm:$0xff]
        %v2563 = vld [vmem:[#allocation3 + $0x328] sm:$0xff]
        %v2564 = vld [vmem:[#allocation3 + $0x330] sm:$0xff]
        %v2565 = vld [vmem:[#allocation3 + $0x338] sm:$0xff]
        %v2566 = vld [vmem:[#allocation3 + $0x340] sm:$0xff]
        %v2567 = vld [vmem:[#allocation3 + $0x348] sm:$0xff]
        %v2568 = vld [vmem:[#allocation3 + $0x350] sm:$0xff]
        %v2569 = vld [vmem:[#allocation3 + $0x358] sm:$0xff]
        %v2570 = vld [vmem:[#allocation3 + $0x360] sm:$0xff]
        %v2571 = vld [vmem:[#allocation3 + $0x368] sm:$0xff]
        %v2572 = vld [vmem:[#allocation3 + $0x370] sm:$0xff]
        %v2573 = vld [vmem:[#allocation3 + $0x378] sm:$0xff]
        %v2574 = vld [vmem:[#allocation3 + $0x380] sm:$0xff]
        %v2575 = vld [vmem:[#allocation3 + $0x388] sm:$0xff]
        %v2576 = vld [vmem:[#allocation3 + $0x390] sm:$0xff]
        %v2577 = vld [vmem:[#allocation3 + $0x398] sm:$0xff]
        %v2578 = vld [vmem:[#allocation3 + $0x3a0] sm:$0xff]
        %v2579 = vld [vmem:[#allocation3 + $0x3a8] sm:$0xff]
        %v2580 = vld [vmem:[#allocation3 + $0x3b0] sm:$0xff]
        %v2581 = vld [vmem:[#allocation3 + $0x3b8] sm:$0xff]
        %v2582 = vld [vmem:[#allocation3 + $0x3c0] sm:$0xff]
        %v2583 = vld [vmem:[#allocation3 + $0x3c8] sm:$0xff]
        %v2584 = vld [vmem:[#allocation3 + $0x3d0] sm:$0xff]
        %v2585 = vld [vmem:[#allocation3 + $0x3d8] sm:$0xff]
        %v2586 = vld [vmem:[#allocation3 + $0x3e0] sm:$0xff]
        %v2587 = vld [vmem:[#allocation3 + $0x3e8] sm:$0xff]
        %v2588 = vld [vmem:[#allocation3 + $0x3f0] sm:$0xff]
        %v2589 = vld [vmem:[#allocation3 + $0x3f8] sm:$0xff]
        %v2590 = vld [vmem:[#allocation3 + $0x400] sm:$0xff]
        %v2591 = vld [vmem:[#allocation3 + $0x408] sm:$0xff]
        %v2592 = vld [vmem:[#allocation3 + $0x410] sm:$0xff]
        %v2593 = vld [vmem:[#allocation3 + $0x418] sm:$0xff]
        %v2594 = vld [vmem:[#allocation3 + $0x420] sm:$0xff]
        %v2595 = vld [vmem:[#allocation3 + $0x428] sm:$0xff]
        %v2596 = vld [vmem:[#allocation3 + $0x430] sm:$0xff]
        %v2597 = vld [vmem:[#allocation3 + $0x438] sm:$0xff]
        %v2598 = vld [vmem:[#allocation3 + $0x440] sm:$0xff]
        %v2599 = vld [vmem:[#allocation3 + $0x448] sm:$0xff]
        %v2600 = vld [vmem:[#allocation3 + $0x450] sm:$0xff]
        %v2601 = vld [vmem:[#allocation3 + $0x458] sm:$0xff]
        %v2602 = vld [vmem:[#allocation3 + $0x460] sm:$0xff]
        %v2603 = vld [vmem:[#allocation3 + $0x468] sm:$0xff]
        %v2604 = vld [vmem:[#allocation3 + $0x470] sm:$0xff]
        %v2605 = vld [vmem:[#allocation3 + $0x478] sm:$0xff]
        %s2606 = scalar_lea.vmem %s209, 96 [#allocation4]
        %v2607 = vld [vmem:[%s2606] sm:$0xff]
        %v2608 = vld [vmem:[%s2606 + $0x8] sm:$0xff]
        %v2609 = vld [vmem:[%s2606 + $0x10] sm:$0xff]
        %v2610 = vld [vmem:[%s2606 + $0x18] sm:$0xff]
        %v2611 = vld [vmem:[%s2606 + $0x20] sm:$0xff]
        %v2612 = vld [vmem:[%s2606 + $0x28] sm:$0xff]
        %v2613 = vld [vmem:[%s2606 + $0x30] sm:$0xff]
        %v2614 = vld [vmem:[%s2606 + $0x38] sm:$0xff]
        %v2615 = vld [vmem:[%s2606 + $0x40] sm:$0xff]
        %v2616 = vld [vmem:[%s2606 + $0x48] sm:$0xff]
        %v2617 = vld [vmem:[%s2606 + $0x50] sm:$0xff]
        %v2618 = vld [vmem:[%s2606 + $0x58] sm:$0xff]
        %2619 = vmatpush.msra.mxu0 %v2507
        %2620 = vmatpush.msra.mxu0 %v2504
        %2621 = vmatpush.msra.mxu0 %v2501
        %2622 = vmatpush.msra.mxu0 %v2498
        %2623 = vmatpush.msra.mxu0 %v2495
        %2624 = vmatpush.msra.mxu0 %v2492
        %2625 = vmatpush.msra.mxu0 %v2489
        %2626 = vmatpush.msra.mxu0 %v2486
        %2627 = vmatpush.msra.mxu0 %v2483
        %2628 = vmatpush.msra.mxu0 %v2480
        %2629 = vmatpush.msra.mxu0 %v2477
        %2630 = vmatpush.msra.mxu0 %v2474
        %2631 = vmatpush.msra.mxu0 %v2471
        %2632 = vmatpush.msra.mxu0 %v2468
        %2633 = vmatpush.msra.mxu0 %v2465
        %2634 = vmatpush.msra.mxu0 %v2462
        %2635 = vmatmul.f32.gmra.mxu0 %v2450
        %v2636 = vpop.f32.mrf.mxu0
        %v2637 = vadd.f32 %v2607, %v2636
        %2638 = vmatmul.f32.gmra.mxu0 %v2453
        %v2639 = vpop.f32.mrf.mxu0
        %v2640 = vadd.f32 %v2610, %v2639
        %2641 = vmatmul.f32.gmra.mxu0 %v2456
        %v2642 = vpop.f32.mrf.mxu0
        %v2643 = vadd.f32 %v2613, %v2642
        %2644 = vmatmul.f32.gmra.mxu0 %v2459
        %v2645 = vpop.f32.mrf.mxu0
        %v2646 = vadd.f32 %v2616, %v2645
        %2647 = vdwg.mxu0
        %2648 = vmatpush.msra.mxu0 %v2555
        %2649 = vmatpush.msra.mxu0 %v2552
        %2650 = vmatpush.msra.mxu0 %v2549
        %2651 = vmatpush.msra.mxu0 %v2546
        %2652 = vmatpush.msra.mxu0 %v2543
        %2653 = vmatpush.msra.mxu0 %v2540
        %2654 = vmatpush.msra.mxu0 %v2537
        %2655 = vmatpush.msra.mxu0 %v2534
        %2656 = vmatpush.msra.mxu0 %v2531
        %2657 = vmatpush.msra.mxu0 %v2528
        %2658 = vmatpush.msra.mxu0 %v2525
        %2659 = vmatpush.msra.mxu0 %v2522
        %2660 = vmatpush.msra.mxu0 %v2519
        %2661 = vmatpush.msra.mxu0 %v2516
        %2662 = vmatpush.msra.mxu0 %v2513
        %2663 = vmatpush.msra.mxu0 %v2510
        %2664 = vmatmul.f32.gmra.mxu0 %v2451
        %v2665 = vpop.f32.mrf.mxu0
        %v2666 = vadd.f32 %v2637, %v2665
        %2667 = vmatmul.f32.gmra.mxu0 %v2454
        %v2668 = vpop.f32.mrf.mxu0
        %v2669 = vadd.f32 %v2640, %v2668
        %2670 = vmatmul.f32.gmra.mxu0 %v2457
        %v2671 = vpop.f32.mrf.mxu0
        %v2672 = vadd.f32 %v2643, %v2671
        %2673 = vmatmul.f32.gmra.mxu0 %v2460
        %v2674 = vpop.f32.mrf.mxu0
        %v2675 = vadd.f32 %v2646, %v2674
        %2676 = vdwg.mxu0
        %2677 = vmatpush.msra.mxu0 %v2603
        %2678 = vmatpush.msra.mxu0 %v2600
        %2679 = vmatpush.msra.mxu0 %v2597
        %2680 = vmatpush.msra.mxu0 %v2594
        %2681 = vmatpush.msra.mxu0 %v2591
        %2682 = vmatpush.msra.mxu0 %v2588
        %2683 = vmatpush.msra.mxu0 %v2585
        %2684 = vmatpush.msra.mxu0 %v2582
        %2685 = vmatpush.msra.mxu0 %v2579
        %2686 = vmatpush.msra.mxu0 %v2576
        %2687 = vmatpush.msra.mxu0 %v2573
        %2688 = vmatpush.msra.mxu0 %v2570
        %2689 = vmatpush.msra.mxu0 %v2567
        %2690 = vmatpush.msra.mxu0 %v2564
        %2691 = vmatpush.msra.mxu0 %v2561
        %2692 = vmatpush.msra.mxu0 %v2558
        %2693 = vmatmul.f32.gmra.mxu0 %v2452
        %v2694 = vpop.f32.mrf.mxu0
        %v2695 = vadd.f32 %v2666, %v2694
        %2696 = vmatmul.f32.gmra.mxu0 %v2455
        %v2697 = vpop.f32.mrf.mxu0
        %v2698 = vadd.f32 %v2669, %v2697
        %2699 = vmatmul.f32.gmra.mxu0 %v2458
        %v2700 = vpop.f32.mrf.mxu0
        %v2701 = vadd.f32 %v2672, %v2700
        %2702 = vmatmul.f32.gmra.mxu0 %v2461
        %v2703 = vpop.f32.mrf.mxu0
        %v2704 = vadd.f32 %v2675, %v2703
        %2705 = vdwg.mxu0
        %2706 = vmatpush.msra.mxu0 %v2508
        %2707 = vmatpush.msra.mxu0 %v2505
        %2708 = vmatpush.msra.mxu0 %v2502
        %2709 = vmatpush.msra.mxu0 %v2499
        %2710 = vmatpush.msra.mxu0 %v2496
        %2711 = vmatpush.msra.mxu0 %v2493
        %2712 = vmatpush.msra.mxu0 %v2490
        %2713 = vmatpush.msra.mxu0 %v2487
        %2714 = vmatpush.msra.mxu0 %v2484
        %2715 = vmatpush.msra.mxu0 %v2481
        %2716 = vmatpush.msra.mxu0 %v2478
        %2717 = vmatpush.msra.mxu0 %v2475
        %2718 = vmatpush.msra.mxu0 %v2472
        %2719 = vmatpush.msra.mxu0 %v2469
        %2720 = vmatpush.msra.mxu0 %v2466
        %2721 = vmatpush.msra.mxu0 %v2463
        %2722 = vmatmul.f32.gmra.mxu0 %v2450
        %v2723 = vpop.f32.mrf.mxu0
        %v2724 = vadd.f32 %v2608, %v2723
        %2725 = vmatmul.f32.gmra.mxu0 %v2453
        %v2726 = vpop.f32.mrf.mxu0
        %v2727 = vadd.f32 %v2611, %v2726
        %2728 = vmatmul.f32.gmra.mxu0 %v2456
        %v2729 = vpop.f32.mrf.mxu0
        %v2730 = vadd.f32 %v2614, %v2729
        %2731 = vmatmul.f32.gmra.mxu0 %v2459
        %v2732 = vpop.f32.mrf.mxu0
        %v2733 = vadd.f32 %v2617, %v2732
        %2734 = vdwg.mxu0
        %2735 = vmatpush.msra.mxu0 %v2556
        %2736 = vmatpush.msra.mxu0 %v2553
        %2737 = vmatpush.msra.mxu0 %v2550
        %2738 = vmatpush.msra.mxu0 %v2547
        %2739 = vmatpush.msra.mxu0 %v2544
        %2740 = vmatpush.msra.mxu0 %v2541
        %2741 = vmatpush.msra.mxu0 %v2538
        %2742 = vmatpush.msra.mxu0 %v2535
        %2743 = vmatpush.msra.mxu0 %v2532
        %2744 = vmatpush.msra.mxu0 %v2529
        %2745 = vmatpush.msra.mxu0 %v2526
        %2746 = vmatpush.msra.mxu0 %v2523
        %2747 = vmatpush.msra.mxu0 %v2520
        %2748 = vmatpush.msra.mxu0 %v2517
        %2749 = vmatpush.msra.mxu0 %v2514
        %2750 = vmatpush.msra.mxu0 %v2511
        %2751 = vmatmul.f32.gmra.mxu0 %v2451
        %v2752 = vpop.f32.mrf.mxu0
        %v2753 = vadd.f32 %v2724, %v2752
        %2754 = vmatmul.f32.gmra.mxu0 %v2454
        %v2755 = vpop.f32.mrf.mxu0
        %v2756 = vadd.f32 %v2727, %v2755
        %2757 = vmatmul.f32.gmra.mxu0 %v2457
        %v2758 = vpop.f32.mrf.mxu0
        %v2759 = vadd.f32 %v2730, %v2758
        %2760 = vmatmul.f32.gmra.mxu0 %v2460
        %v2761 = vpop.f32.mrf.mxu0
        %v2762 = vadd.f32 %v2733, %v2761
        %2763 = vdwg.mxu0
        %2764 = vmatpush.msra.mxu0 %v2604
        %2765 = vmatpush.msra.mxu0 %v2601
        %2766 = vmatpush.msra.mxu0 %v2598
        %2767 = vmatpush.msra.mxu0 %v2595
        %2768 = vmatpush.msra.mxu0 %v2592
        %2769 = vmatpush.msra.mxu0 %v2589
        %2770 = vmatpush.msra.mxu0 %v2586
        %2771 = vmatpush.msra.mxu0 %v2583
        %2772 = vmatpush.msra.mxu0 %v2580
        %2773 = vmatpush.msra.mxu0 %v2577
        %2774 = vmatpush.msra.mxu0 %v2574
        %2775 = vmatpush.msra.mxu0 %v2571
        %2776 = vmatpush.msra.mxu0 %v2568
        %2777 = vmatpush.msra.mxu0 %v2565
        %2778 = vmatpush.msra.mxu0 %v2562
        %2779 = vmatpush.msra.mxu0 %v2559
        %2780 = vmatmul.f32.gmra.mxu0 %v2452
        %v2781 = vpop.f32.mrf.mxu0
        %v2782 = vadd.f32 %v2753, %v2781
        %2783 = vmatmul.f32.gmra.mxu0 %v2455
        %v2784 = vpop.f32.mrf.mxu0
        %v2785 = vadd.f32 %v2756, %v2784
        %2786 = vmatmul.f32.gmra.mxu0 %v2458
        %v2787 = vpop.f32.mrf.mxu0
        %v2788 = vadd.f32 %v2759, %v2787
        %2789 = vmatmul.f32.gmra.mxu0 %v2461
        %v2790 = vpop.f32.mrf.mxu0
        %v2791 = vadd.f32 %v2762, %v2790
        %2792 = vdwg.mxu0
        %2793 = vmatpush.msra.mxu0 %v2509
        %2794 = vmatpush.msra.mxu0 %v2506
        %2795 = vmatpush.msra.mxu0 %v2503
        %2796 = vmatpush.msra.mxu0 %v2500
        %2797 = vmatpush.msra.mxu0 %v2497
        %2798 = vmatpush.msra.mxu0 %v2494
        %2799 = vmatpush.msra.mxu0 %v2491
        %2800 = vmatpush.msra.mxu0 %v2488
        %2801 = vmatpush.msra.mxu0 %v2485
        %2802 = vmatpush.msra.mxu0 %v2482
        %2803 = vmatpush.msra.mxu0 %v2479
        %2804 = vmatpush.msra.mxu0 %v2476
        %2805 = vmatpush.msra.mxu0 %v2473
        %2806 = vmatpush.msra.mxu0 %v2470
        %2807 = vmatpush.msra.mxu0 %v2467
        %2808 = vmatpush.msra.mxu0 %v2464
        %2809 = vmatmul.f32.gmra.mxu0 %v2450
        %v2810 = vpop.f32.mrf.mxu0
        %v2811 = vadd.f32 %v2609, %v2810
        %2812 = vmatmul.f32.gmra.mxu0 %v2453
        %v2813 = vpop.f32.mrf.mxu0
        %v2814 = vadd.f32 %v2612, %v2813
        %2815 = vmatmul.f32.gmra.mxu0 %v2456
        %v2816 = vpop.f32.mrf.mxu0
        %v2817 = vadd.f32 %v2615, %v2816
        %2818 = vmatmul.f32.gmra.mxu0 %v2459
        %v2819 = vpop.f32.mrf.mxu0
        %v2820 = vadd.f32 %v2618, %v2819
        %2821 = vdwg.mxu0
        %2822 = vmatpush.msra.mxu0 %v2557
        %2823 = vmatpush.msra.mxu0 %v2554
        %2824 = vmatpush.msra.mxu0 %v2551
        %2825 = vmatpush.msra.mxu0 %v2548
        %2826 = vmatpush.msra.mxu0 %v2545
        %2827 = vmatpush.msra.mxu0 %v2542
        %2828 = vmatpush.msra.mxu0 %v2539
        %2829 = vmatpush.msra.mxu0 %v2536
        %2830 = vmatpush.msra.mxu0 %v2533
        %2831 = vmatpush.msra.mxu0 %v2530
        %2832 = vmatpush.msra.mxu0 %v2527
        %2833 = vmatpush.msra.mxu0 %v2524
        %2834 = vmatpush.msra.mxu0 %v2521
        %2835 = vmatpush.msra.mxu0 %v2518
        %2836 = vmatpush.msra.mxu0 %v2515
        %2837 = vmatpush.msra.mxu0 %v2512
        %2838 = vmatmul.f32.gmra.mxu0 %v2451
        %v2839 = vpop.f32.mrf.mxu0
        %v2840 = vadd.f32 %v2811, %v2839
        %2841 = vmatmul.f32.gmra.mxu0 %v2454
        %v2842 = vpop.f32.mrf.mxu0
        %v2843 = vadd.f32 %v2814, %v2842
        %2844 = vmatmul.f32.gmra.mxu0 %v2457
        %v2845 = vpop.f32.mrf.mxu0
        %v2846 = vadd.f32 %v2817, %v2845
        %2847 = vmatmul.f32.gmra.mxu0 %v2460
        %v2848 = vpop.f32.mrf.mxu0
        %v2849 = vadd.f32 %v2820, %v2848
        %2850 = vdwg.mxu0
        %2851 = vmatpush.msra.mxu0 %v2605
        %2852 = vmatpush.msra.mxu0 %v2602
        %2853 = vmatpush.msra.mxu0 %v2599
        %2854 = vmatpush.msra.mxu0 %v2596
        %2855 = vmatpush.msra.mxu0 %v2593
        %2856 = vmatpush.msra.mxu0 %v2590
        %2857 = vmatpush.msra.mxu0 %v2587
        %2858 = vmatpush.msra.mxu0 %v2584
        %2859 = vmatpush.msra.mxu0 %v2581
        %2860 = vmatpush.msra.mxu0 %v2578
        %2861 = vmatpush.msra.mxu0 %v2575
        %2862 = vmatpush.msra.mxu0 %v2572
        %2863 = vmatpush.msra.mxu0 %v2569
        %2864 = vmatpush.msra.mxu0 %v2566
        %2865 = vmatpush.msra.mxu0 %v2563
        %2866 = vmatpush.msra.mxu0 %v2560
        %2867 = vmatmul.f32.gmra.mxu0 %v2452
        %v2868 = vpop.f32.mrf.mxu0
        %v2869 = vadd.f32 %v2840, %v2868
        %2870 = vmatmul.f32.gmra.mxu0 %v2455
        %v2871 = vpop.f32.mrf.mxu0
        %v2872 = vadd.f32 %v2843, %v2871
        %2873 = vmatmul.f32.gmra.mxu0 %v2458
        %v2874 = vpop.f32.mrf.mxu0
        %v2875 = vadd.f32 %v2846, %v2874
        %2876 = vmatmul.f32.gmra.mxu0 %v2461
        %v2877 = vpop.f32.mrf.mxu0
        %v2878 = vadd.f32 %v2849, %v2877
        %2879 = vdwg.mxu0
        %v2880 = vtanh.pop %v2695
        %v2881 = vtanh.pop %v2782
        %v2882 = vtanh.pop %v2869
        %v2883 = vtanh.pop %v2698
        %v2884 = vtanh.pop %v2785
        %v2885 = vtanh.pop %v2872
        %v2886 = vtanh.pop %v2701
        %v2887 = vtanh.pop %v2788
        %v2888 = vtanh.pop %v2875
        %v2889 = vtanh.pop %v2704
        %v2890 = vtanh.pop %v2791
        %v2891 = vtanh.pop %v2878
        %v2892 = vld [vmem:[#allocation9] sm:$0xff]
        %v2893 = vld [vmem:[#allocation9 + $0x8] sm:$0xff]
        %v2894 = vld [vmem:[#allocation9 + $0x10] sm:$0xff]
        %v2895 = vld [vmem:[#allocation9 + $0x18] sm:$0xff]
        %v2896 = vld [vmem:[#allocation9 + $0x20] sm:$0xff]
        %v2897 = vld [vmem:[#allocation9 + $0x28] sm:$0xff]
        %v2898 = vld [vmem:[#allocation9 + $0x30] sm:$0xff]
        %v2899 = vld [vmem:[#allocation9 + $0x38] sm:$0xff]
        %v2900 = vld [vmem:[#allocation9 + $0x40] sm:$0xff]
        %v2901 = vld [vmem:[#allocation9 + $0x48] sm:$0xff]
        %v2902 = vld [vmem:[#allocation9 + $0x50] sm:$0xff]
        %v2903 = vld [vmem:[#allocation9 + $0x58] sm:$0xff]
        %v2904 = vmul.f32 %v2880, %v2892
        %v2905 = vmul.f32 %v2881, %v2893
        %v2906 = vmul.f32 %v2882, %v2894
        %v2907 = vmul.f32 %v2883, %v2895
        %v2908 = vmul.f32 %v2884, %v2896
        %v2909 = vmul.f32 %v2885, %v2897
        %v2910 = vmul.f32 %v2886, %v2898
        %v2911 = vmul.f32 %v2887, %v2899
        %v2912 = vmul.f32 %v2888, %v2900
        %v2913 = vmul.f32 %v2889, %v2901
        %v2914 = vmul.f32 %v2890, %v2902
        %v2915 = vmul.f32 %v2891, %v2903
        %s2916 = scalar_lea.vmem %s242, 96 [#allocation10]
        %2917 = vst [vmem:[%s2916] sm:$0xff] %v2904
        %2918 = vst [vmem:[%s2916 + $0x8] sm:$0xff] %v2905
        %2919 = vst [vmem:[%s2916 + $0x10] sm:$0xff] %v2906
        %2920 = vst [vmem:[%s2916 + $0x18] sm:$0xff] %v2907
        %2921 = vst [vmem:[%s2916 + $0x20] sm:$0xff] %v2908
        %2922 = vst [vmem:[%s2916 + $0x28] sm:$0xff] %v2909
        %2923 = vst [vmem:[%s2916 + $0x30] sm:$0xff] %v2910
        %2924 = vst [vmem:[%s2916 + $0x38] sm:$0xff] %v2911
        %2925 = vst [vmem:[%s2916 + $0x40] sm:$0xff] %v2912
        %2926 = vst [vmem:[%s2916 + $0x48] sm:$0xff] %v2913
        %2927 = vst [vmem:[%s2916 + $0x50] sm:$0xff] %v2914
        %2928 = vst [vmem:[%s2916 + $0x58] sm:$0xff] %v2915
        %2929 = vst [vmem:[#allocation2 + $0x8] sm:$0xff] %v2904
        %2930 = vst [vmem:[#allocation2 + $0x10] sm:$0xff] %v2905
        %2931 = vst [vmem:[#allocation2 + $0x18] sm:$0xff] %v2906
        %2932 = vst [vmem:[#allocation2 + $0x30] sm:$0xff] %v2907
        %2933 = vst [vmem:[#allocation2 + $0x38] sm:$0xff] %v2908
        %2934 = vst [vmem:[#allocation2 + $0x40] sm:$0xff] %v2909
        %2935 = vst [vmem:[#allocation2 + $0x58] sm:$0xff] %v2910
        %2936 = vst [vmem:[#allocation2 + $0x60] sm:$0xff] %v2911
        %2937 = vst [vmem:[#allocation2 + $0x68] sm:$0xff] %v2912
        %2938 = vst [vmem:[#allocation2 + $0x80] sm:$0xff] %v2913
        %2939 = vst [vmem:[#allocation2 + $0x88] sm:$0xff] %v2914
        %2940 = vst [vmem:[#allocation2 + $0x90] sm:$0xff] %v2915
        %v2941 = vld [vmem:[#allocation2] sm:$0xff]
        %v2942 = vld [vmem:[#allocation2 + $0x8] sm:$0xff]
        %v2943 = vld [vmem:[#allocation2 + $0x10] sm:$0xff]
        %v2944 = vld [vmem:[#allocation2 + $0x18] sm:$0xff]
        %v2945 = vld [vmem:[#allocation2 + $0x28] sm:$0xff]
        %v2946 = vld [vmem:[#allocation2 + $0x30] sm:$0xff]
        %v2947 = vld [vmem:[#allocation2 + $0x38] sm:$0xff]
        %v2948 = vld [vmem:[#allocation2 + $0x40] sm:$0xff]
        %v2949 = vld [vmem:[#allocation2 + $0x50] sm:$0xff]
        %v2950 = vld [vmem:[#allocation2 + $0x58] sm:$0xff]
        %v2951 = vld [vmem:[#allocation2 + $0x60] sm:$0xff]
        %v2952 = vld [vmem:[#allocation2 + $0x68] sm:$0xff]
        %v2953 = vld [vmem:[#allocation2 + $0x78] sm:$0xff]
        %v2954 = vld [vmem:[#allocation2 + $0x80] sm:$0xff]
        %v2955 = vld [vmem:[#allocation2 + $0x88] sm:$0xff]
        %v2956 = vld [vmem:[#allocation2 + $0x90] sm:$0xff]
        %2973 = vrot.lane.b32.xlu0 %v2941, 19
        %v2974 = vpop.permute.xlu0 %2973
        %2975 = vrot.lane.b32.xlu0 %v2942, 19
        %v2976 = vpop.permute.xlu0 %2975
        %2977 = vrot.lane.b32.xlu0 %v2943, 19
        %v2978 = vpop.permute.xlu0 %2977
        %2979 = vrot.lane.b32.xlu0 %v2944, 19
        %v2980 = vpop.permute.xlu0 %2979
        %2981 = vrot.lane.b32.xlu0 %v2945, 19
        %v2982 = vpop.permute.xlu0 %2981
        %2983 = vrot.lane.b32.xlu0 %v2946, 19
        %v2984 = vpop.permute.xlu0 %2983
        %2985 = vrot.lane.b32.xlu0 %v2947, 19
        %v2986 = vpop.permute.xlu0 %2985
        %2987 = vrot.lane.b32.xlu0 %v2948, 19
        %v2988 = vpop.permute.xlu0 %2987
        %2989 = vrot.lane.b32.xlu0 %v2949, 19
        %v2990 = vpop.permute.xlu0 %2989
        %2991 = vrot.lane.b32.xlu0 %v2950, 19
        %v2992 = vpop.permute.xlu0 %2991
        %2993 = vrot.lane.b32.xlu0 %v2951, 19
        %v2994 = vpop.permute.xlu0 %2993
        %2995 = vrot.lane.b32.xlu0 %v2952, 19
        %v2996 = vpop.permute.xlu0 %2995
        %2997 = vrot.lane.b32.xlu0 %v2953, 19
        %v2998 = vpop.permute.xlu0 %2997
        %2999 = vrot.lane.b32.xlu0 %v2954, 19
        %v3000 = vpop.permute.xlu0 %2999
        %3001 = vrot.lane.b32.xlu0 %v2955, 19
        %v3002 = vpop.permute.xlu0 %3001
        %3003 = vrot.lane.b32.xlu0 %v2956, 19
        %v3004 = vpop.permute.xlu0 %3003
        %v3005 = vsel %vm369, %v2974, %v2976
        %v3006 = vsel %vm369, %v2976, %v2978
        %v3007 = vsel %vm369, %v2978, %v2980
        %v3008 = vsel %vm369, %v2982, %v2984
        %v3009 = vsel %vm369, %v2984, %v2986
        %v3010 = vsel %vm369, %v2986, %v2988
        %v3011 = vsel %vm369, %v2990, %v2992
        %v3012 = vsel %vm369, %v2992, %v2994
        %v3013 = vsel %vm369, %v2994, %v2996
        %v3014 = vsel %vm369, %v2998, %v3000
        %v3015 = vsel %vm369, %v3000, %v3002
        %v3016 = vsel %vm369, %v3002, %v3004
        %3029 = vst [vmem:[#allocation3] sm:$0xff] %v3005
        %3030 = vst [vmem:[#allocation3 + $0x8] sm:$0xff] %v3006
        %3031 = vst [vmem:[#allocation3 + $0x10] sm:$0xff] %v3007
        %3032 = vst [vmem:[#allocation3 + $0x18] sm:$0xff] %v3008
        %3033 = vst [vmem:[#allocation3 + $0x20] sm:$0xff] %v3009
        %3034 = vst [vmem:[#allocation3 + $0x28] sm:$0xff] %v3010
        %3035 = vst [vmem:[#allocation3 + $0x30] sm:$0xff] %v3011
        %3036 = vst [vmem:[#allocation3 + $0x38] sm:$0xff] %v3012
        %3037 = vst [vmem:[#allocation3 + $0x40] sm:$0xff] %v3013
        %3038 = vst [vmem:[#allocation3 + $0x48] sm:$0xff] %v3014
        %3039 = vst [vmem:[#allocation3 + $0x50] sm:$0xff] %v3015
        %3040 = vst [vmem:[#allocation3 + $0x58] sm:$0xff] %v3016
        %v3041 = vld [vmem:[#allocation2] sm:$0xff]
        %v3042 = vld [vmem:[#allocation2 + $0x8] sm:$0xff]
        %v3043 = vld [vmem:[#allocation2 + $0x10] sm:$0xff]
        %v3044 = vld [vmem:[#allocation2 + $0x18] sm:$0xff]
        %v3045 = vld [vmem:[#allocation2 + $0x28] sm:$0xff]
        %v3046 = vld [vmem:[#allocation2 + $0x30] sm:$0xff]
        %v3047 = vld [vmem:[#allocation2 + $0x38] sm:$0xff]
        %v3048 = vld [vmem:[#allocation2 + $0x40] sm:$0xff]
        %v3049 = vld [vmem:[#allocation2 + $0x50] sm:$0xff]
        %v3050 = vld [vmem:[#allocation2 + $0x58] sm:$0xff]
        %v3051 = vld [vmem:[#allocation2 + $0x60] sm:$0xff]
        %v3052 = vld [vmem:[#allocation2 + $0x68] sm:$0xff]
        %v3053 = vld [vmem:[#allocation2 + $0x78] sm:$0xff]
        %v3054 = vld [vmem:[#allocation2 + $0x80] sm:$0xff]
        %v3055 = vld [vmem:[#allocation2 + $0x88] sm:$0xff]
        %v3056 = vld [vmem:[#allocation2 + $0x90] sm:$0xff]
        %3073 = vrot.lane.b32.xlu0 %v3041, 18
        %v3074 = vpop.permute.xlu0 %3073
        %3075 = vrot.lane.b32.xlu0 %v3042, 18
        %v3076 = vpop.permute.xlu0 %3075
        %3077 = vrot.lane.b32.xlu0 %v3043, 18
        %v3078 = vpop.permute.xlu0 %3077
        %3079 = vrot.lane.b32.xlu0 %v3044, 18
        %v3080 = vpop.permute.xlu0 %3079
        %3081 = vrot.lane.b32.xlu0 %v3045, 18
        %v3082 = vpop.permute.xlu0 %3081
        %3083 = vrot.lane.b32.xlu0 %v3046, 18
        %v3084 = vpop.permute.xlu0 %3083
        %3085 = vrot.lane.b32.xlu0 %v3047, 18
        %v3086 = vpop.permute.xlu0 %3085
        %3087 = vrot.lane.b32.xlu0 %v3048, 18
        %v3088 = vpop.permute.xlu0 %3087
        %3089 = vrot.lane.b32.xlu0 %v3049, 18
        %v3090 = vpop.permute.xlu0 %3089
        %3091 = vrot.lane.b32.xlu0 %v3050, 18
        %v3092 = vpop.permute.xlu0 %3091
        %3093 = vrot.lane.b32.xlu0 %v3051, 18
        %v3094 = vpop.permute.xlu0 %3093
        %3095 = vrot.lane.b32.xlu0 %v3052, 18
        %v3096 = vpop.permute.xlu0 %3095
        %3097 = vrot.lane.b32.xlu0 %v3053, 18
        %v3098 = vpop.permute.xlu0 %3097
        %3099 = vrot.lane.b32.xlu0 %v3054, 18
        %v3100 = vpop.permute.xlu0 %3099
        %3101 = vrot.lane.b32.xlu0 %v3055, 18
        %v3102 = vpop.permute.xlu0 %3101
        %3103 = vrot.lane.b32.xlu0 %v3056, 18
        %v3104 = vpop.permute.xlu0 %3103
        %v3105 = vsel %vm470, %v3074, %v3076
        %v3106 = vsel %vm470, %v3076, %v3078
        %v3107 = vsel %vm470, %v3078, %v3080
        %v3108 = vsel %vm470, %v3082, %v3084
        %v3109 = vsel %vm470, %v3084, %v3086
        %v3110 = vsel %vm470, %v3086, %v3088
        %v3111 = vsel %vm470, %v3090, %v3092
        %v3112 = vsel %vm470, %v3092, %v3094
        %v3113 = vsel %vm470, %v3094, %v3096
        %v3114 = vsel %vm470, %v3098, %v3100
        %v3115 = vsel %vm470, %v3100, %v3102
        %v3116 = vsel %vm470, %v3102, %v3104
        %3129 = vst [vmem:[#allocation3 + $0x60] sm:$0xff] %v3105
        %3130 = vst [vmem:[#allocation3 + $0x68] sm:$0xff] %v3106
        %3131 = vst [vmem:[#allocation3 + $0x70] sm:$0xff] %v3107
        %3132 = vst [vmem:[#allocation3 + $0x78] sm:$0xff] %v3108
        %3133 = vst [vmem:[#allocation3 + $0x80] sm:$0xff] %v3109
        %3134 = vst [vmem:[#allocation3 + $0x88] sm:$0xff] %v3110
        %3135 = vst [vmem:[#allocation3 + $0x90] sm:$0xff] %v3111
        %3136 = vst [vmem:[#allocation3 + $0x98] sm:$0xff] %v3112
        %3137 = vst [vmem:[#allocation3 + $0xa0] sm:$0xff] %v3113
        %3138 = vst [vmem:[#allocation3 + $0xa8] sm:$0xff] %v3114
        %3139 = vst [vmem:[#allocation3 + $0xb0] sm:$0xff] %v3115
        %3140 = vst [vmem:[#allocation3 + $0xb8] sm:$0xff] %v3116
        %v3141 = vld [vmem:[#allocation2] sm:$0xff]
        %v3142 = vld [vmem:[#allocation2 + $0x8] sm:$0xff]
        %v3143 = vld [vmem:[#allocation2 + $0x10] sm:$0xff]
        %v3144 = vld [vmem:[#allocation2 + $0x18] sm:$0xff]
        %v3145 = vld [vmem:[#allocation2 + $0x28] sm:$0xff]
        %v3146 = vld [vmem:[#allocation2 + $0x30] sm:$0xff]
        %v3147 = vld [vmem:[#allocation2 + $0x38] sm:$0xff]
        %v3148 = vld [vmem:[#allocation2 + $0x40] sm:$0xff]
        %v3149 = vld [vmem:[#allocation2 + $0x50] sm:$0xff]
        %v3150 = vld [vmem:[#allocation2 + $0x58] sm:$0xff]
        %v3151 = vld [vmem:[#allocation2 + $0x60] sm:$0xff]
        %v3152 = vld [vmem:[#allocation2 + $0x68] sm:$0xff]
        %v3153 = vld [vmem:[#allocation2 + $0x78] sm:$0xff]
        %v3154 = vld [vmem:[#allocation2 + $0x80] sm:$0xff]
        %v3155 = vld [vmem:[#allocation2 + $0x88] sm:$0xff]
        %v3156 = vld [vmem:[#allocation2 + $0x90] sm:$0xff]
        %3173 = vrot.lane.b32.xlu0 %v3141, 17
        %v3174 = vpop.permute.xlu0 %3173
        %3175 = vrot.lane.b32.xlu0 %v3142, 17
        %v3176 = vpop.permute.xlu0 %3175
        %3177 = vrot.lane.b32.xlu0 %v3143, 17
        %v3178 = vpop.permute.xlu0 %3177
        %3179 = vrot.lane.b32.xlu0 %v3144, 17
        %v3180 = vpop.permute.xlu0 %3179
        %3181 = vrot.lane.b32.xlu0 %v3145, 17
        %v3182 = vpop.permute.xlu0 %3181
        %3183 = vrot.lane.b32.xlu0 %v3146, 17
        %v3184 = vpop.permute.xlu0 %3183
        %3185 = vrot.lane.b32.xlu0 %v3147, 17
        %v3186 = vpop.permute.xlu0 %3185
        %3187 = vrot.lane.b32.xlu0 %v3148, 17
        %v3188 = vpop.permute.xlu0 %3187
        %3189 = vrot.lane.b32.xlu0 %v3149, 17
        %v3190 = vpop.permute.xlu0 %3189
        %3191 = vrot.lane.b32.xlu0 %v3150, 17
        %v3192 = vpop.permute.xlu0 %3191
        %3193 = vrot.lane.b32.xlu0 %v3151, 17
        %v3194 = vpop.permute.xlu0 %3193
        %3195 = vrot.lane.b32.xlu0 %v3152, 17
        %v3196 = vpop.permute.xlu0 %3195
        %3197 = vrot.lane.b32.xlu0 %v3153, 17
        %v3198 = vpop.permute.xlu0 %3197
        %3199 = vrot.lane.b32.xlu0 %v3154, 17
        %v3200 = vpop.permute.xlu0 %3199
        %3201 = vrot.lane.b32.xlu0 %v3155, 17
        %v3202 = vpop.permute.xlu0 %3201
        %3203 = vrot.lane.b32.xlu0 %v3156, 17
        %v3204 = vpop.permute.xlu0 %3203
        %v3205 = vsel %vm571, %v3174, %v3176
        %v3206 = vsel %vm571, %v3176, %v3178
        %v3207 = vsel %vm571, %v3178, %v3180
        %v3208 = vsel %vm571, %v3182, %v3184
        %v3209 = vsel %vm571, %v3184, %v3186
        %v3210 = vsel %vm571, %v3186, %v3188
        %v3211 = vsel %vm571, %v3190, %v3192
        %v3212 = vsel %vm571, %v3192, %v3194
        %v3213 = vsel %vm571, %v3194, %v3196
        %v3214 = vsel %vm571, %v3198, %v3200
        %v3215 = vsel %vm571, %v3200, %v3202
        %v3216 = vsel %vm571, %v3202, %v3204
        %3229 = vst [vmem:[#allocation3 + $0xc0] sm:$0xff] %v3205
        %3230 = vst [vmem:[#allocation3 + $0xc8] sm:$0xff] %v3206
        %3231 = vst [vmem:[#allocation3 + $0xd0] sm:$0xff] %v3207
        %3232 = vst [vmem:[#allocation3 + $0xd8] sm:$0xff] %v3208
        %3233 = vst [vmem:[#allocation3 + $0xe0] sm:$0xff] %v3209
        %3234 = vst [vmem:[#allocation3 + $0xe8] sm:$0xff] %v3210
        %3235 = vst [vmem:[#allocation3 + $0xf0] sm:$0xff] %v3211
        %3236 = vst [vmem:[#allocation3 + $0xf8] sm:$0xff] %v3212
        %3237 = vst [vmem:[#allocation3 + $0x100] sm:$0xff] %v3213
        %3238 = vst [vmem:[#allocation3 + $0x108] sm:$0xff] %v3214
        %3239 = vst [vmem:[#allocation3 + $0x110] sm:$0xff] %v3215
        %3240 = vst [vmem:[#allocation3 + $0x118] sm:$0xff] %v3216
        %v3241 = vld [vmem:[#allocation2] sm:$0xff]
        %v3242 = vld [vmem:[#allocation2 + $0x8] sm:$0xff]
        %v3243 = vld [vmem:[#allocation2 + $0x10] sm:$0xff]
        %v3244 = vld [vmem:[#allocation2 + $0x18] sm:$0xff]
        %v3245 = vld [vmem:[#allocation2 + $0x28] sm:$0xff]
        %v3246 = vld [vmem:[#allocation2 + $0x30] sm:$0xff]
        %v3247 = vld [vmem:[#allocation2 + $0x38] sm:$0xff]
        %v3248 = vld [vmem:[#allocation2 + $0x40] sm:$0xff]
        %v3249 = vld [vmem:[#allocation2 + $0x50] sm:$0xff]
        %v3250 = vld [vmem:[#allocation2 + $0x58] sm:$0xff]
        %v3251 = vld [vmem:[#allocation2 + $0x60] sm:$0xff]
        %v3252 = vld [vmem:[#allocation2 + $0x68] sm:$0xff]
        %v3253 = vld [vmem:[#allocation2 + $0x78] sm:$0xff]
        %v3254 = vld [vmem:[#allocation2 + $0x80] sm:$0xff]
        %v3255 = vld [vmem:[#allocation2 + $0x88] sm:$0xff]
        %v3256 = vld [vmem:[#allocation2 + $0x90] sm:$0xff]
        %3273 = vrot.lane.b32.xlu0 %v3241, 1
        %v3274 = vpop.permute.xlu0 %3273
        %3275 = vrot.lane.b32.xlu0 %v3242, 1
        %v3276 = vpop.permute.xlu0 %3275
        %3277 = vrot.lane.b32.xlu0 %v3243, 1
        %v3278 = vpop.permute.xlu0 %3277
        %3279 = vrot.lane.b32.xlu0 %v3244, 1
        %v3280 = vpop.permute.xlu0 %3279
        %3281 = vrot.lane.b32.xlu0 %v3245, 1
        %v3282 = vpop.permute.xlu0 %3281
        %3283 = vrot.lane.b32.xlu0 %v3246, 1
        %v3284 = vpop.permute.xlu0 %3283
        %3285 = vrot.lane.b32.xlu0 %v3247, 1
        %v3286 = vpop.permute.xlu0 %3285
        %3287 = vrot.lane.b32.xlu0 %v3248, 1
        %v3288 = vpop.permute.xlu0 %3287
        %3289 = vrot.lane.b32.xlu0 %v3249, 1
        %v3290 = vpop.permute.xlu0 %3289
        %3291 = vrot.lane.b32.xlu0 %v3250, 1
        %v3292 = vpop.permute.xlu0 %3291
        %3293 = vrot.lane.b32.xlu0 %v3251, 1
        %v3294 = vpop.permute.xlu0 %3293
        %3295 = vrot.lane.b32.xlu0 %v3252, 1
        %v3296 = vpop.permute.xlu0 %3295
        %3297 = vrot.lane.b32.xlu0 %v3253, 1
        %v3298 = vpop.permute.xlu0 %3297
        %3299 = vrot.lane.b32.xlu0 %v3254, 1
        %v3300 = vpop.permute.xlu0 %3299
        %3301 = vrot.lane.b32.xlu0 %v3255, 1
        %v3302 = vpop.permute.xlu0 %3301
        %3303 = vrot.lane.b32.xlu0 %v3256, 1
        %v3304 = vpop.permute.xlu0 %3303
        %v3305 = vsel %vm672, %v3274, %v3276
        %v3306 = vsel %vm672, %v3276, %v3278
        %v3307 = vsel %vm672, %v3278, %v3280
        %v3308 = vsel %vm672, %v3282, %v3284
        %v3309 = vsel %vm672, %v3284, %v3286
        %v3310 = vsel %vm672, %v3286, %v3288
        %v3311 = vsel %vm672, %v3290, %v3292
        %v3312 = vsel %vm672, %v3292, %v3294
        %v3313 = vsel %vm672, %v3294, %v3296
        %v3314 = vsel %vm672, %v3298, %v3300
        %v3315 = vsel %vm672, %v3300, %v3302
        %v3316 = vsel %vm672, %v3302, %v3304
        %3329 = vst [vmem:[#allocation3 + $0x120] sm:$0xff] %v3305
        %3330 = vst [vmem:[#allocation3 + $0x128] sm:$0xff] %v3306
        %3331 = vst [vmem:[#allocation3 + $0x130] sm:$0xff] %v3307
        %3332 = vst [vmem:[#allocation3 + $0x138] sm:$0xff] %v3308
        %3333 = vst [vmem:[#allocation3 + $0x140] sm:$0xff] %v3309
        %3334 = vst [vmem:[#allocation3 + $0x148] sm:$0xff] %v3310
        %3335 = vst [vmem:[#allocation3 + $0x150] sm:$0xff] %v3311
        %3336 = vst [vmem:[#allocation3 + $0x158] sm:$0xff] %v3312
        %3337 = vst [vmem:[#allocation3 + $0x160] sm:$0xff] %v3313
        %3338 = vst [vmem:[#allocation3 + $0x168] sm:$0xff] %v3314
        %3339 = vst [vmem:[#allocation3 + $0x170] sm:$0xff] %v3315
        %3340 = vst [vmem:[#allocation3 + $0x178] sm:$0xff] %v3316
        %v3341 = vld [vmem:[#allocation2 + $0x8] sm:$0xff]
        %v3342 = vld [vmem:[#allocation2 + $0x10] sm:$0xff]
        %v3343 = vld [vmem:[#allocation2 + $0x18] sm:$0xff]
        %v3344 = vld [vmem:[#allocation2 + $0x30] sm:$0xff]
        %v3345 = vld [vmem:[#allocation2 + $0x38] sm:$0xff]
        %v3346 = vld [vmem:[#allocation2 + $0x40] sm:$0xff]
        %v3347 = vld [vmem:[#allocation2 + $0x58] sm:$0xff]
        %v3348 = vld [vmem:[#allocation2 + $0x60] sm:$0xff]
        %v3349 = vld [vmem:[#allocation2 + $0x68] sm:$0xff]
        %v3350 = vld [vmem:[#allocation2 + $0x80] sm:$0xff]
        %v3351 = vld [vmem:[#allocation2 + $0x88] sm:$0xff]
        %v3352 = vld [vmem:[#allocation2 + $0x90] sm:$0xff]
        %3353 = vst [vmem:[#allocation3 + $0x180] sm:$0xff] %v3341
        %3354 = vst [vmem:[#allocation3 + $0x188] sm:$0xff] %v3342
        %3355 = vst [vmem:[#allocation3 + $0x190] sm:$0xff] %v3343
        %3356 = vst [vmem:[#allocation3 + $0x198] sm:$0xff] %v3344
        %3357 = vst [vmem:[#allocation3 + $0x1a0] sm:$0xff] %v3345
        %3358 = vst [vmem:[#allocation3 + $0x1a8] sm:$0xff] %v3346
        %3359 = vst [vmem:[#allocation3 + $0x1b0] sm:$0xff] %v3347
        %3360 = vst [vmem:[#allocation3 + $0x1b8] sm:$0xff] %v3348
        %3361 = vst [vmem:[#allocation3 + $0x1c0] sm:$0xff] %v3349
        %3362 = vst [vmem:[#allocation3 + $0x1c8] sm:$0xff] %v3350
        %3363 = vst [vmem:[#allocation3 + $0x1d0] sm:$0xff] %v3351
        %3364 = vst [vmem:[#allocation3 + $0x1d8] sm:$0xff] %v3352
        %v3365 = vld [vmem:[#allocation2 + $0x8] sm:$0xff]
        %v3366 = vld [vmem:[#allocation2 + $0x10] sm:$0xff]
        %v3367 = vld [vmem:[#allocation2 + $0x18] sm:$0xff]
        %v3368 = vld [vmem:[#allocation2 + $0x20] sm:$0xff]
        %v3369 = vld [vmem:[#allocation2 + $0x30] sm:$0xff]
        %v3370 = vld [vmem:[#allocation2 + $0x38] sm:$0xff]
        %v3371 = vld [vmem:[#allocation2 + $0x40] sm:$0xff]
        %v3372 = vld [vmem:[#allocation2 + $0x48] sm:$0xff]
        %v3373 = vld [vmem:[#allocation2 + $0x58] sm:$0xff]
        %v3374 = vld [vmem:[#allocation2 + $0x60] sm:$0xff]
        %v3375 = vld [vmem:[#allocation2 + $0x68] sm:$0xff]
        %v3376 = vld [vmem:[#allocation2 + $0x70] sm:$0xff]
        %v3377 = vld [vmem:[#allocation2 + $0x80] sm:$0xff]
        %v3378 = vld [vmem:[#allocation2 + $0x88] sm:$0xff]
        %v3379 = vld [vmem:[#allocation2 + $0x90] sm:$0xff]
        %v3380 = vld [vmem:[#allocation2 + $0x98] sm:$0xff]
        %3397 = vrot.lane.b32.xlu0 %v3365, 127
        %v3398 = vpop.permute.xlu0 %3397
        %3399 = vrot.lane.b32.xlu0 %v3366, 127
        %v3400 = vpop.permute.xlu0 %3399
        %3401 = vrot.lane.b32.xlu0 %v3367, 127
        %v3402 = vpop.permute.xlu0 %3401
        %3403 = vrot.lane.b32.xlu0 %v3368, 127
        %v3404 = vpop.permute.xlu0 %3403
        %3405 = vrot.lane.b32.xlu0 %v3369, 127
        %v3406 = vpop.permute.xlu0 %3405
        %3407 = vrot.lane.b32.xlu0 %v3370, 127
        %v3408 = vpop.permute.xlu0 %3407
        %3409 = vrot.lane.b32.xlu0 %v3371, 127
        %v3410 = vpop.permute.xlu0 %3409
        %3411 = vrot.lane.b32.xlu0 %v3372, 127
        %v3412 = vpop.permute.xlu0 %3411
        %3413 = vrot.lane.b32.xlu0 %v3373, 127
        %v3414 = vpop.permute.xlu0 %3413
        %3415 = vrot.lane.b32.xlu0 %v3374, 127
        %v3416 = vpop.permute.xlu0 %3415
        %3417 = vrot.lane.b32.xlu0 %v3375, 127
        %v3418 = vpop.permute.xlu0 %3417
        %3419 = vrot.lane.b32.xlu0 %v3376, 127
        %v3420 = vpop.permute.xlu0 %3419
        %3421 = vrot.lane.b32.xlu0 %v3377, 127
        %v3422 = vpop.permute.xlu0 %3421
        %3423 = vrot.lane.b32.xlu0 %v3378, 127
        %v3424 = vpop.permute.xlu0 %3423
        %3425 = vrot.lane.b32.xlu0 %v3379, 127
        %v3426 = vpop.permute.xlu0 %3425
        %3427 = vrot.lane.b32.xlu0 %v3380, 127
        %v3428 = vpop.permute.xlu0 %3427
        %v3429 = vsel %vm797, %v3398, %v3400
        %v3430 = vsel %vm797, %v3400, %v3402
        %v3431 = vsel %vm797, %v3402, %v3404
        %v3432 = vsel %vm797, %v3406, %v3408
        %v3433 = vsel %vm797, %v3408, %v3410
        %v3434 = vsel %vm797, %v3410, %v3412
        %v3435 = vsel %vm797, %v3414, %v3416
        %v3436 = vsel %vm797, %v3416, %v3418
        %v3437 = vsel %vm797, %v3418, %v3420
        %v3438 = vsel %vm797, %v3422, %v3424
        %v3439 = vsel %vm797, %v3424, %v3426
        %v3440 = vsel %vm797, %v3426, %v3428
        %3453 = vst [vmem:[#allocation3 + $0x1e0] sm:$0xff] %v3429
        %3454 = vst [vmem:[#allocation3 + $0x1e8] sm:$0xff] %v3430
        %3455 = vst [vmem:[#allocation3 + $0x1f0] sm:$0xff] %v3431
        %3456 = vst [vmem:[#allocation3 + $0x1f8] sm:$0xff] %v3432
        %3457 = vst [vmem:[#allocation3 + $0x200] sm:$0xff] %v3433
        %3458 = vst [vmem:[#allocation3 + $0x208] sm:$0xff] %v3434
        %3459 = vst [vmem:[#allocation3 + $0x210] sm:$0xff] %v3435
        %3460 = vst [vmem:[#allocation3 + $0x218] sm:$0xff] %v3436
        %3461 = vst [vmem:[#allocation3 + $0x220] sm:$0xff] %v3437
        %3462 = vst [vmem:[#allocation3 + $0x228] sm:$0xff] %v3438
        %3463 = vst [vmem:[#allocation3 + $0x230] sm:$0xff] %v3439
        %3464 = vst [vmem:[#allocation3 + $0x238] sm:$0xff] %v3440
        %v3465 = vld [vmem:[#allocation2 + $0x8] sm:$0xff]
        %v3466 = vld [vmem:[#allocation2 + $0x10] sm:$0xff]
        %v3467 = vld [vmem:[#allocation2 + $0x18] sm:$0xff]
        %v3468 = vld [vmem:[#allocation2 + $0x20] sm:$0xff]
        %v3469 = vld [vmem:[#allocation2 + $0x30] sm:$0xff]
        %v3470 = vld [vmem:[#allocation2 + $0x38] sm:$0xff]
        %v3471 = vld [vmem:[#allocation2 + $0x40] sm:$0xff]
        %v3472 = vld [vmem:[#allocation2 + $0x48] sm:$0xff]
        %v3473 = vld [vmem:[#allocation2 + $0x58] sm:$0xff]
        %v3474 = vld [vmem:[#allocation2 + $0x60] sm:$0xff]
        %v3475 = vld [vmem:[#allocation2 + $0x68] sm:$0xff]
        %v3476 = vld [vmem:[#allocation2 + $0x70] sm:$0xff]
        %v3477 = vld [vmem:[#allocation2 + $0x80] sm:$0xff]
        %v3478 = vld [vmem:[#allocation2 + $0x88] sm:$0xff]
        %v3479 = vld [vmem:[#allocation2 + $0x90] sm:$0xff]
        %v3480 = vld [vmem:[#allocation2 + $0x98] sm:$0xff]
        %3497 = vrot.lane.b32.xlu0 %v3465, 111
        %v3498 = vpop.permute.xlu0 %3497
        %3499 = vrot.lane.b32.xlu0 %v3466, 111
        %v3500 = vpop.permute.xlu0 %3499
        %3501 = vrot.lane.b32.xlu0 %v3467, 111
        %v3502 = vpop.permute.xlu0 %3501
        %3503 = vrot.lane.b32.xlu0 %v3468, 111
        %v3504 = vpop.permute.xlu0 %3503
        %3505 = vrot.lane.b32.xlu0 %v3469, 111
        %v3506 = vpop.permute.xlu0 %3505
        %3507 = vrot.lane.b32.xlu0 %v3470, 111
        %v3508 = vpop.permute.xlu0 %3507
        %3509 = vrot.lane.b32.xlu0 %v3471, 111
        %v3510 = vpop.permute.xlu0 %3509
        %3511 = vrot.lane.b32.xlu0 %v3472, 111
        %v3512 = vpop.permute.xlu0 %3511
        %3513 = vrot.lane.b32.xlu0 %v3473, 111
        %v3514 = vpop.permute.xlu0 %3513
        %3515 = vrot.lane.b32.xlu0 %v3474, 111
        %v3516 = vpop.permute.xlu0 %3515
        %3517 = vrot.lane.b32.xlu0 %v3475, 111
        %v3518 = vpop.permute.xlu0 %3517
        %3519 = vrot.lane.b32.xlu0 %v3476, 111
        %v3520 = vpop.permute.xlu0 %3519
        %3521 = vrot.lane.b32.xlu0 %v3477, 111
        %v3522 = vpop.permute.xlu0 %3521
        %3523 = vrot.lane.b32.xlu0 %v3478, 111
        %v3524 = vpop.permute.xlu0 %3523
        %3525 = vrot.lane.b32.xlu0 %v3479, 111
        %v3526 = vpop.permute.xlu0 %3525
        %3527 = vrot.lane.b32.xlu0 %v3480, 111
        %v3528 = vpop.permute.xlu0 %3527
        %v3529 = vsel %vm898, %v3498, %v3500
        %v3530 = vsel %vm898, %v3500, %v3502
        %v3531 = vsel %vm898, %v3502, %v3504
        %v3532 = vsel %vm898, %v3506, %v3508
        %v3533 = vsel %vm898, %v3508, %v3510
        %v3534 = vsel %vm898, %v3510, %v3512
        %v3535 = vsel %vm898, %v3514, %v3516
        %v3536 = vsel %vm898, %v3516, %v3518
        %v3537 = vsel %vm898, %v3518, %v3520
        %v3538 = vsel %vm898, %v3522, %v3524
        %v3539 = vsel %vm898, %v3524, %v3526
        %v3540 = vsel %vm898, %v3526, %v3528
        %3553 = vst [vmem:[#allocation3 + $0x240] sm:$0xff] %v3529
        %3554 = vst [vmem:[#allocation3 + $0x248] sm:$0xff] %v3530
        %3555 = vst [vmem:[#allocation3 + $0x250] sm:$0xff] %v3531
        %3556 = vst [vmem:[#allocation3 + $0x258] sm:$0xff] %v3532
        %3557 = vst [vmem:[#allocation3 + $0x260] sm:$0xff] %v3533
        %3558 = vst [vmem:[#allocation3 + $0x268] sm:$0xff] %v3534
        %3559 = vst [vmem:[#allocation3 + $0x270] sm:$0xff] %v3535
        %3560 = vst [vmem:[#allocation3 + $0x278] sm:$0xff] %v3536
        %3561 = vst [vmem:[#allocation3 + $0x280] sm:$0xff] %v3537
        %3562 = vst [vmem:[#allocation3 + $0x288] sm:$0xff] %v3538
        %3563 = vst [vmem:[#allocation3 + $0x290] sm:$0xff] %v3539
        %3564 = vst [vmem:[#allocation3 + $0x298] sm:$0xff] %v3540
        %v3565 = vld [vmem:[#allocation2 + $0x8] sm:$0xff]
        %v3566 = vld [vmem:[#allocation2 + $0x10] sm:$0xff]
        %v3567 = vld [vmem:[#allocation2 + $0x18] sm:$0xff]
        %v3568 = vld [vmem:[#allocation2 + $0x20] sm:$0xff]
        %v3569 = vld [vmem:[#allocation2 + $0x30] sm:$0xff]
        %v3570 = vld [vmem:[#allocation2 + $0x38] sm:$0xff]
        %v3571 = vld [vmem:[#allocation2 + $0x40] sm:$0xff]
        %v3572 = vld [vmem:[#allocation2 + $0x48] sm:$0xff]
        %v3573 = vld [vmem:[#allocation2 + $0x58] sm:$0xff]
        %v3574 = vld [vmem:[#allocation2 + $0x60] sm:$0xff]
        %v3575 = vld [vmem:[#allocation2 + $0x68] sm:$0xff]
        %v3576 = vld [vmem:[#allocation2 + $0x70] sm:$0xff]
        %v3577 = vld [vmem:[#allocation2 + $0x80] sm:$0xff]
        %v3578 = vld [vmem:[#allocation2 + $0x88] sm:$0xff]
        %v3579 = vld [vmem:[#allocation2 + $0x90] sm:$0xff]
        %v3580 = vld [vmem:[#allocation2 + $0x98] sm:$0xff]
        %3597 = vrot.lane.b32.xlu0 %v3565, 110
        %v3598 = vpop.permute.xlu0 %3597
        %3599 = vrot.lane.b32.xlu0 %v3566, 110
        %v3600 = vpop.permute.xlu0 %3599
        %3601 = vrot.lane.b32.xlu0 %v3567, 110
        %v3602 = vpop.permute.xlu0 %3601
        %3603 = vrot.lane.b32.xlu0 %v3568, 110
        %v3604 = vpop.permute.xlu0 %3603
        %3605 = vrot.lane.b32.xlu0 %v3569, 110
        %v3606 = vpop.permute.xlu0 %3605
        %3607 = vrot.lane.b32.xlu0 %v3570, 110
        %v3608 = vpop.permute.xlu0 %3607
        %3609 = vrot.lane.b32.xlu0 %v3571, 110
        %v3610 = vpop.permute.xlu0 %3609
        %3611 = vrot.lane.b32.xlu0 %v3572, 110
        %v3612 = vpop.permute.xlu0 %3611
        %3613 = vrot.lane.b32.xlu0 %v3573, 110
        %v3614 = vpop.permute.xlu0 %3613
        %3615 = vrot.lane.b32.xlu0 %v3574, 110
        %v3616 = vpop.permute.xlu0 %3615
        %3617 = vrot.lane.b32.xlu0 %v3575, 110
        %v3618 = vpop.permute.xlu0 %3617
        %3619 = vrot.lane.b32.xlu0 %v3576, 110
        %v3620 = vpop.permute.xlu0 %3619
        %3621 = vrot.lane.b32.xlu0 %v3577, 110
        %v3622 = vpop.permute.xlu0 %3621
        %3623 = vrot.lane.b32.xlu0 %v3578, 110
        %v3624 = vpop.permute.xlu0 %3623
        %3625 = vrot.lane.b32.xlu0 %v3579, 110
        %v3626 = vpop.permute.xlu0 %3625
        %3627 = vrot.lane.b32.xlu0 %v3580, 110
        %v3628 = vpop.permute.xlu0 %3627
        %v3629 = vsel %vm999, %v3598, %v3600
        %v3630 = vsel %vm999, %v3600, %v3602
        %v3631 = vsel %vm999, %v3602, %v3604
        %v3632 = vsel %vm999, %v3606, %v3608
        %v3633 = vsel %vm999, %v3608, %v3610
        %v3634 = vsel %vm999, %v3610, %v3612
        %v3635 = vsel %vm999, %v3614, %v3616
        %v3636 = vsel %vm999, %v3616, %v3618
        %v3637 = vsel %vm999, %v3618, %v3620
        %v3638 = vsel %vm999, %v3622, %v3624
        %v3639 = vsel %vm999, %v3624, %v3626
        %v3640 = vsel %vm999, %v3626, %v3628
        %3653 = vst [vmem:[#allocation3 + $0x2a0] sm:$0xff] %v3629
        %3654 = vst [vmem:[#allocation3 + $0x2a8] sm:$0xff] %v3630
        %3655 = vst [vmem:[#allocation3 + $0x2b0] sm:$0xff] %v3631
        %3656 = vst [vmem:[#allocation3 + $0x2b8] sm:$0xff] %v3632
        %3657 = vst [vmem:[#allocation3 + $0x2c0] sm:$0xff] %v3633
        %3658 = vst [vmem:[#allocation3 + $0x2c8] sm:$0xff] %v3634
        %3659 = vst [vmem:[#allocation3 + $0x2d0] sm:$0xff] %v3635
        %3660 = vst [vmem:[#allocation3 + $0x2d8] sm:$0xff] %v3636
        %3661 = vst [vmem:[#allocation3 + $0x2e0] sm:$0xff] %v3637
        %3662 = vst [vmem:[#allocation3 + $0x2e8] sm:$0xff] %v3638
        %3663 = vst [vmem:[#allocation3 + $0x2f0] sm:$0xff] %v3639
        %3664 = vst [vmem:[#allocation3 + $0x2f8] sm:$0xff] %v3640
        %v3665 = vld [vmem:[#allocation2 + $0x8] sm:$0xff]
        %v3666 = vld [vmem:[#allocation2 + $0x10] sm:$0xff]
        %v3667 = vld [vmem:[#allocation2 + $0x18] sm:$0xff]
        %v3668 = vld [vmem:[#allocation2 + $0x20] sm:$0xff]
        %v3669 = vld [vmem:[#allocation2 + $0x30] sm:$0xff]
        %v3670 = vld [vmem:[#allocation2 + $0x38] sm:$0xff]
        %v3671 = vld [vmem:[#allocation2 + $0x40] sm:$0xff]
        %v3672 = vld [vmem:[#allocation2 + $0x48] sm:$0xff]
        %v3673 = vld [vmem:[#allocation2 + $0x58] sm:$0xff]
        %v3674 = vld [vmem:[#allocation2 + $0x60] sm:$0xff]
        %v3675 = vld [vmem:[#allocation2 + $0x68] sm:$0xff]
        %v3676 = vld [vmem:[#allocation2 + $0x70] sm:$0xff]
        %v3677 = vld [vmem:[#allocation2 + $0x80] sm:$0xff]
        %v3678 = vld [vmem:[#allocation2 + $0x88] sm:$0xff]
        %v3679 = vld [vmem:[#allocation2 + $0x90] sm:$0xff]
        %v3680 = vld [vmem:[#allocation2 + $0x98] sm:$0xff]
        %3697 = vrot.lane.b32.xlu0 %v3665, 109
        %v3698 = vpop.permute.xlu0 %3697
        %3699 = vrot.lane.b32.xlu0 %v3666, 109
        %v3700 = vpop.permute.xlu0 %3699
        %3701 = vrot.lane.b32.xlu0 %v3667, 109
        %v3702 = vpop.permute.xlu0 %3701
        %3703 = vrot.lane.b32.xlu0 %v3668, 109
        %v3704 = vpop.permute.xlu0 %3703
        %3705 = vrot.lane.b32.xlu0 %v3669, 109
        %v3706 = vpop.permute.xlu0 %3705
        %3707 = vrot.lane.b32.xlu0 %v3670, 109
        %v3708 = vpop.permute.xlu0 %3707
        %3709 = vrot.lane.b32.xlu0 %v3671, 109
        %v3710 = vpop.permute.xlu0 %3709
        %3711 = vrot.lane.b32.xlu0 %v3672, 109
        %v3712 = vpop.permute.xlu0 %3711
        %3713 = vrot.lane.b32.xlu0 %v3673, 109
        %v3714 = vpop.permute.xlu0 %3713
        %3715 = vrot.lane.b32.xlu0 %v3674, 109
        %v3716 = vpop.permute.xlu0 %3715
        %3717 = vrot.lane.b32.xlu0 %v3675, 109
        %v3718 = vpop.permute.xlu0 %3717
        %3719 = vrot.lane.b32.xlu0 %v3676, 109
        %v3720 = vpop.permute.xlu0 %3719
        %3721 = vrot.lane.b32.xlu0 %v3677, 109
        %v3722 = vpop.permute.xlu0 %3721
        %3723 = vrot.lane.b32.xlu0 %v3678, 109
        %v3724 = vpop.permute.xlu0 %3723
        %3725 = vrot.lane.b32.xlu0 %v3679, 109
        %v3726 = vpop.permute.xlu0 %3725
        %3727 = vrot.lane.b32.xlu0 %v3680, 109
        %v3728 = vpop.permute.xlu0 %3727
        %v3729 = vsel %vm1100, %v3698, %v3700
        %v3730 = vsel %vm1100, %v3700, %v3702
        %v3731 = vsel %vm1100, %v3702, %v3704
        %v3732 = vsel %vm1100, %v3706, %v3708
        %v3733 = vsel %vm1100, %v3708, %v3710
        %v3734 = vsel %vm1100, %v3710, %v3712
        %v3735 = vsel %vm1100, %v3714, %v3716
        %v3736 = vsel %vm1100, %v3716, %v3718
        %v3737 = vsel %vm1100, %v3718, %v3720
        %v3738 = vsel %vm1100, %v3722, %v3724
        %v3739 = vsel %vm1100, %v3724, %v3726
        %v3740 = vsel %vm1100, %v3726, %v3728
        %3753 = vst [vmem:[#allocation3 + $0x300] sm:$0xff] %v3729
        %3754 = vst [vmem:[#allocation3 + $0x308] sm:$0xff] %v3730
        %3755 = vst [vmem:[#allocation3 + $0x310] sm:$0xff] %v3731
        %3756 = vst [vmem:[#allocation3 + $0x318] sm:$0xff] %v3732
        %3757 = vst [vmem:[#allocation3 + $0x320] sm:$0xff] %v3733
        %3758 = vst [vmem:[#allocation3 + $0x328] sm:$0xff] %v3734
        %3759 = vst [vmem:[#allocation3 + $0x330] sm:$0xff] %v3735
        %3760 = vst [vmem:[#allocation3 + $0x338] sm:$0xff] %v3736
        %3761 = vst [vmem:[#allocation3 + $0x340] sm:$0xff] %v3737
        %3762 = vst [vmem:[#allocation3 + $0x348] sm:$0xff] %v3738
        %3763 = vst [vmem:[#allocation3 + $0x350] sm:$0xff] %v3739
        %3764 = vst [vmem:[#allocation3 + $0x358] sm:$0xff] %v3740
        %v3765 = vld [vmem:[#allocation7] sm:$0xff]
        %v3766 = vld [vmem:[#allocation7 + $0x8] sm:$0xff]
        %v3767 = vld [vmem:[#allocation7 + $0x10] sm:$0xff]
        %v3768 = vld [vmem:[#allocation7 + $0x18] sm:$0xff]
        %v3769 = vld [vmem:[#allocation7 + $0x20] sm:$0xff]
        %v3770 = vld [vmem:[#allocation7 + $0x28] sm:$0xff]
        %v3771 = vld [vmem:[#allocation7 + $0x30] sm:$0xff]
        %v3772 = vld [vmem:[#allocation7 + $0x38] sm:$0xff]
        %v3773 = vld [vmem:[#allocation7 + $0x40] sm:$0xff]
        %v3774 = vld [vmem:[#allocation7 + $0x48] sm:$0xff]
        %v3775 = vld [vmem:[#allocation7 + $0x50] sm:$0xff]
        %v3776 = vld [vmem:[#allocation7 + $0x58] sm:$0xff]
        %v3777 = vld [vmem:[#allocation3] sm:$0xff]
        %v3778 = vld [vmem:[#allocation3 + $0x8] sm:$0xff]
        %v3779 = vld [vmem:[#allocation3 + $0x10] sm:$0xff]
        %v3780 = vld [vmem:[#allocation3 + $0x18] sm:$0xff]
        %v3781 = vld [vmem:[#allocation3 + $0x20] sm:$0xff]
        %v3782 = vld [vmem:[#allocation3 + $0x28] sm:$0xff]
        %v3783 = vld [vmem:[#allocation3 + $0x30] sm:$0xff]
        %v3784 = vld [vmem:[#allocation3 + $0x38] sm:$0xff]
        %v3785 = vld [vmem:[#allocation3 + $0x40] sm:$0xff]
        %v3786 = vld [vmem:[#allocation3 + $0x48] sm:$0xff]
        %v3787 = vld [vmem:[#allocation3 + $0x50] sm:$0xff]
        %v3788 = vld [vmem:[#allocation3 + $0x58] sm:$0xff]
        %v3789 = vld [vmem:[#allocation3 + $0x60] sm:$0xff]
        %v3790 = vld [vmem:[#allocation3 + $0x68] sm:$0xff]
        %v3791 = vld [vmem:[#allocation3 + $0x70] sm:$0xff]
        %v3792 = vld [vmem:[#allocation3 + $0x78] sm:$0xff]
        %v3793 = vld [vmem:[#allocation3 + $0x80] sm:$0xff]
        %v3794 = vld [vmem:[#allocation3 + $0x88] sm:$0xff]
        %v3795 = vld [vmem:[#allocation3 + $0x90] sm:$0xff]
        %v3796 = vld [vmem:[#allocation3 + $0x98] sm:$0xff]
        %v3797 = vld [vmem:[#allocation3 + $0xa0] sm:$0xff]
        %v3798 = vld [vmem:[#allocation3 + $0xa8] sm:$0xff]
        %v3799 = vld [vmem:[#allocation3 + $0xb0] sm:$0xff]
        %v3800 = vld [vmem:[#allocation3 + $0xb8] sm:$0xff]
        %v3801 = vld [vmem:[#allocation3 + $0xc0] sm:$0xff]
        %v3802 = vld [vmem:[#allocation3 + $0xc8] sm:$0xff]
        %v3803 = vld [vmem:[#allocation3 + $0xd0] sm:$0xff]
        %v3804 = vld [vmem:[#allocation3 + $0xd8] sm:$0xff]
        %v3805 = vld [vmem:[#allocation3 + $0xe0] sm:$0xff]
        %v3806 = vld [vmem:[#allocation3 + $0xe8] sm:$0xff]
        %v3807 = vld [vmem:[#allocation3 + $0xf0] sm:$0xff]
        %v3808 = vld [vmem:[#allocation3 + $0xf8] sm:$0xff]
        %v3809 = vld [vmem:[#allocation3 + $0x100] sm:$0xff]
        %v3810 = vld [vmem:[#allocation3 + $0x108] sm:$0xff]
        %v3811 = vld [vmem:[#allocation3 + $0x110] sm:$0xff]
        %v3812 = vld [vmem:[#allocation3 + $0x118] sm:$0xff]
        %v3813 = vld [vmem:[#allocation3 + $0x120] sm:$0xff]
        %v3814 = vld [vmem:[#allocation3 + $0x128] sm:$0xff]
        %v3815 = vld [vmem:[#allocation3 + $0x130] sm:$0xff]
        %v3816 = vld [vmem:[#allocation3 + $0x138] sm:$0xff]
        %v3817 = vld [vmem:[#allocation3 + $0x140] sm:$0xff]
        %v3818 = vld [vmem:[#allocation3 + $0x148] sm:$0xff]
        %v3819 = vld [vmem:[#allocation3 + $0x150] sm:$0xff]
        %v3820 = vld [vmem:[#allocation3 + $0x158] sm:$0xff]
        %v3821 = vld [vmem:[#allocation3 + $0x160] sm:$0xff]
        %v3822 = vld [vmem:[#allocation3 + $0x168] sm:$0xff]
        %v3823 = vld [vmem:[#allocation3 + $0x170] sm:$0xff]
        %v3824 = vld [vmem:[#allocation3 + $0x178] sm:$0xff]
        %v3825 = vld [vmem:[#allocation3 + $0x180] sm:$0xff]
        %v3826 = vld [vmem:[#allocation3 + $0x188] sm:$0xff]
        %v3827 = vld [vmem:[#allocation3 + $0x190] sm:$0xff]
        %v3828 = vld [vmem:[#allocation3 + $0x198] sm:$0xff]
        %v3829 = vld [vmem:[#allocation3 + $0x1a0] sm:$0xff]
        %v3830 = vld [vmem:[#allocation3 + $0x1a8] sm:$0xff]
        %v3831 = vld [vmem:[#allocation3 + $0x1b0] sm:$0xff]
        %v3832 = vld [vmem:[#allocation3 + $0x1b8] sm:$0xff]
        %v3833 = vld [vmem:[#allocation3 + $0x1c0] sm:$0xff]
        %v3834 = vld [vmem:[#allocation3 + $0x1c8] sm:$0xff]
        %v3835 = vld [vmem:[#allocation3 + $0x1d0] sm:$0xff]
        %v3836 = vld [vmem:[#allocation3 + $0x1d8] sm:$0xff]
        %v3837 = vld [vmem:[#allocation3 + $0x1e0] sm:$0xff]
        %v3838 = vld [vmem:[#allocation3 + $0x1e8] sm:$0xff]
        %v3839 = vld [vmem:[#allocation3 + $0x1f0] sm:$0xff]
        %v3840 = vld [vmem:[#allocation3 + $0x1f8] sm:$0xff]
        %v3841 = vld [vmem:[#allocation3 + $0x200] sm:$0xff]
        %v3842 = vld [vmem:[#allocation3 + $0x208] sm:$0xff]
        %v3843 = vld [vmem:[#allocation3 + $0x210] sm:$0xff]
        %v3844 = vld [vmem:[#allocation3 + $0x218] sm:$0xff]
        %v3845 = vld [vmem:[#allocation3 + $0x220] sm:$0xff]
        %v3846 = vld [vmem:[#allocation3 + $0x228] sm:$0xff]
        %v3847 = vld [vmem:[#allocation3 + $0x230] sm:$0xff]
        %v3848 = vld [vmem:[#allocation3 + $0x238] sm:$0xff]
        %v3849 = vld [vmem:[#allocation3 + $0x240] sm:$0xff]
        %v3850 = vld [vmem:[#allocation3 + $0x248] sm:$0xff]
        %v3851 = vld [vmem:[#allocation3 + $0x250] sm:$0xff]
        %v3852 = vld [vmem:[#allocation3 + $0x258] sm:$0xff]
        %v3853 = vld [vmem:[#allocation3 + $0x260] sm:$0xff]
        %v3854 = vld [vmem:[#allocation3 + $0x268] sm:$0xff]
        %v3855 = vld [vmem:[#allocation3 + $0x270] sm:$0xff]
        %v3856 = vld [vmem:[#allocation3 + $0x278] sm:$0xff]
        %v3857 = vld [vmem:[#allocation3 + $0x280] sm:$0xff]
        %v3858 = vld [vmem:[#allocation3 + $0x288] sm:$0xff]
        %v3859 = vld [vmem:[#allocation3 + $0x290] sm:$0xff]
        %v3860 = vld [vmem:[#allocation3 + $0x298] sm:$0xff]
        %v3861 = vld [vmem:[#allocation3 + $0x2a0] sm:$0xff]
        %v3862 = vld [vmem:[#allocation3 + $0x2a8] sm:$0xff]
        %v3863 = vld [vmem:[#allocation3 + $0x2b0] sm:$0xff]
        %v3864 = vld [vmem:[#allocation3 + $0x2b8] sm:$0xff]
        %v3865 = vld [vmem:[#allocation3 + $0x2c0] sm:$0xff]
        %v3866 = vld [vmem:[#allocation3 + $0x2c8] sm:$0xff]
        %v3867 = vld [vmem:[#allocation3 + $0x2d0] sm:$0xff]
        %v3868 = vld [vmem:[#allocation3 + $0x2d8] sm:$0xff]
        %v3869 = vld [vmem:[#allocation3 + $0x2e0] sm:$0xff]
        %v3870 = vld [vmem:[#allocation3 + $0x2e8] sm:$0xff]
        %v3871 = vld [vmem:[#allocation3 + $0x2f0] sm:$0xff]
        %v3872 = vld [vmem:[#allocation3 + $0x2f8] sm:$0xff]
        %v3873 = vld [vmem:[#allocation3 + $0x300] sm:$0xff]
        %v3874 = vld [vmem:[#allocation3 + $0x308] sm:$0xff]
        %v3875 = vld [vmem:[#allocation3 + $0x310] sm:$0xff]
        %v3876 = vld [vmem:[#allocation3 + $0x318] sm:$0xff]
        %v3877 = vld [vmem:[#allocation3 + $0x320] sm:$0xff]
        %v3878 = vld [vmem:[#allocation3 + $0x328] sm:$0xff]
        %v3879 = vld [vmem:[#allocation3 + $0x330] sm:$0xff]
        %v3880 = vld [vmem:[#allocation3 + $0x338] sm:$0xff]
        %v3881 = vld [vmem:[#allocation3 + $0x340] sm:$0xff]
        %v3882 = vld [vmem:[#allocation3 + $0x348] sm:$0xff]
        %v3883 = vld [vmem:[#allocation3 + $0x350] sm:$0xff]
        %v3884 = vld [vmem:[#allocation3 + $0x358] sm:$0xff]
        %v3885 = vld [vmem:[#allocation3 + $0x360] sm:$0xff]
        %v3886 = vld [vmem:[#allocation3 + $0x368] sm:$0xff]
        %v3887 = vld [vmem:[#allocation3 + $0x370] sm:$0xff]
        %v3888 = vld [vmem:[#allocation3 + $0x378] sm:$0xff]
        %v3889 = vld [vmem:[#allocation3 + $0x380] sm:$0xff]
        %v3890 = vld [vmem:[#allocation3 + $0x388] sm:$0xff]
        %v3891 = vld [vmem:[#allocation3 + $0x390] sm:$0xff]
        %v3892 = vld [vmem:[#allocation3 + $0x398] sm:$0xff]
        %v3893 = vld [vmem:[#allocation3 + $0x3a0] sm:$0xff]
        %v3894 = vld [vmem:[#allocation3 + $0x3a8] sm:$0xff]
        %v3895 = vld [vmem:[#allocation3 + $0x3b0] sm:$0xff]
        %v3896 = vld [vmem:[#allocation3 + $0x3b8] sm:$0xff]
        %v3897 = vld [vmem:[#allocation3 + $0x3c0] sm:$0xff]
        %v3898 = vld [vmem:[#allocation3 + $0x3c8] sm:$0xff]
        %v3899 = vld [vmem:[#allocation3 + $0x3d0] sm:$0xff]
        %v3900 = vld [vmem:[#allocation3 + $0x3d8] sm:$0xff]
        %v3901 = vld [vmem:[#allocation3 + $0x3e0] sm:$0xff]
        %v3902 = vld [vmem:[#allocation3 + $0x3e8] sm:$0xff]
        %v3903 = vld [vmem:[#allocation3 + $0x3f0] sm:$0xff]
        %v3904 = vld [vmem:[#allocation3 + $0x3f8] sm:$0xff]
        %v3905 = vld [vmem:[#allocation3 + $0x400] sm:$0xff]
        %v3906 = vld [vmem:[#allocation3 + $0x408] sm:$0xff]
        %v3907 = vld [vmem:[#allocation3 + $0x410] sm:$0xff]
        %v3908 = vld [vmem:[#allocation3 + $0x418] sm:$0xff]
        %v3909 = vld [vmem:[#allocation3 + $0x420] sm:$0xff]
        %v3910 = vld [vmem:[#allocation3 + $0x428] sm:$0xff]
        %v3911 = vld [vmem:[#allocation3 + $0x430] sm:$0xff]
        %v3912 = vld [vmem:[#allocation3 + $0x438] sm:$0xff]
        %v3913 = vld [vmem:[#allocation3 + $0x440] sm:$0xff]
        %v3914 = vld [vmem:[#allocation3 + $0x448] sm:$0xff]
        %v3915 = vld [vmem:[#allocation3 + $0x450] sm:$0xff]
        %v3916 = vld [vmem:[#allocation3 + $0x458] sm:$0xff]
        %v3917 = vld [vmem:[#allocation3 + $0x460] sm:$0xff]
        %v3918 = vld [vmem:[#allocation3 + $0x468] sm:$0xff]
        %v3919 = vld [vmem:[#allocation3 + $0x470] sm:$0xff]
        %v3920 = vld [vmem:[#allocation3 + $0x478] sm:$0xff]
        %s3921 = scalar_lea.vmem %s209, 192 [#allocation4]
        %v3922 = vld [vmem:[%s3921] sm:$0xff]
        %v3923 = vld [vmem:[%s3921 + $0x8] sm:$0xff]
        %v3924 = vld [vmem:[%s3921 + $0x10] sm:$0xff]
        %v3925 = vld [vmem:[%s3921 + $0x18] sm:$0xff]
        %v3926 = vld [vmem:[%s3921 + $0x20] sm:$0xff]
        %v3927 = vld [vmem:[%s3921 + $0x28] sm:$0xff]
        %v3928 = vld [vmem:[%s3921 + $0x30] sm:$0xff]
        %v3929 = vld [vmem:[%s3921 + $0x38] sm:$0xff]
        %v3930 = vld [vmem:[%s3921 + $0x40] sm:$0xff]
        %v3931 = vld [vmem:[%s3921 + $0x48] sm:$0xff]
        %v3932 = vld [vmem:[%s3921 + $0x50] sm:$0xff]
        %v3933 = vld [vmem:[%s3921 + $0x58] sm:$0xff]
        %3934 = vmatpush.msra.mxu0 %v3822
        %3935 = vmatpush.msra.mxu0 %v3819
        %3936 = vmatpush.msra.mxu0 %v3816
        %3937 = vmatpush.msra.mxu0 %v3813
        %3938 = vmatpush.msra.mxu0 %v3810
        %3939 = vmatpush.msra.mxu0 %v3807
        %3940 = vmatpush.msra.mxu0 %v3804
        %3941 = vmatpush.msra.mxu0 %v3801
        %3942 = vmatpush.msra.mxu0 %v3798
        %3943 = vmatpush.msra.mxu0 %v3795
        %3944 = vmatpush.msra.mxu0 %v3792
        %3945 = vmatpush.msra.mxu0 %v3789
        %3946 = vmatpush.msra.mxu0 %v3786
        %3947 = vmatpush.msra.mxu0 %v3783
        %3948 = vmatpush.msra.mxu0 %v3780
        %3949 = vmatpush.msra.mxu0 %v3777
        %3950 = vmatmul.f32.gmra.mxu0 %v3765
        %v3951 = vpop.f32.mrf.mxu0
        %v3952 = vadd.f32 %v3922, %v3951
        %3953 = vmatmul.f32.gmra.mxu0 %v3768
        %v3954 = vpop.f32.mrf.mxu0
        %v3955 = vadd.f32 %v3925, %v3954
        %3956 = vmatmul.f32.gmra.mxu0 %v3771
        %v3957 = vpop.f32.mrf.mxu0
        %v3958 = vadd.f32 %v3928, %v3957
        %3959 = vmatmul.f32.gmra.mxu0 %v3774
        %v3960 = vpop.f32.mrf.mxu0
        %v3961 = vadd.f32 %v3931, %v3960
        %3962 = vdwg.mxu0
        %3963 = vmatpush.msra.mxu0 %v3870
        %3964 = vmatpush.msra.mxu0 %v3867
        %3965 = vmatpush.msra.mxu0 %v3864
        %3966 = vmatpush.msra.mxu0 %v3861
        %3967 = vmatpush.msra.mxu0 %v3858
        %3968 = vmatpush.msra.mxu0 %v3855
        %3969 = vmatpush.msra.mxu0 %v3852
        %3970 = vmatpush.msra.mxu0 %v3849
        %3971 = vmatpush.msra.mxu0 %v3846
        %3972 = vmatpush.msra.mxu0 %v3843
        %3973 = vmatpush.msra.mxu0 %v3840
        %3974 = vmatpush.msra.mxu0 %v3837
        %3975 = vmatpush.msra.mxu0 %v3834
        %3976 = vmatpush.msra.mxu0 %v3831
        %3977 = vmatpush.msra.mxu0 %v3828
        %3978 = vmatpush.msra.mxu0 %v3825
        %3979 = vmatmul.f32.gmra.mxu0 %v3766
        %v3980 = vpop.f32.mrf.mxu0
        %v3981 = vadd.f32 %v3952, %v3980
        %3982 = vmatmul.f32.gmra.mxu0 %v3769
        %v3983 = vpop.f32.mrf.mxu0
        %v3984 = vadd.f32 %v3955, %v3983
        %3985 = vmatmul.f32.gmra.mxu0 %v3772
        %v3986 = vpop.f32.mrf.mxu0
        %v3987 = vadd.f32 %v3958, %v3986
        %3988 = vmatmul.f32.gmra.mxu0 %v3775
        %v3989 = vpop.f32.mrf.mxu0
        %v3990 = vadd.f32 %v3961, %v3989
        %3991 = vdwg.mxu0
        %3992 = vmatpush.msra.mxu0 %v3918
        %3993 = vmatpush.msra.mxu0 %v3915
        %3994 = vmatpush.msra.mxu0 %v3912
        %3995 = vmatpush.msra.mxu0 %v3909
        %3996 = vmatpush.msra.mxu0 %v3906
        %3997 = vmatpush.msra.mxu0 %v3903
        %3998 = vmatpush.msra.mxu0 %v3900
        %3999 = vmatpush.msra.mxu0 %v3897
        %4000 = vmatpush.msra.mxu0 %v3894
        %4001 = vmatpush.msra.mxu0 %v3891
        %4002 = vmatpush.msra.mxu0 %v3888
        %4003 = vmatpush.msra.mxu0 %v3885
        %4004 = vmatpush.msra.mxu0 %v3882
        %4005 = vmatpush.msra.mxu0 %v3879
        %4006 = vmatpush.msra.mxu0 %v3876
        %4007 = vmatpush.msra.mxu0 %v3873
        %4008 = vmatmul.f32.gmra.mxu0 %v3767
        %v4009 = vpop.f32.mrf.mxu0
        %v4010 = vadd.f32 %v3981, %v4009
        %4011 = vmatmul.f32.gmra.mxu0 %v3770
        %v4012 = vpop.f32.mrf.mxu0
        %v4013 = vadd.f32 %v3984, %v4012
        %4014 = vmatmul.f32.gmra.mxu0 %v3773
        %v4015 = vpop.f32.mrf.mxu0
        %v4016 = vadd.f32 %v3987, %v4015
        %4017 = vmatmul.f32.gmra.mxu0 %v3776
        %v4018 = vpop.f32.mrf.mxu0
        %v4019 = vadd.f32 %v3990, %v4018
        %4020 = vdwg.mxu0
        %4021 = vmatpush.msra.mxu0 %v3823
        %4022 = vmatpush.msra.mxu0 %v3820
        %4023 = vmatpush.msra.mxu0 %v3817
        %4024 = vmatpush.msra.mxu0 %v3814
        %4025 = vmatpush.msra.mxu0 %v3811
        %4026 = vmatpush.msra.mxu0 %v3808
        %4027 = vmatpush.msra.mxu0 %v3805
        %4028 = vmatpush.msra.mxu0 %v3802
        %4029 = vmatpush.msra.mxu0 %v3799
        %4030 = vmatpush.msra.mxu0 %v3796
        %4031 = vmatpush.msra.mxu0 %v3793
        %4032 = vmatpush.msra.mxu0 %v3790
        %4033 = vmatpush.msra.mxu0 %v3787
        %4034 = vmatpush.msra.mxu0 %v3784
        %4035 = vmatpush.msra.mxu0 %v3781
        %4036 = vmatpush.msra.mxu0 %v3778
        %4037 = vmatmul.f32.gmra.mxu0 %v3765
        %v4038 = vpop.f32.mrf.mxu0
        %v4039 = vadd.f32 %v3923, %v4038
        %4040 = vmatmul.f32.gmra.mxu0 %v3768
        %v4041 = vpop.f32.mrf.mxu0
        %v4042 = vadd.f32 %v3926, %v4041
        %4043 = vmatmul.f32.gmra.mxu0 %v3771
        %v4044 = vpop.f32.mrf.mxu0
        %v4045 = vadd.f32 %v3929, %v4044
        %4046 = vmatmul.f32.gmra.mxu0 %v3774
        %v4047 = vpop.f32.mrf.mxu0
        %v4048 = vadd.f32 %v3932, %v4047
        %4049 = vdwg.mxu0
        %4050 = vmatpush.msra.mxu0 %v3871
        %4051 = vmatpush.msra.mxu0 %v3868
        %4052 = vmatpush.msra.mxu0 %v3865
        %4053 = vmatpush.msra.mxu0 %v3862
        %4054 = vmatpush.msra.mxu0 %v3859
        %4055 = vmatpush.msra.mxu0 %v3856
        %4056 = vmatpush.msra.mxu0 %v3853
        %4057 = vmatpush.msra.mxu0 %v3850
        %4058 = vmatpush.msra.mxu0 %v3847
        %4059 = vmatpush.msra.mxu0 %v3844
        %4060 = vmatpush.msra.mxu0 %v3841
        %4061 = vmatpush.msra.mxu0 %v3838
        %4062 = vmatpush.msra.mxu0 %v3835
        %4063 = vmatpush.msra.mxu0 %v3832
        %4064 = vmatpush.msra.mxu0 %v3829
        %4065 = vmatpush.msra.mxu0 %v3826
        %4066 = vmatmul.f32.gmra.mxu0 %v3766
        %v4067 = vpop.f32.mrf.mxu0
        %v4068 = vadd.f32 %v4039, %v4067
        %4069 = vmatmul.f32.gmra.mxu0 %v3769
        %v4070 = vpop.f32.mrf.mxu0
        %v4071 = vadd.f32 %v4042, %v4070
        %4072 = vmatmul.f32.gmra.mxu0 %v3772
        %v4073 = vpop.f32.mrf.mxu0
        %v4074 = vadd.f32 %v4045, %v4073
        %4075 = vmatmul.f32.gmra.mxu0 %v3775
        %v4076 = vpop.f32.mrf.mxu0
        %v4077 = vadd.f32 %v4048, %v4076
        %4078 = vdwg.mxu0
        %4079 = vmatpush.msra.mxu0 %v3919
        %4080 = vmatpush.msra.mxu0 %v3916
        %4081 = vmatpush.msra.mxu0 %v3913
        %4082 = vmatpush.msra.mxu0 %v3910
        %4083 = vmatpush.msra.mxu0 %v3907
        %4084 = vmatpush.msra.mxu0 %v3904
        %4085 = vmatpush.msra.mxu0 %v3901
        %4086 = vmatpush.msra.mxu0 %v3898
        %4087 = vmatpush.msra.mxu0 %v3895
        %4088 = vmatpush.msra.mxu0 %v3892
        %4089 = vmatpush.msra.mxu0 %v3889
        %4090 = vmatpush.msra.mxu0 %v3886
        %4091 = vmatpush.msra.mxu0 %v3883
        %4092 = vmatpush.msra.mxu0 %v3880
        %4093 = vmatpush.msra.mxu0 %v3877
        %4094 = vmatpush.msra.mxu0 %v3874
        %4095 = vmatmul.f32.gmra.mxu0 %v3767
        %v4096 = vpop.f32.mrf.mxu0
        %v4097 = vadd.f32 %v4068, %v4096
        %4098 = vmatmul.f32.gmra.mxu0 %v3770
        %v4099 = vpop.f32.mrf.mxu0
        %v4100 = vadd.f32 %v4071, %v4099
        %4101 = vmatmul.f32.gmra.mxu0 %v3773
        %v4102 = vpop.f32.mrf.mxu0
        %v4103 = vadd.f32 %v4074, %v4102
        %4104 = vmatmul.f32.gmra.mxu0 %v3776
        %v4105 = vpop.f32.mrf.mxu0
        %v4106 = vadd.f32 %v4077, %v4105
        %4107 = vdwg.mxu0
        %4108 = vmatpush.msra.mxu0 %v3824
        %4109 = vmatpush.msra.mxu0 %v3821
        %4110 = vmatpush.msra.mxu0 %v3818
        %4111 = vmatpush.msra.mxu0 %v3815
        %4112 = vmatpush.msra.mxu0 %v3812
        %4113 = vmatpush.msra.mxu0 %v3809
        %4114 = vmatpush.msra.mxu0 %v3806
        %4115 = vmatpush.msra.mxu0 %v3803
        %4116 = vmatpush.msra.mxu0 %v3800
        %4117 = vmatpush.msra.mxu0 %v3797
        %4118 = vmatpush.msra.mxu0 %v3794
        %4119 = vmatpush.msra.mxu0 %v3791
        %4120 = vmatpush.msra.mxu0 %v3788
        %4121 = vmatpush.msra.mxu0 %v3785
        %4122 = vmatpush.msra.mxu0 %v3782
        %4123 = vmatpush.msra.mxu0 %v3779
        %4124 = vmatmul.f32.gmra.mxu0 %v3765
        %v4125 = vpop.f32.mrf.mxu0
        %v4126 = vadd.f32 %v3924, %v4125
        %4127 = vmatmul.f32.gmra.mxu0 %v3768
        %v4128 = vpop.f32.mrf.mxu0
        %v4129 = vadd.f32 %v3927, %v4128
        %4130 = vmatmul.f32.gmra.mxu0 %v3771
        %v4131 = vpop.f32.mrf.mxu0
        %v4132 = vadd.f32 %v3930, %v4131
        %4133 = vmatmul.f32.gmra.mxu0 %v3774
        %v4134 = vpop.f32.mrf.mxu0
        %v4135 = vadd.f32 %v3933, %v4134
        %4136 = vdwg.mxu0
        %4137 = vmatpush.msra.mxu0 %v3872
        %4138 = vmatpush.msra.mxu0 %v3869
        %4139 = vmatpush.msra.mxu0 %v3866
        %4140 = vmatpush.msra.mxu0 %v3863
        %4141 = vmatpush.msra.mxu0 %v3860
        %4142 = vmatpush.msra.mxu0 %v3857
        %4143 = vmatpush.msra.mxu0 %v3854
        %4144 = vmatpush.msra.mxu0 %v3851
        %4145 = vmatpush.msra.mxu0 %v3848
        %4146 = vmatpush.msra.mxu0 %v3845
        %4147 = vmatpush.msra.mxu0 %v3842
        %4148 = vmatpush.msra.mxu0 %v3839
        %4149 = vmatpush.msra.mxu0 %v3836
        %4150 = vmatpush.msra.mxu0 %v3833
        %4151 = vmatpush.msra.mxu0 %v3830
        %4152 = vmatpush.msra.mxu0 %v3827
        %4153 = vmatmul.f32.gmra.mxu0 %v3766
        %v4154 = vpop.f32.mrf.mxu0
        %v4155 = vadd.f32 %v4126, %v4154
        %4156 = vmatmul.f32.gmra.mxu0 %v3769
        %v4157 = vpop.f32.mrf.mxu0
        %v4158 = vadd.f32 %v4129, %v4157
        %4159 = vmatmul.f32.gmra.mxu0 %v3772
        %v4160 = vpop.f32.mrf.mxu0
        %v4161 = vadd.f32 %v4132, %v4160
        %4162 = vmatmul.f32.gmra.mxu0 %v3775
        %v4163 = vpop.f32.mrf.mxu0
        %v4164 = vadd.f32 %v4135, %v4163
        %4165 = vdwg.mxu0
        %4166 = vmatpush.msra.mxu0 %v3920
        %4167 = vmatpush.msra.mxu0 %v3917
        %4168 = vmatpush.msra.mxu0 %v3914
        %4169 = vmatpush.msra.mxu0 %v3911
        %4170 = vmatpush.msra.mxu0 %v3908
        %4171 = vmatpush.msra.mxu0 %v3905
        %4172 = vmatpush.msra.mxu0 %v3902
        %4173 = vmatpush.msra.mxu0 %v3899
        %4174 = vmatpush.msra.mxu0 %v3896
        %4175 = vmatpush.msra.mxu0 %v3893
        %4176 = vmatpush.msra.mxu0 %v3890
        %4177 = vmatpush.msra.mxu0 %v3887
        %4178 = vmatpush.msra.mxu0 %v3884
        %4179 = vmatpush.msra.mxu0 %v3881
        %4180 = vmatpush.msra.mxu0 %v3878
        %4181 = vmatpush.msra.mxu0 %v3875
        %4182 = vmatmul.f32.gmra.mxu0 %v3767
        %v4183 = vpop.f32.mrf.mxu0
        %v4184 = vadd.f32 %v4155, %v4183
        %4185 = vmatmul.f32.gmra.mxu0 %v3770
        %v4186 = vpop.f32.mrf.mxu0
        %v4187 = vadd.f32 %v4158, %v4186
        %4188 = vmatmul.f32.gmra.mxu0 %v3773
        %v4189 = vpop.f32.mrf.mxu0
        %v4190 = vadd.f32 %v4161, %v4189
        %4191 = vmatmul.f32.gmra.mxu0 %v3776
        %v4192 = vpop.f32.mrf.mxu0
        %v4193 = vadd.f32 %v4164, %v4192
        %4194 = vdwg.mxu0
        %v4195 = vtanh.pop %v4010
        %v4196 = vtanh.pop %v4097
        %v4197 = vtanh.pop %v4184
        %v4198 = vtanh.pop %v4013
        %v4199 = vtanh.pop %v4100
        %v4200 = vtanh.pop %v4187
        %v4201 = vtanh.pop %v4016
        %v4202 = vtanh.pop %v4103
        %v4203 = vtanh.pop %v4190
        %v4204 = vtanh.pop %v4019
        %v4205 = vtanh.pop %v4106
        %v4206 = vtanh.pop %v4193
        %v4207 = vld [vmem:[#allocation9] sm:$0xff]
        %v4208 = vld [vmem:[#allocation9 + $0x8] sm:$0xff]
        %v4209 = vld [vmem:[#allocation9 + $0x10] sm:$0xff]
        %v4210 = vld [vmem:[#allocation9 + $0x18] sm:$0xff]
        %v4211 = vld [vmem:[#allocation9 + $0x20] sm:$0xff]
        %v4212 = vld [vmem:[#allocation9 + $0x28] sm:$0xff]
        %v4213 = vld [vmem:[#allocation9 + $0x30] sm:$0xff]
        %v4214 = vld [vmem:[#allocation9 + $0x38] sm:$0xff]
        %v4215 = vld [vmem:[#allocation9 + $0x40] sm:$0xff]
        %v4216 = vld [vmem:[#allocation9 + $0x48] sm:$0xff]
        %v4217 = vld [vmem:[#allocation9 + $0x50] sm:$0xff]
        %v4218 = vld [vmem:[#allocation9 + $0x58] sm:$0xff]
        %v4219 = vmul.f32 %v4195, %v4207
        %v4220 = vmul.f32 %v4196, %v4208
        %v4221 = vmul.f32 %v4197, %v4209
        %v4222 = vmul.f32 %v4198, %v4210
        %v4223 = vmul.f32 %v4199, %v4211
        %v4224 = vmul.f32 %v4200, %v4212
        %v4225 = vmul.f32 %v4201, %v4213
        %v4226 = vmul.f32 %v4202, %v4214
        %v4227 = vmul.f32 %v4203, %v4215
        %v4228 = vmul.f32 %v4204, %v4216
        %v4229 = vmul.f32 %v4205, %v4217
        %v4230 = vmul.f32 %v4206, %v4218
        %s4231 = scalar_lea.vmem %s242, 192 [#allocation10]
        %4232 = vst [vmem:[%s4231] sm:$0xff] %v4219
        %4233 = vst [vmem:[%s4231 + $0x8] sm:$0xff] %v4220
        %4234 = vst [vmem:[%s4231 + $0x10] sm:$0xff] %v4221
        %4235 = vst [vmem:[%s4231 + $0x18] sm:$0xff] %v4222
        %4236 = vst [vmem:[%s4231 + $0x20] sm:$0xff] %v4223
        %4237 = vst [vmem:[%s4231 + $0x28] sm:$0xff] %v4224
        %4238 = vst [vmem:[%s4231 + $0x30] sm:$0xff] %v4225
        %4239 = vst [vmem:[%s4231 + $0x38] sm:$0xff] %v4226
        %4240 = vst [vmem:[%s4231 + $0x40] sm:$0xff] %v4227
        %4241 = vst [vmem:[%s4231 + $0x48] sm:$0xff] %v4228
        %4242 = vst [vmem:[%s4231 + $0x50] sm:$0xff] %v4229
        %4243 = vst [vmem:[%s4231 + $0x58] sm:$0xff] %v4230
        %4244 = vst [vmem:[#allocation2 + $0x8] sm:$0xff] %v4219
        %4245 = vst [vmem:[#allocation2 + $0x10] sm:$0xff] %v4220
        %4246 = vst [vmem:[#allocation2 + $0x18] sm:$0xff] %v4221
        %4247 = vst [vmem:[#allocation2 + $0x30] sm:$0xff] %v4222
        %4248 = vst [vmem:[#allocation2 + $0x38] sm:$0xff] %v4223
        %4249 = vst [vmem:[#allocation2 + $0x40] sm:$0xff] %v4224
        %4250 = vst [vmem:[#allocation2 + $0x58] sm:$0xff] %v4225
        %4251 = vst [vmem:[#allocation2 + $0x60] sm:$0xff] %v4226
        %4252 = vst [vmem:[#allocation2 + $0x68] sm:$0xff] %v4227
        %4253 = vst [vmem:[#allocation2 + $0x80] sm:$0xff] %v4228
        %4254 = vst [vmem:[#allocation2 + $0x88] sm:$0xff] %v4229
        %4255 = vst [vmem:[#allocation2 + $0x90] sm:$0xff] %v4230
        %v4256 = vld [vmem:[#allocation2] sm:$0xff]
        %v4257 = vld [vmem:[#allocation2 + $0x8] sm:$0xff]
        %v4258 = vld [vmem:[#allocation2 + $0x10] sm:$0xff]
        %v4259 = vld [vmem:[#allocation2 + $0x18] sm:$0xff]
        %v4260 = vld [vmem:[#allocation2 + $0x28] sm:$0xff]
        %v4261 = vld [vmem:[#allocation2 + $0x30] sm:$0xff]
        %v4262 = vld [vmem:[#allocation2 + $0x38] sm:$0xff]
        %v4263 = vld [vmem:[#allocation2 + $0x40] sm:$0xff]
        %v4264 = vld [vmem:[#allocation2 + $0x50] sm:$0xff]
        %v4265 = vld [vmem:[#allocation2 + $0x58] sm:$0xff]
        %v4266 = vld [vmem:[#allocation2 + $0x60] sm:$0xff]
        %v4267 = vld [vmem:[#allocation2 + $0x68] sm:$0xff]
        %v4268 = vld [vmem:[#allocation2 + $0x78] sm:$0xff]
        %v4269 = vld [vmem:[#allocation2 + $0x80] sm:$0xff]
        %v4270 = vld [vmem:[#allocation2 + $0x88] sm:$0xff]
        %v4271 = vld [vmem:[#allocation2 + $0x90] sm:$0xff]
        %4288 = vrot.lane.b32.xlu0 %v4256, 19
        %v4289 = vpop.permute.xlu0 %4288
        %4290 = vrot.lane.b32.xlu0 %v4257, 19
        %v4291 = vpop.permute.xlu0 %4290
        %4292 = vrot.lane.b32.xlu0 %v4258, 19
        %v4293 = vpop.permute.xlu0 %4292
        %4294 = vrot.lane.b32.xlu0 %v4259, 19
        %v4295 = vpop.permute.xlu0 %4294
        %4296 = vrot.lane.b32.xlu0 %v4260, 19
        %v4297 = vpop.permute.xlu0 %4296
        %4298 = vrot.lane.b32.xlu0 %v4261, 19
        %v4299 = vpop.permute.xlu0 %4298
        %4300 = vrot.lane.b32.xlu0 %v4262, 19
        %v4301 = vpop.permute.xlu0 %4300
        %4302 = vrot.lane.b32.xlu0 %v4263, 19
        %v4303 = vpop.permute.xlu0 %4302
        %4304 = vrot.lane.b32.xlu0 %v4264, 19
        %v4305 = vpop.permute.xlu0 %4304
        %4306 = vrot.lane.b32.xlu0 %v4265, 19
        %v4307 = vpop.permute.xlu0 %4306
        %4308 = vrot.lane.b32.xlu0 %v4266, 19
        %v4309 = vpop.permute.xlu0 %4308
        %4310 = vrot.lane.b32.xlu0 %v4267, 19
        %v4311 = vpop.permute.xlu0 %4310
        %4312 = vrot.lane.b32.xlu0 %v4268, 19
        %v4313 = vpop.permute.xlu0 %4312
        %4314 = vrot.lane.b32.xlu0 %v4269, 19
        %v4315 = vpop.permute.xlu0 %4314
        %4316 = vrot.lane.b32.xlu0 %v4270, 19
        %v4317 = vpop.permute.xlu0 %4316
        %4318 = vrot.lane.b32.xlu0 %v4271, 19
        %v4319 = vpop.permute.xlu0 %4318
        %v4320 = vsel %vm369, %v4289, %v4291
        %v4321 = vsel %vm369, %v4291, %v4293
        %v4322 = vsel %vm369, %v4293, %v4295
        %v4323 = vsel %vm369, %v4297, %v4299
        %v4324 = vsel %vm369, %v4299, %v4301
        %v4325 = vsel %vm369, %v4301, %v4303
        %v4326 = vsel %vm369, %v4305, %v4307
        %v4327 = vsel %vm369, %v4307, %v4309
        %v4328 = vsel %vm369, %v4309, %v4311
        %v4329 = vsel %vm369, %v4313, %v4315
        %v4330 = vsel %vm369, %v4315, %v4317
        %v4331 = vsel %vm369, %v4317, %v4319
        %4344 = vst [vmem:[#allocation3] sm:$0xff] %v4320
        %4345 = vst [vmem:[#allocation3 + $0x8] sm:$0xff] %v4321
        %4346 = vst [vmem:[#allocation3 + $0x10] sm:$0xff] %v4322
        %4347 = vst [vmem:[#allocation3 + $0x18] sm:$0xff] %v4323
        %4348 = vst [vmem:[#allocation3 + $0x20] sm:$0xff] %v4324
        %4349 = vst [vmem:[#allocation3 + $0x28] sm:$0xff] %v4325
        %4350 = vst [vmem:[#allocation3 + $0x30] sm:$0xff] %v4326
        %4351 = vst [vmem:[#allocation3 + $0x38] sm:$0xff] %v4327
        %4352 = vst [vmem:[#allocation3 + $0x40] sm:$0xff] %v4328
        %4353 = vst [vmem:[#allocation3 + $0x48] sm:$0xff] %v4329
        %4354 = vst [vmem:[#allocation3 + $0x50] sm:$0xff] %v4330
        %4355 = vst [vmem:[#allocation3 + $0x58] sm:$0xff] %v4331
        %v4356 = vld [vmem:[#allocation2] sm:$0xff]
        %v4357 = vld [vmem:[#allocation2 + $0x8] sm:$0xff]
        %v4358 = vld [vmem:[#allocation2 + $0x10] sm:$0xff]
        %v4359 = vld [vmem:[#allocation2 + $0x18] sm:$0xff]
        %v4360 = vld [vmem:[#allocation2 + $0x28] sm:$0xff]
        %v4361 = vld [vmem:[#allocation2 + $0x30] sm:$0xff]
        %v4362 = vld [vmem:[#allocation2 + $0x38] sm:$0xff]
        %v4363 = vld [vmem:[#allocation2 + $0x40] sm:$0xff]
        %v4364 = vld [vmem:[#allocation2 + $0x50] sm:$0xff]
        %v4365 = vld [vmem:[#allocation2 + $0x58] sm:$0xff]
        %v4366 = vld [vmem:[#allocation2 + $0x60] sm:$0xff]
        %v4367 = vld [vmem:[#allocation2 + $0x68] sm:$0xff]
        %v4368 = vld [vmem:[#allocation2 + $0x78] sm:$0xff]
        %v4369 = vld [vmem:[#allocation2 + $0x80] sm:$0xff]
        %v4370 = vld [vmem:[#allocation2 + $0x88] sm:$0xff]
        %v4371 = vld [vmem:[#allocation2 + $0x90] sm:$0xff]
        %4388 = vrot.lane.b32.xlu0 %v4356, 18
        %v4389 = vpop.permute.xlu0 %4388
        %4390 = vrot.lane.b32.xlu0 %v4357, 18
        %v4391 = vpop.permute.xlu0 %4390
        %4392 = vrot.lane.b32.xlu0 %v4358, 18
        %v4393 = vpop.permute.xlu0 %4392
        %4394 = vrot.lane.b32.xlu0 %v4359, 18
        %v4395 = vpop.permute.xlu0 %4394
        %4396 = vrot.lane.b32.xlu0 %v4360, 18
        %v4397 = vpop.permute.xlu0 %4396
        %4398 = vrot.lane.b32.xlu0 %v4361, 18
        %v4399 = vpop.permute.xlu0 %4398
        %4400 = vrot.lane.b32.xlu0 %v4362, 18
        %v4401 = vpop.permute.xlu0 %4400
        %4402 = vrot.lane.b32.xlu0 %v4363, 18
        %v4403 = vpop.permute.xlu0 %4402
        %4404 = vrot.lane.b32.xlu0 %v4364, 18
        %v4405 = vpop.permute.xlu0 %4404
        %4406 = vrot.lane.b32.xlu0 %v4365, 18
        %v4407 = vpop.permute.xlu0 %4406
        %4408 = vrot.lane.b32.xlu0 %v4366, 18
        %v4409 = vpop.permute.xlu0 %4408
        %4410 = vrot.lane.b32.xlu0 %v4367, 18
        %v4411 = vpop.permute.xlu0 %4410
        %4412 = vrot.lane.b32.xlu0 %v4368, 18
        %v4413 = vpop.permute.xlu0 %4412
        %4414 = vrot.lane.b32.xlu0 %v4369, 18
        %v4415 = vpop.permute.xlu0 %4414
        %4416 = vrot.lane.b32.xlu0 %v4370, 18
        %v4417 = vpop.permute.xlu0 %4416
        %4418 = vrot.lane.b32.xlu0 %v4371, 18
        %v4419 = vpop.permute.xlu0 %4418
        %v4420 = vsel %vm470, %v4389, %v4391
        %v4421 = vsel %vm470, %v4391, %v4393
        %v4422 = vsel %vm470, %v4393, %v4395
        %v4423 = vsel %vm470, %v4397, %v4399
        %v4424 = vsel %vm470, %v4399, %v4401
        %v4425 = vsel %vm470, %v4401, %v4403
        %v4426 = vsel %vm470, %v4405, %v4407
        %v4427 = vsel %vm470, %v4407, %v4409
        %v4428 = vsel %vm470, %v4409, %v4411
        %v4429 = vsel %vm470, %v4413, %v4415
        %v4430 = vsel %vm470, %v4415, %v4417
        %v4431 = vsel %vm470, %v4417, %v4419
        %4444 = vst [vmem:[#allocation3 + $0x60] sm:$0xff] %v4420
        %4445 = vst [vmem:[#allocation3 + $0x68] sm:$0xff] %v4421
        %4446 = vst [vmem:[#allocation3 + $0x70] sm:$0xff] %v4422
        %4447 = vst [vmem:[#allocation3 + $0x78] sm:$0xff] %v4423
        %4448 = vst [vmem:[#allocation3 + $0x80] sm:$0xff] %v4424
        %4449 = vst [vmem:[#allocation3 + $0x88] sm:$0xff] %v4425
        %4450 = vst [vmem:[#allocation3 + $0x90] sm:$0xff] %v4426
        %4451 = vst [vmem:[#allocation3 + $0x98] sm:$0xff] %v4427
        %4452 = vst [vmem:[#allocation3 + $0xa0] sm:$0xff] %v4428
        %4453 = vst [vmem:[#allocation3 + $0xa8] sm:$0xff] %v4429
        %4454 = vst [vmem:[#allocation3 + $0xb0] sm:$0xff] %v4430
        %4455 = vst [vmem:[#allocation3 + $0xb8] sm:$0xff] %v4431
        %v4456 = vld [vmem:[#allocation2] sm:$0xff]
        %v4457 = vld [vmem:[#allocation2 + $0x8] sm:$0xff]
        %v4458 = vld [vmem:[#allocation2 + $0x10] sm:$0xff]
        %v4459 = vld [vmem:[#allocation2 + $0x18] sm:$0xff]
        %v4460 = vld [vmem:[#allocation2 + $0x28] sm:$0xff]
        %v4461 = vld [vmem:[#allocation2 + $0x30] sm:$0xff]
        %v4462 = vld [vmem:[#allocation2 + $0x38] sm:$0xff]
        %v4463 = vld [vmem:[#allocation2 + $0x40] sm:$0xff]
        %v4464 = vld [vmem:[#allocation2 + $0x50] sm:$0xff]
        %v4465 = vld [vmem:[#allocation2 + $0x58] sm:$0xff]
        %v4466 = vld [vmem:[#allocation2 + $0x60] sm:$0xff]
        %v4467 = vld [vmem:[#allocation2 + $0x68] sm:$0xff]
        %v4468 = vld [vmem:[#allocation2 + $0x78] sm:$0xff]
        %v4469 = vld [vmem:[#allocation2 + $0x80] sm:$0xff]
        %v4470 = vld [vmem:[#allocation2 + $0x88] sm:$0xff]
        %v4471 = vld [vmem:[#allocation2 + $0x90] sm:$0xff]
        %4488 = vrot.lane.b32.xlu0 %v4456, 17
        %v4489 = vpop.permute.xlu0 %4488
        %4490 = vrot.lane.b32.xlu0 %v4457, 17
        %v4491 = vpop.permute.xlu0 %4490
        %4492 = vrot.lane.b32.xlu0 %v4458, 17
        %v4493 = vpop.permute.xlu0 %4492
        %4494 = vrot.lane.b32.xlu0 %v4459, 17
        %v4495 = vpop.permute.xlu0 %4494
        %4496 = vrot.lane.b32.xlu0 %v4460, 17
        %v4497 = vpop.permute.xlu0 %4496
        %4498 = vrot.lane.b32.xlu0 %v4461, 17
        %v4499 = vpop.permute.xlu0 %4498
        %4500 = vrot.lane.b32.xlu0 %v4462, 17
        %v4501 = vpop.permute.xlu0 %4500
        %4502 = vrot.lane.b32.xlu0 %v4463, 17
        %v4503 = vpop.permute.xlu0 %4502
        %4504 = vrot.lane.b32.xlu0 %v4464, 17
        %v4505 = vpop.permute.xlu0 %4504
        %4506 = vrot.lane.b32.xlu0 %v4465, 17
        %v4507 = vpop.permute.xlu0 %4506
        %4508 = vrot.lane.b32.xlu0 %v4466, 17
        %v4509 = vpop.permute.xlu0 %4508
        %4510 = vrot.lane.b32.xlu0 %v4467, 17
        %v4511 = vpop.permute.xlu0 %4510
        %4512 = vrot.lane.b32.xlu0 %v4468, 17
        %v4513 = vpop.permute.xlu0 %4512
        %4514 = vrot.lane.b32.xlu0 %v4469, 17
        %v4515 = vpop.permute.xlu0 %4514
        %4516 = vrot.lane.b32.xlu0 %v4470, 17
        %v4517 = vpop.permute.xlu0 %4516
        %4518 = vrot.lane.b32.xlu0 %v4471, 17
        %v4519 = vpop.permute.xlu0 %4518
        %v4520 = vsel %vm571, %v4489, %v4491
        %v4521 = vsel %vm571, %v4491, %v4493
        %v4522 = vsel %vm571, %v4493, %v4495
        %v4523 = vsel %vm571, %v4497, %v4499
        %v4524 = vsel %vm571, %v4499, %v4501
        %v4525 = vsel %vm571, %v4501, %v4503
        %v4526 = vsel %vm571, %v4505, %v4507
        %v4527 = vsel %vm571, %v4507, %v4509
        %v4528 = vsel %vm571, %v4509, %v4511
        %v4529 = vsel %vm571, %v4513, %v4515
        %v4530 = vsel %vm571, %v4515, %v4517
        %v4531 = vsel %vm571, %v4517, %v4519
        %4544 = vst [vmem:[#allocation3 + $0xc0] sm:$0xff] %v4520
        %4545 = vst [vmem:[#allocation3 + $0xc8] sm:$0xff] %v4521
        %4546 = vst [vmem:[#allocation3 + $0xd0] sm:$0xff] %v4522
        %4547 = vst [vmem:[#allocation3 + $0xd8] sm:$0xff] %v4523
        %4548 = vst [vmem:[#allocation3 + $0xe0] sm:$0xff] %v4524
        %4549 = vst [vmem:[#allocation3 + $0xe8] sm:$0xff] %v4525
        %4550 = vst [vmem:[#allocation3 + $0xf0] sm:$0xff] %v4526
        %4551 = vst [vmem:[#allocation3 + $0xf8] sm:$0xff] %v4527
        %4552 = vst [vmem:[#allocation3 + $0x100] sm:$0xff] %v4528
        %4553 = vst [vmem:[#allocation3 + $0x108] sm:$0xff] %v4529
        %4554 = vst [vmem:[#allocation3 + $0x110] sm:$0xff] %v4530
        %4555 = vst [vmem:[#allocation3 + $0x118] sm:$0xff] %v4531
        %v4556 = vld [vmem:[#allocation2] sm:$0xff]
        %v4557 = vld [vmem:[#allocation2 + $0x8] sm:$0xff]
        %v4558 = vld [vmem:[#allocation2 + $0x10] sm:$0xff]
        %v4559 = vld [vmem:[#allocation2 + $0x18] sm:$0xff]
        %v4560 = vld [vmem:[#allocation2 + $0x28] sm:$0xff]
        %v4561 = vld [vmem:[#allocation2 + $0x30] sm:$0xff]
        %v4562 = vld [vmem:[#allocation2 + $0x38] sm:$0xff]
        %v4563 = vld [vmem:[#allocation2 + $0x40] sm:$0xff]
        %v4564 = vld [vmem:[#allocation2 + $0x50] sm:$0xff]
        %v4565 = vld [vmem:[#allocation2 + $0x58] sm:$0xff]
        %v4566 = vld [vmem:[#allocation2 + $0x60] sm:$0xff]
        %v4567 = vld [vmem:[#allocation2 + $0x68] sm:$0xff]
        %v4568 = vld [vmem:[#allocation2 + $0x78] sm:$0xff]
        %v4569 = vld [vmem:[#allocation2 + $0x80] sm:$0xff]
        %v4570 = vld [vmem:[#allocation2 + $0x88] sm:$0xff]
        %v4571 = vld [vmem:[#allocation2 + $0x90] sm:$0xff]
        %4588 = vrot.lane.b32.xlu0 %v4556, 1
        %v4589 = vpop.permute.xlu0 %4588
        %4590 = vrot.lane.b32.xlu0 %v4557, 1
        %v4591 = vpop.permute.xlu0 %4590
        %4592 = vrot.lane.b32.xlu0 %v4558, 1
        %v4593 = vpop.permute.xlu0 %4592
        %4594 = vrot.lane.b32.xlu0 %v4559, 1
        %v4595 = vpop.permute.xlu0 %4594
        %4596 = vrot.lane.b32.xlu0 %v4560, 1
        %v4597 = vpop.permute.xlu0 %4596
        %4598 = vrot.lane.b32.xlu0 %v4561, 1
        %v4599 = vpop.permute.xlu0 %4598
        %4600 = vrot.lane.b32.xlu0 %v4562, 1
        %v4601 = vpop.permute.xlu0 %4600
        %4602 = vrot.lane.b32.xlu0 %v4563, 1
        %v4603 = vpop.permute.xlu0 %4602
        %4604 = vrot.lane.b32.xlu0 %v4564, 1
        %v4605 = vpop.permute.xlu0 %4604
        %4606 = vrot.lane.b32.xlu0 %v4565, 1
        %v4607 = vpop.permute.xlu0 %4606
        %4608 = vrot.lane.b32.xlu0 %v4566, 1
        %v4609 = vpop.permute.xlu0 %4608
        %4610 = vrot.lane.b32.xlu0 %v4567, 1
        %v4611 = vpop.permute.xlu0 %4610
        %4612 = vrot.lane.b32.xlu0 %v4568, 1
        %v4613 = vpop.permute.xlu0 %4612
        %4614 = vrot.lane.b32.xlu0 %v4569, 1
        %v4615 = vpop.permute.xlu0 %4614
        %4616 = vrot.lane.b32.xlu0 %v4570, 1
        %v4617 = vpop.permute.xlu0 %4616
        %4618 = vrot.lane.b32.xlu0 %v4571, 1
        %v4619 = vpop.permute.xlu0 %4618
        %v4620 = vsel %vm672, %v4589, %v4591
        %v4621 = vsel %vm672, %v4591, %v4593
        %v4622 = vsel %vm672, %v4593, %v4595
        %v4623 = vsel %vm672, %v4597, %v4599
        %v4624 = vsel %vm672, %v4599, %v4601
        %v4625 = vsel %vm672, %v4601, %v4603
        %v4626 = vsel %vm672, %v4605, %v4607
        %v4627 = vsel %vm672, %v4607, %v4609
        %v4628 = vsel %vm672, %v4609, %v4611
        %v4629 = vsel %vm672, %v4613, %v4615
        %v4630 = vsel %vm672, %v4615, %v4617
        %v4631 = vsel %vm672, %v4617, %v4619
        %4644 = vst [vmem:[#allocation3 + $0x120] sm:$0xff] %v4620
        %4645 = vst [vmem:[#allocation3 + $0x128] sm:$0xff] %v4621
        %4646 = vst [vmem:[#allocation3 + $0x130] sm:$0xff] %v4622
        %4647 = vst [vmem:[#allocation3 + $0x138] sm:$0xff] %v4623
        %4648 = vst [vmem:[#allocation3 + $0x140] sm:$0xff] %v4624
        %4649 = vst [vmem:[#allocation3 + $0x148] sm:$0xff] %v4625
        %4650 = vst [vmem:[#allocation3 + $0x150] sm:$0xff] %v4626
        %4651 = vst [vmem:[#allocation3 + $0x158] sm:$0xff] %v4627
        %4652 = vst [vmem:[#allocation3 + $0x160] sm:$0xff] %v4628
        %4653 = vst [vmem:[#allocation3 + $0x168] sm:$0xff] %v4629
        %4654 = vst [vmem:[#allocation3 + $0x170] sm:$0xff] %v4630
        %4655 = vst [vmem:[#allocation3 + $0x178] sm:$0xff] %v4631
        %v4656 = vld [vmem:[#allocation2 + $0x8] sm:$0xff]
        %v4657 = vld [vmem:[#allocation2 + $0x10] sm:$0xff]
        %v4658 = vld [vmem:[#allocation2 + $0x18] sm:$0xff]
        %v4659 = vld [vmem:[#allocation2 + $0x30] sm:$0xff]
        %v4660 = vld [vmem:[#allocation2 + $0x38] sm:$0xff]
        %v4661 = vld [vmem:[#allocation2 + $0x40] sm:$0xff]
        %v4662 = vld [vmem:[#allocation2 + $0x58] sm:$0xff]
        %v4663 = vld [vmem:[#allocation2 + $0x60] sm:$0xff]
        %v4664 = vld [vmem:[#allocation2 + $0x68] sm:$0xff]
        %v4665 = vld [vmem:[#allocation2 + $0x80] sm:$0xff]
        %v4666 = vld [vmem:[#allocation2 + $0x88] sm:$0xff]
        %v4667 = vld [vmem:[#allocation2 + $0x90] sm:$0xff]
        %4668 = vst [vmem:[#allocation3 + $0x180] sm:$0xff] %v4656
        %4669 = vst [vmem:[#allocation3 + $0x188] sm:$0xff] %v4657
        %4670 = vst [vmem:[#allocation3 + $0x190] sm:$0xff] %v4658
        %4671 = vst [vmem:[#allocation3 + $0x198] sm:$0xff] %v4659
        %4672 = vst [vmem:[#allocation3 + $0x1a0] sm:$0xff] %v4660
        %4673 = vst [vmem:[#allocation3 + $0x1a8] sm:$0xff] %v4661
        %4674 = vst [vmem:[#allocation3 + $0x1b0] sm:$0xff] %v4662
        %4675 = vst [vmem:[#allocation3 + $0x1b8] sm:$0xff] %v4663
        %4676 = vst [vmem:[#allocation3 + $0x1c0] sm:$0xff] %v4664
        %4677 = vst [vmem:[#allocation3 + $0x1c8] sm:$0xff] %v4665
        %4678 = vst [vmem:[#allocation3 + $0x1d0] sm:$0xff] %v4666
        %4679 = vst [vmem:[#allocation3 + $0x1d8] sm:$0xff] %v4667
        %v4680 = vld [vmem:[#allocation2 + $0x8] sm:$0xff]
        %v4681 = vld [vmem:[#allocation2 + $0x10] sm:$0xff]
        %v4682 = vld [vmem:[#allocation2 + $0x18] sm:$0xff]
        %v4683 = vld [vmem:[#allocation2 + $0x20] sm:$0xff]
        %v4684 = vld [vmem:[#allocation2 + $0x30] sm:$0xff]
        %v4685 = vld [vmem:[#allocation2 + $0x38] sm:$0xff]
        %v4686 = vld [vmem:[#allocation2 + $0x40] sm:$0xff]
        %v4687 = vld [vmem:[#allocation2 + $0x48] sm:$0xff]
        %v4688 = vld [vmem:[#allocation2 + $0x58] sm:$0xff]
        %v4689 = vld [vmem:[#allocation2 + $0x60] sm:$0xff]
        %v4690 = vld [vmem:[#allocation2 + $0x68] sm:$0xff]
        %v4691 = vld [vmem:[#allocation2 + $0x70] sm:$0xff]
        %v4692 = vld [vmem:[#allocation2 + $0x80] sm:$0xff]
        %v4693 = vld [vmem:[#allocation2 + $0x88] sm:$0xff]
        %v4694 = vld [vmem:[#allocation2 + $0x90] sm:$0xff]
        %v4695 = vld [vmem:[#allocation2 + $0x98] sm:$0xff]
        %4712 = vrot.lane.b32.xlu0 %v4680, 127
        %v4713 = vpop.permute.xlu0 %4712
        %4714 = vrot.lane.b32.xlu0 %v4681, 127
        %v4715 = vpop.permute.xlu0 %4714
        %4716 = vrot.lane.b32.xlu0 %v4682, 127
        %v4717 = vpop.permute.xlu0 %4716
        %4718 = vrot.lane.b32.xlu0 %v4683, 127
        %v4719 = vpop.permute.xlu0 %4718
        %4720 = vrot.lane.b32.xlu0 %v4684, 127
        %v4721 = vpop.permute.xlu0 %4720
        %4722 = vrot.lane.b32.xlu0 %v4685, 127
        %v4723 = vpop.permute.xlu0 %4722
        %4724 = vrot.lane.b32.xlu0 %v4686, 127
        %v4725 = vpop.permute.xlu0 %4724
        %4726 = vrot.lane.b32.xlu0 %v4687, 127
        %v4727 = vpop.permute.xlu0 %4726
        %4728 = vrot.lane.b32.xlu0 %v4688, 127
        %v4729 = vpop.permute.xlu0 %4728
        %4730 = vrot.lane.b32.xlu0 %v4689, 127
        %v4731 = vpop.permute.xlu0 %4730
        %4732 = vrot.lane.b32.xlu0 %v4690, 127
        %v4733 = vpop.permute.xlu0 %4732
        %4734 = vrot.lane.b32.xlu0 %v4691, 127
        %v4735 = vpop.permute.xlu0 %4734
        %4736 = vrot.lane.b32.xlu0 %v4692, 127
        %v4737 = vpop.permute.xlu0 %4736
        %4738 = vrot.lane.b32.xlu0 %v4693, 127
        %v4739 = vpop.permute.xlu0 %4738
        %4740 = vrot.lane.b32.xlu0 %v4694, 127
        %v4741 = vpop.permute.xlu0 %4740
        %4742 = vrot.lane.b32.xlu0 %v4695, 127
        %v4743 = vpop.permute.xlu0 %4742
        %v4744 = vsel %vm797, %v4713, %v4715
        %v4745 = vsel %vm797, %v4715, %v4717
        %v4746 = vsel %vm797, %v4717, %v4719
        %v4747 = vsel %vm797, %v4721, %v4723
        %v4748 = vsel %vm797, %v4723, %v4725
        %v4749 = vsel %vm797, %v4725, %v4727
        %v4750 = vsel %vm797, %v4729, %v4731
        %v4751 = vsel %vm797, %v4731, %v4733
        %v4752 = vsel %vm797, %v4733, %v4735
        %v4753 = vsel %vm797, %v4737, %v4739
        %v4754 = vsel %vm797, %v4739, %v4741
        %v4755 = vsel %vm797, %v4741, %v4743
        %4768 = vst [vmem:[#allocation3 + $0x1e0] sm:$0xff] %v4744
        %4769 = vst [vmem:[#allocation3 + $0x1e8] sm:$0xff] %v4745
        %4770 = vst [vmem:[#allocation3 + $0x1f0] sm:$0xff] %v4746
        %4771 = vst [vmem:[#allocation3 + $0x1f8] sm:$0xff] %v4747
        %4772 = vst [vmem:[#allocation3 + $0x200] sm:$0xff] %v4748
        %4773 = vst [vmem:[#allocation3 + $0x208] sm:$0xff] %v4749
        %4774 = vst [vmem:[#allocation3 + $0x210] sm:$0xff] %v4750
        %4775 = vst [vmem:[#allocation3 + $0x218] sm:$0xff] %v4751
        %4776 = vst [vmem:[#allocation3 + $0x220] sm:$0xff] %v4752
        %4777 = vst [vmem:[#allocation3 + $0x228] sm:$0xff] %v4753
        %4778 = vst [vmem:[#allocation3 + $0x230] sm:$0xff] %v4754
        %4779 = vst [vmem:[#allocation3 + $0x238] sm:$0xff] %v4755
        %v4780 = vld [vmem:[#allocation2 + $0x8] sm:$0xff]
        %v4781 = vld [vmem:[#allocation2 + $0x10] sm:$0xff]
        %v4782 = vld [vmem:[#allocation2 + $0x18] sm:$0xff]
        %v4783 = vld [vmem:[#allocation2 + $0x20] sm:$0xff]
        %v4784 = vld [vmem:[#allocation2 + $0x30] sm:$0xff]
        %v4785 = vld [vmem:[#allocation2 + $0x38] sm:$0xff]
        %v4786 = vld [vmem:[#allocation2 + $0x40] sm:$0xff]
        %v4787 = vld [vmem:[#allocation2 + $0x48] sm:$0xff]
        %v4788 = vld [vmem:[#allocation2 + $0x58] sm:$0xff]
        %v4789 = vld [vmem:[#allocation2 + $0x60] sm:$0xff]
        %v4790 = vld [vmem:[#allocation2 + $0x68] sm:$0xff]
        %v4791 = vld [vmem:[#allocation2 + $0x70] sm:$0xff]
        %v4792 = vld [vmem:[#allocation2 + $0x80] sm:$0xff]
        %v4793 = vld [vmem:[#allocation2 + $0x88] sm:$0xff]
        %v4794 = vld [vmem:[#allocation2 + $0x90] sm:$0xff]
        %v4795 = vld [vmem:[#allocation2 + $0x98] sm:$0xff]
        %4812 = vrot.lane.b32.xlu0 %v4780, 111
        %v4813 = vpop.permute.xlu0 %4812
        %4814 = vrot.lane.b32.xlu0 %v4781, 111
        %v4815 = vpop.permute.xlu0 %4814
        %4816 = vrot.lane.b32.xlu0 %v4782, 111
        %v4817 = vpop.permute.xlu0 %4816
        %4818 = vrot.lane.b32.xlu0 %v4783, 111
        %v4819 = vpop.permute.xlu0 %4818
        %4820 = vrot.lane.b32.xlu0 %v4784, 111
        %v4821 = vpop.permute.xlu0 %4820
        %4822 = vrot.lane.b32.xlu0 %v4785, 111
        %v4823 = vpop.permute.xlu0 %4822
        %4824 = vrot.lane.b32.xlu0 %v4786, 111
        %v4825 = vpop.permute.xlu0 %4824
        %4826 = vrot.lane.b32.xlu0 %v4787, 111
        %v4827 = vpop.permute.xlu0 %4826
        %4828 = vrot.lane.b32.xlu0 %v4788, 111
        %v4829 = vpop.permute.xlu0 %4828
        %4830 = vrot.lane.b32.xlu0 %v4789, 111
        %v4831 = vpop.permute.xlu0 %4830
        %4832 = vrot.lane.b32.xlu0 %v4790, 111
        %v4833 = vpop.permute.xlu0 %4832
        %4834 = vrot.lane.b32.xlu0 %v4791, 111
        %v4835 = vpop.permute.xlu0 %4834
        %4836 = vrot.lane.b32.xlu0 %v4792, 111
        %v4837 = vpop.permute.xlu0 %4836
        %4838 = vrot.lane.b32.xlu0 %v4793, 111
        %v4839 = vpop.permute.xlu0 %4838
        %4840 = vrot.lane.b32.xlu0 %v4794, 111
        %v4841 = vpop.permute.xlu0 %4840
        %4842 = vrot.lane.b32.xlu0 %v4795, 111
        %v4843 = vpop.permute.xlu0 %4842
        %v4844 = vsel %vm898, %v4813, %v4815
        %v4845 = vsel %vm898, %v4815, %v4817
        %v4846 = vsel %vm898, %v4817, %v4819
        %v4847 = vsel %vm898, %v4821, %v4823
        %v4848 = vsel %vm898, %v4823, %v4825
        %v4849 = vsel %vm898, %v4825, %v4827
        %v4850 = vsel %vm898, %v4829, %v4831
        %v4851 = vsel %vm898, %v4831, %v4833
        %v4852 = vsel %vm898, %v4833, %v4835
        %v4853 = vsel %vm898, %v4837, %v4839
        %v4854 = vsel %vm898, %v4839, %v4841
        %v4855 = vsel %vm898, %v4841, %v4843
        %4868 = vst [vmem:[#allocation3 + $0x240] sm:$0xff] %v4844
        %4869 = vst [vmem:[#allocation3 + $0x248] sm:$0xff] %v4845
        %4870 = vst [vmem:[#allocation3 + $0x250] sm:$0xff] %v4846
        %4871 = vst [vmem:[#allocation3 + $0x258] sm:$0xff] %v4847
        %4872 = vst [vmem:[#allocation3 + $0x260] sm:$0xff] %v4848
        %4873 = vst [vmem:[#allocation3 + $0x268] sm:$0xff] %v4849
        %4874 = vst [vmem:[#allocation3 + $0x270] sm:$0xff] %v4850
        %4875 = vst [vmem:[#allocation3 + $0x278] sm:$0xff] %v4851
        %4876 = vst [vmem:[#allocation3 + $0x280] sm:$0xff] %v4852
        %4877 = vst [vmem:[#allocation3 + $0x288] sm:$0xff] %v4853
        %4878 = vst [vmem:[#allocation3 + $0x290] sm:$0xff] %v4854
        %4879 = vst [vmem:[#allocation3 + $0x298] sm:$0xff] %v4855
        %v4880 = vld [vmem:[#allocation2 + $0x8] sm:$0xff]
        %v4881 = vld [vmem:[#allocation2 + $0x10] sm:$0xff]
        %v4882 = vld [vmem:[#allocation2 + $0x18] sm:$0xff]
        %v4883 = vld [vmem:[#allocation2 + $0x20] sm:$0xff]
        %v4884 = vld [vmem:[#allocation2 + $0x30] sm:$0xff]
        %v4885 = vld [vmem:[#allocation2 + $0x38] sm:$0xff]
        %v4886 = vld [vmem:[#allocation2 + $0x40] sm:$0xff]
        %v4887 = vld [vmem:[#allocation2 + $0x48] sm:$0xff]
        %v4888 = vld [vmem:[#allocation2 + $0x58] sm:$0xff]
        %v4889 = vld [vmem:[#allocation2 + $0x60] sm:$0xff]
        %v4890 = vld [vmem:[#allocation2 + $0x68] sm:$0xff]
        %v4891 = vld [vmem:[#allocation2 + $0x70] sm:$0xff]
        %v4892 = vld [vmem:[#allocation2 + $0x80] sm:$0xff]
        %v4893 = vld [vmem:[#allocation2 + $0x88] sm:$0xff]
        %v4894 = vld [vmem:[#allocation2 + $0x90] sm:$0xff]
        %v4895 = vld [vmem:[#allocation2 + $0x98] sm:$0xff]
        %4912 = vrot.lane.b32.xlu0 %v4880, 110
        %v4913 = vpop.permute.xlu0 %4912
        %4914 = vrot.lane.b32.xlu0 %v4881, 110
        %v4915 = vpop.permute.xlu0 %4914
        %4916 = vrot.lane.b32.xlu0 %v4882, 110
        %v4917 = vpop.permute.xlu0 %4916
        %4918 = vrot.lane.b32.xlu0 %v4883, 110
        %v4919 = vpop.permute.xlu0 %4918
        %4920 = vrot.lane.b32.xlu0 %v4884, 110
        %v4921 = vpop.permute.xlu0 %4920
        %4922 = vrot.lane.b32.xlu0 %v4885, 110
        %v4923 = vpop.permute.xlu0 %4922
        %4924 = vrot.lane.b32.xlu0 %v4886, 110
        %v4925 = vpop.permute.xlu0 %4924
        %4926 = vrot.lane.b32.xlu0 %v4887, 110
        %v4927 = vpop.permute.xlu0 %4926
        %4928 = vrot.lane.b32.xlu0 %v4888, 110
        %v4929 = vpop.permute.xlu0 %4928
        %4930 = vrot.lane.b32.xlu0 %v4889, 110
        %v4931 = vpop.permute.xlu0 %4930
        %4932 = vrot.lane.b32.xlu0 %v4890, 110
        %v4933 = vpop.permute.xlu0 %4932
        %4934 = vrot.lane.b32.xlu0 %v4891, 110
        %v4935 = vpop.permute.xlu0 %4934
        %4936 = vrot.lane.b32.xlu0 %v4892, 110
        %v4937 = vpop.permute.xlu0 %4936
        %4938 = vrot.lane.b32.xlu0 %v4893, 110
        %v4939 = vpop.permute.xlu0 %4938
        %4940 = vrot.lane.b32.xlu0 %v4894, 110
        %v4941 = vpop.permute.xlu0 %4940
        %4942 = vrot.lane.b32.xlu0 %v4895, 110
        %v4943 = vpop.permute.xlu0 %4942
        %v4944 = vsel %vm999, %v4913, %v4915
        %v4945 = vsel %vm999, %v4915, %v4917
        %v4946 = vsel %vm999, %v4917, %v4919
        %v4947 = vsel %vm999, %v4921, %v4923
        %v4948 = vsel %vm999, %v4923, %v4925
        %v4949 = vsel %vm999, %v4925, %v4927
        %v4950 = vsel %vm999, %v4929, %v4931
        %v4951 = vsel %vm999, %v4931, %v4933
        %v4952 = vsel %vm999, %v4933, %v4935
        %v4953 = vsel %vm999, %v4937, %v4939
        %v4954 = vsel %vm999, %v4939, %v4941
        %v4955 = vsel %vm999, %v4941, %v4943
        %4968 = vst [vmem:[#allocation3 + $0x2a0] sm:$0xff] %v4944
        %4969 = vst [vmem:[#allocation3 + $0x2a8] sm:$0xff] %v4945
        %4970 = vst [vmem:[#allocation3 + $0x2b0] sm:$0xff] %v4946
        %4971 = vst [vmem:[#allocation3 + $0x2b8] sm:$0xff] %v4947
        %4972 = vst [vmem:[#allocation3 + $0x2c0] sm:$0xff] %v4948
        %4973 = vst [vmem:[#allocation3 + $0x2c8] sm:$0xff] %v4949
        %4974 = vst [vmem:[#allocation3 + $0x2d0] sm:$0xff] %v4950
        %4975 = vst [vmem:[#allocation3 + $0x2d8] sm:$0xff] %v4951
        %4976 = vst [vmem:[#allocation3 + $0x2e0] sm:$0xff] %v4952
        %4977 = vst [vmem:[#allocation3 + $0x2e8] sm:$0xff] %v4953
        %4978 = vst [vmem:[#allocation3 + $0x2f0] sm:$0xff] %v4954
        %4979 = vst [vmem:[#allocation3 + $0x2f8] sm:$0xff] %v4955
        %v4980 = vld [vmem:[#allocation2 + $0x8] sm:$0xff]
        %v4981 = vld [vmem:[#allocation2 + $0x10] sm:$0xff]
        %v4982 = vld [vmem:[#allocation2 + $0x18] sm:$0xff]
        %v4983 = vld [vmem:[#allocation2 + $0x20] sm:$0xff]
        %v4984 = vld [vmem:[#allocation2 + $0x30] sm:$0xff]
        %v4985 = vld [vmem:[#allocation2 + $0x38] sm:$0xff]
        %v4986 = vld [vmem:[#allocation2 + $0x40] sm:$0xff]
        %v4987 = vld [vmem:[#allocation2 + $0x48] sm:$0xff]
        %v4988 = vld [vmem:[#allocation2 + $0x58] sm:$0xff]
        %v4989 = vld [vmem:[#allocation2 + $0x60] sm:$0xff]
        %v4990 = vld [vmem:[#allocation2 + $0x68] sm:$0xff]
        %v4991 = vld [vmem:[#allocation2 + $0x70] sm:$0xff]
        %v4992 = vld [vmem:[#allocation2 + $0x80] sm:$0xff]
        %v4993 = vld [vmem:[#allocation2 + $0x88] sm:$0xff]
        %v4994 = vld [vmem:[#allocation2 + $0x90] sm:$0xff]
        %v4995 = vld [vmem:[#allocation2 + $0x98] sm:$0xff]
        %5012 = vrot.lane.b32.xlu0 %v4980, 109
        %v5013 = vpop.permute.xlu0 %5012
        %5014 = vrot.lane.b32.xlu0 %v4981, 109
        %v5015 = vpop.permute.xlu0 %5014
        %5016 = vrot.lane.b32.xlu0 %v4982, 109
        %v5017 = vpop.permute.xlu0 %5016
        %5018 = vrot.lane.b32.xlu0 %v4983, 109
        %v5019 = vpop.permute.xlu0 %5018
        %5020 = vrot.lane.b32.xlu0 %v4984, 109
        %v5021 = vpop.permute.xlu0 %5020
        %5022 = vrot.lane.b32.xlu0 %v4985, 109
        %v5023 = vpop.permute.xlu0 %5022
        %5024 = vrot.lane.b32.xlu0 %v4986, 109
        %v5025 = vpop.permute.xlu0 %5024
        %5026 = vrot.lane.b32.xlu0 %v4987, 109
        %v5027 = vpop.permute.xlu0 %5026
        %5028 = vrot.lane.b32.xlu0 %v4988, 109
        %v5029 = vpop.permute.xlu0 %5028
        %5030 = vrot.lane.b32.xlu0 %v4989, 109
        %v5031 = vpop.permute.xlu0 %5030
        %5032 = vrot.lane.b32.xlu0 %v4990, 109
        %v5033 = vpop.permute.xlu0 %5032
        %5034 = vrot.lane.b32.xlu0 %v4991, 109
        %v5035 = vpop.permute.xlu0 %5034
        %5036 = vrot.lane.b32.xlu0 %v4992, 109
        %v5037 = vpop.permute.xlu0 %5036
        %5038 = vrot.lane.b32.xlu0 %v4993, 109
        %v5039 = vpop.permute.xlu0 %5038
        %5040 = vrot.lane.b32.xlu0 %v4994, 109
        %v5041 = vpop.permute.xlu0 %5040
        %5042 = vrot.lane.b32.xlu0 %v4995, 109
        %v5043 = vpop.permute.xlu0 %5042
        %v5044 = vsel %vm1100, %v5013, %v5015
        %v5045 = vsel %vm1100, %v5015, %v5017
        %v5046 = vsel %vm1100, %v5017, %v5019
        %v5047 = vsel %vm1100, %v5021, %v5023
        %v5048 = vsel %vm1100, %v5023, %v5025
        %v5049 = vsel %vm1100, %v5025, %v5027
        %v5050 = vsel %vm1100, %v5029, %v5031
        %v5051 = vsel %vm1100, %v5031, %v5033
        %v5052 = vsel %vm1100, %v5033, %v5035
        %v5053 = vsel %vm1100, %v5037, %v5039
        %v5054 = vsel %vm1100, %v5039, %v5041
        %v5055 = vsel %vm1100, %v5041, %v5043
        %5068 = vst [vmem:[#allocation3 + $0x300] sm:$0xff] %v5044
        %5069 = vst [vmem:[#allocation3 + $0x308] sm:$0xff] %v5045
        %5070 = vst [vmem:[#allocation3 + $0x310] sm:$0xff] %v5046
        %5071 = vst [vmem:[#allocation3 + $0x318] sm:$0xff] %v5047
        %5072 = vst [vmem:[#allocation3 + $0x320] sm:$0xff] %v5048
        %5073 = vst [vmem:[#allocation3 + $0x328] sm:$0xff] %v5049
        %5074 = vst [vmem:[#allocation3 + $0x330] sm:$0xff] %v5050
        %5075 = vst [vmem:[#allocation3 + $0x338] sm:$0xff] %v5051
        %5076 = vst [vmem:[#allocation3 + $0x340] sm:$0xff] %v5052
        %5077 = vst [vmem:[#allocation3 + $0x348] sm:$0xff] %v5053
        %5078 = vst [vmem:[#allocation3 + $0x350] sm:$0xff] %v5054
        %5079 = vst [vmem:[#allocation3 + $0x358] sm:$0xff] %v5055
        %v5080 = vld [vmem:[#allocation7] sm:$0xff]
        %v5081 = vld [vmem:[#allocation7 + $0x8] sm:$0xff]
        %v5082 = vld [vmem:[#allocation7 + $0x10] sm:$0xff]
        %v5083 = vld [vmem:[#allocation7 + $0x18] sm:$0xff]
        %v5084 = vld [vmem:[#allocation7 + $0x20] sm:$0xff]
        %v5085 = vld [vmem:[#allocation7 + $0x28] sm:$0xff]
        %v5086 = vld [vmem:[#allocation7 + $0x30] sm:$0xff]
        %v5087 = vld [vmem:[#allocation7 + $0x38] sm:$0xff]
        %v5088 = vld [vmem:[#allocation7 + $0x40] sm:$0xff]
        %v5089 = vld [vmem:[#allocation7 + $0x48] sm:$0xff]
        %v5090 = vld [vmem:[#allocation7 + $0x50] sm:$0xff]
        %v5091 = vld [vmem:[#allocation7 + $0x58] sm:$0xff]
        %v5092 = vld [vmem:[#allocation3] sm:$0xff]
        %v5093 = vld [vmem:[#allocation3 + $0x8] sm:$0xff]
        %v5094 = vld [vmem:[#allocation3 + $0x10] sm:$0xff]
        %v5095 = vld [vmem:[#allocation3 + $0x18] sm:$0xff]
        %v5096 = vld [vmem:[#allocation3 + $0x20] sm:$0xff]
        %v5097 = vld [vmem:[#allocation3 + $0x28] sm:$0xff]
        %v5098 = vld [vmem:[#allocation3 + $0x30] sm:$0xff]
        %v5099 = vld [vmem:[#allocation3 + $0x38] sm:$0xff]
        %v5100 = vld [vmem:[#allocation3 + $0x40] sm:$0xff]
        %v5101 = vld [vmem:[#allocation3 + $0x48] sm:$0xff]
        %v5102 = vld [vmem:[#allocation3 + $0x50] sm:$0xff]
        %v5103 = vld [vmem:[#allocation3 + $0x58] sm:$0xff]
        %v5104 = vld [vmem:[#allocation3 + $0x60] sm:$0xff]
        %v5105 = vld [vmem:[#allocation3 + $0x68] sm:$0xff]
        %v5106 = vld [vmem:[#allocation3 + $0x70] sm:$0xff]
        %v5107 = vld [vmem:[#allocation3 + $0x78] sm:$0xff]
        %v5108 = vld [vmem:[#allocation3 + $0x80] sm:$0xff]
        %v5109 = vld [vmem:[#allocation3 + $0x88] sm:$0xff]
        %v5110 = vld [vmem:[#allocation3 + $0x90] sm:$0xff]
        %v5111 = vld [vmem:[#allocation3 + $0x98] sm:$0xff]
        %v5112 = vld [vmem:[#allocation3 + $0xa0] sm:$0xff]
        %v5113 = vld [vmem:[#allocation3 + $0xa8] sm:$0xff]
        %v5114 = vld [vmem:[#allocation3 + $0xb0] sm:$0xff]
        %v5115 = vld [vmem:[#allocation3 + $0xb8] sm:$0xff]
        %v5116 = vld [vmem:[#allocation3 + $0xc0] sm:$0xff]
        %v5117 = vld [vmem:[#allocation3 + $0xc8] sm:$0xff]
        %v5118 = vld [vmem:[#allocation3 + $0xd0] sm:$0xff]
        %v5119 = vld [vmem:[#allocation3 + $0xd8] sm:$0xff]
        %v5120 = vld [vmem:[#allocation3 + $0xe0] sm:$0xff]
        %v5121 = vld [vmem:[#allocation3 + $0xe8] sm:$0xff]
        %v5122 = vld [vmem:[#allocation3 + $0xf0] sm:$0xff]
        %v5123 = vld [vmem:[#allocation3 + $0xf8] sm:$0xff]
        %v5124 = vld [vmem:[#allocation3 + $0x100] sm:$0xff]
        %v5125 = vld [vmem:[#allocation3 + $0x108] sm:$0xff]
        %v5126 = vld [vmem:[#allocation3 + $0x110] sm:$0xff]
        %v5127 = vld [vmem:[#allocation3 + $0x118] sm:$0xff]
        %v5128 = vld [vmem:[#allocation3 + $0x120] sm:$0xff]
        %v5129 = vld [vmem:[#allocation3 + $0x128] sm:$0xff]
        %v5130 = vld [vmem:[#allocation3 + $0x130] sm:$0xff]
        %v5131 = vld [vmem:[#allocation3 + $0x138] sm:$0xff]
        %v5132 = vld [vmem:[#allocation3 + $0x140] sm:$0xff]
        %v5133 = vld [vmem:[#allocation3 + $0x148] sm:$0xff]
        %v5134 = vld [vmem:[#allocation3 + $0x150] sm:$0xff]
        %v5135 = vld [vmem:[#allocation3 + $0x158] sm:$0xff]
        %v5136 = vld [vmem:[#allocation3 + $0x160] sm:$0xff]
        %v5137 = vld [vmem:[#allocation3 + $0x168] sm:$0xff]
        %v5138 = vld [vmem:[#allocation3 + $0x170] sm:$0xff]
        %v5139 = vld [vmem:[#allocation3 + $0x178] sm:$0xff]
        %v5140 = vld [vmem:[#allocation3 + $0x180] sm:$0xff]
        %v5141 = vld [vmem:[#allocation3 + $0x188] sm:$0xff]
        %v5142 = vld [vmem:[#allocation3 + $0x190] sm:$0xff]
        %v5143 = vld [vmem:[#allocation3 + $0x198] sm:$0xff]
        %v5144 = vld [vmem:[#allocation3 + $0x1a0] sm:$0xff]
        %v5145 = vld [vmem:[#allocation3 + $0x1a8] sm:$0xff]
        %v5146 = vld [vmem:[#allocation3 + $0x1b0] sm:$0xff]
        %v5147 = vld [vmem:[#allocation3 + $0x1b8] sm:$0xff]
        %v5148 = vld [vmem:[#allocation3 + $0x1c0] sm:$0xff]
        %v5149 = vld [vmem:[#allocation3 + $0x1c8] sm:$0xff]
        %v5150 = vld [vmem:[#allocation3 + $0x1d0] sm:$0xff]
        %v5151 = vld [vmem:[#allocation3 + $0x1d8] sm:$0xff]
        %v5152 = vld [vmem:[#allocation3 + $0x1e0] sm:$0xff]
        %v5153 = vld [vmem:[#allocation3 + $0x1e8] sm:$0xff]
        %v5154 = vld [vmem:[#allocation3 + $0x1f0] sm:$0xff]
        %v5155 = vld [vmem:[#allocation3 + $0x1f8] sm:$0xff]
        %v5156 = vld [vmem:[#allocation3 + $0x200] sm:$0xff]
        %v5157 = vld [vmem:[#allocation3 + $0x208] sm:$0xff]
        %v5158 = vld [vmem:[#allocation3 + $0x210] sm:$0xff]
        %v5159 = vld [vmem:[#allocation3 + $0x218] sm:$0xff]
        %v5160 = vld [vmem:[#allocation3 + $0x220] sm:$0xff]
        %v5161 = vld [vmem:[#allocation3 + $0x228] sm:$0xff]
        %v5162 = vld [vmem:[#allocation3 + $0x230] sm:$0xff]
        %v5163 = vld [vmem:[#allocation3 + $0x238] sm:$0xff]
        %v5164 = vld [vmem:[#allocation3 + $0x240] sm:$0xff]
        %v5165 = vld [vmem:[#allocation3 + $0x248] sm:$0xff]
        %v5166 = vld [vmem:[#allocation3 + $0x250] sm:$0xff]
        %v5167 = vld [vmem:[#allocation3 + $0x258] sm:$0xff]
        %v5168 = vld [vmem:[#allocation3 + $0x260] sm:$0xff]
        %v5169 = vld [vmem:[#allocation3 + $0x268] sm:$0xff]
        %v5170 = vld [vmem:[#allocation3 + $0x270] sm:$0xff]
        %v5171 = vld [vmem:[#allocation3 + $0x278] sm:$0xff]
        %v5172 = vld [vmem:[#allocation3 + $0x280] sm:$0xff]
        %v5173 = vld [vmem:[#allocation3 + $0x288] sm:$0xff]
        %v5174 = vld [vmem:[#allocation3 + $0x290] sm:$0xff]
        %v5175 = vld [vmem:[#allocation3 + $0x298] sm:$0xff]
        %v5176 = vld [vmem:[#allocation3 + $0x2a0] sm:$0xff]
        %v5177 = vld [vmem:[#allocation3 + $0x2a8] sm:$0xff]
        %v5178 = vld [vmem:[#allocation3 + $0x2b0] sm:$0xff]
        %v5179 = vld [vmem:[#allocation3 + $0x2b8] sm:$0xff]
        %v5180 = vld [vmem:[#allocation3 + $0x2c0] sm:$0xff]
        %v5181 = vld [vmem:[#allocation3 + $0x2c8] sm:$0xff]
        %v5182 = vld [vmem:[#allocation3 + $0x2d0] sm:$0xff]
        %v5183 = vld [vmem:[#allocation3 + $0x2d8] sm:$0xff]
        %v5184 = vld [vmem:[#allocation3 + $0x2e0] sm:$0xff]
        %v5185 = vld [vmem:[#allocation3 + $0x2e8] sm:$0xff]
        %v5186 = vld [vmem:[#allocation3 + $0x2f0] sm:$0xff]
        %v5187 = vld [vmem:[#allocation3 + $0x2f8] sm:$0xff]
        %v5188 = vld [vmem:[#allocation3 + $0x300] sm:$0xff]
        %v5189 = vld [vmem:[#allocation3 + $0x308] sm:$0xff]
        %v5190 = vld [vmem:[#allocation3 + $0x310] sm:$0xff]
        %v5191 = vld [vmem:[#allocation3 + $0x318] sm:$0xff]
        %v5192 = vld [vmem:[#allocation3 + $0x320] sm:$0xff]
        %v5193 = vld [vmem:[#allocation3 + $0x328] sm:$0xff]
        %v5194 = vld [vmem:[#allocation3 + $0x330] sm:$0xff]
        %v5195 = vld [vmem:[#allocation3 + $0x338] sm:$0xff]
        %v5196 = vld [vmem:[#allocation3 + $0x340] sm:$0xff]
        %v5197 = vld [vmem:[#allocation3 + $0x348] sm:$0xff]
        %v5198 = vld [vmem:[#allocation3 + $0x350] sm:$0xff]
        %v5199 = vld [vmem:[#allocation3 + $0x358] sm:$0xff]
        %v5200 = vld [vmem:[#allocation3 + $0x360] sm:$0xff]
        %v5201 = vld [vmem:[#allocation3 + $0x368] sm:$0xff]
        %v5202 = vld [vmem:[#allocation3 + $0x370] sm:$0xff]
        %v5203 = vld [vmem:[#allocation3 + $0x378] sm:$0xff]
        %v5204 = vld [vmem:[#allocation3 + $0x380] sm:$0xff]
        %v5205 = vld [vmem:[#allocation3 + $0x388] sm:$0xff]
        %v5206 = vld [vmem:[#allocation3 + $0x390] sm:$0xff]
        %v5207 = vld [vmem:[#allocation3 + $0x398] sm:$0xff]
        %v5208 = vld [vmem:[#allocation3 + $0x3a0] sm:$0xff]
        %v5209 = vld [vmem:[#allocation3 + $0x3a8] sm:$0xff]
        %v5210 = vld [vmem:[#allocation3 + $0x3b0] sm:$0xff]
        %v5211 = vld [vmem:[#allocation3 + $0x3b8] sm:$0xff]
        %v5212 = vld [vmem:[#allocation3 + $0x3c0] sm:$0xff]
        %v5213 = vld [vmem:[#allocation3 + $0x3c8] sm:$0xff]
        %v5214 = vld [vmem:[#allocation3 + $0x3d0] sm:$0xff]
        %v5215 = vld [vmem:[#allocation3 + $0x3d8] sm:$0xff]
        %v5216 = vld [vmem:[#allocation3 + $0x3e0] sm:$0xff]
        %v5217 = vld [vmem:[#allocation3 + $0x3e8] sm:$0xff]
        %v5218 = vld [vmem:[#allocation3 + $0x3f0] sm:$0xff]
        %v5219 = vld [vmem:[#allocation3 + $0x3f8] sm:$0xff]
        %v5220 = vld [vmem:[#allocation3 + $0x400] sm:$0xff]
        %v5221 = vld [vmem:[#allocation3 + $0x408] sm:$0xff]
        %v5222 = vld [vmem:[#allocation3 + $0x410] sm:$0xff]
        %v5223 = vld [vmem:[#allocation3 + $0x418] sm:$0xff]
        %v5224 = vld [vmem:[#allocation3 + $0x420] sm:$0xff]
        %v5225 = vld [vmem:[#allocation3 + $0x428] sm:$0xff]
        %v5226 = vld [vmem:[#allocation3 + $0x430] sm:$0xff]
        %v5227 = vld [vmem:[#allocation3 + $0x438] sm:$0xff]
        %v5228 = vld [vmem:[#allocation3 + $0x440] sm:$0xff]
        %v5229 = vld [vmem:[#allocation3 + $0x448] sm:$0xff]
        %v5230 = vld [vmem:[#allocation3 + $0x450] sm:$0xff]
        %v5231 = vld [vmem:[#allocation3 + $0x458] sm:$0xff]
        %v5232 = vld [vmem:[#allocation3 + $0x460] sm:$0xff]
        %v5233 = vld [vmem:[#allocation3 + $0x468] sm:$0xff]
        %v5234 = vld [vmem:[#allocation3 + $0x470] sm:$0xff]
        %v5235 = vld [vmem:[#allocation3 + $0x478] sm:$0xff]
        %s5236 = scalar_lea.vmem %s209, 288 [#allocation4]
        %v5237 = vld [vmem:[%s5236] sm:$0xff]
        %v5238 = vld [vmem:[%s5236 + $0x8] sm:$0xff]
        %v5239 = vld [vmem:[%s5236 + $0x10] sm:$0xff]
        %v5240 = vld [vmem:[%s5236 + $0x18] sm:$0xff]
        %v5241 = vld [vmem:[%s5236 + $0x20] sm:$0xff]
        %v5242 = vld [vmem:[%s5236 + $0x28] sm:$0xff]
        %v5243 = vld [vmem:[%s5236 + $0x30] sm:$0xff]
        %v5244 = vld [vmem:[%s5236 + $0x38] sm:$0xff]
        %v5245 = vld [vmem:[%s5236 + $0x40] sm:$0xff]
        %v5246 = vld [vmem:[%s5236 + $0x48] sm:$0xff]
        %v5247 = vld [vmem:[%s5236 + $0x50] sm:$0xff]
        %v5248 = vld [vmem:[%s5236 + $0x58] sm:$0xff]
        %5249 = vmatpush.msra.mxu0 %v5137
        %5250 = vmatpush.msra.mxu0 %v5134
        %5251 = vmatpush.msra.mxu0 %v5131
        %5252 = vmatpush.msra.mxu0 %v5128
        %5253 = vmatpush.msra.mxu0 %v5125
        %5254 = vmatpush.msra.mxu0 %v5122
        %5255 = vmatpush.msra.mxu0 %v5119
        %5256 = vmatpush.msra.mxu0 %v5116
        %5257 = vmatpush.msra.mxu0 %v5113
        %5258 = vmatpush.msra.mxu0 %v5110
        %5259 = vmatpush.msra.mxu0 %v5107
        %5260 = vmatpush.msra.mxu0 %v5104
        %5261 = vmatpush.msra.mxu0 %v5101
        %5262 = vmatpush.msra.mxu0 %v5098
        %5263 = vmatpush.msra.mxu0 %v5095
        %5264 = vmatpush.msra.mxu0 %v5092
        %5265 = vmatmul.f32.gmra.mxu0 %v5080
        %v5266 = vpop.f32.mrf.mxu0
        %v5267 = vadd.f32 %v5237, %v5266
        %5268 = vmatmul.f32.gmra.mxu0 %v5083
        %v5269 = vpop.f32.mrf.mxu0
        %v5270 = vadd.f32 %v5240, %v5269
        %5271 = vmatmul.f32.gmra.mxu0 %v5086
        %v5272 = vpop.f32.mrf.mxu0
        %v5273 = vadd.f32 %v5243, %v5272
        %5274 = vmatmul.f32.gmra.mxu0 %v5089
        %v5275 = vpop.f32.mrf.mxu0
        %v5276 = vadd.f32 %v5246, %v5275
        %5277 = vdwg.mxu0
        %5278 = vmatpush.msra.mxu0 %v5185
        %5279 = vmatpush.msra.mxu0 %v5182
        %5280 = vmatpush.msra.mxu0 %v5179
        %5281 = vmatpush.msra.mxu0 %v5176
        %5282 = vmatpush.msra.mxu0 %v5173
        %5283 = vmatpush.msra.mxu0 %v5170
        %5284 = vmatpush.msra.mxu0 %v5167
        %5285 = vmatpush.msra.mxu0 %v5164
        %5286 = vmatpush.msra.mxu0 %v5161
        %5287 = vmatpush.msra.mxu0 %v5158
        %5288 = vmatpush.msra.mxu0 %v5155
        %5289 = vmatpush.msra.mxu0 %v5152
        %5290 = vmatpush.msra.mxu0 %v5149
        %5291 = vmatpush.msra.mxu0 %v5146
        %5292 = vmatpush.msra.mxu0 %v5143
        %5293 = vmatpush.msra.mxu0 %v5140
        %5294 = vmatmul.f32.gmra.mxu0 %v5081
        %v5295 = vpop.f32.mrf.mxu0
        %v5296 = vadd.f32 %v5267, %v5295
        %5297 = vmatmul.f32.gmra.mxu0 %v5084
        %v5298 = vpop.f32.mrf.mxu0
        %v5299 = vadd.f32 %v5270, %v5298
        %5300 = vmatmul.f32.gmra.mxu0 %v5087
        %v5301 = vpop.f32.mrf.mxu0
        %v5302 = vadd.f32 %v5273, %v5301
        %5303 = vmatmul.f32.gmra.mxu0 %v5090
        %v5304 = vpop.f32.mrf.mxu0
        %v5305 = vadd.f32 %v5276, %v5304
        %5306 = vdwg.mxu0
        %5307 = vmatpush.msra.mxu0 %v5233
        %5308 = vmatpush.msra.mxu0 %v5230
        %5309 = vmatpush.msra.mxu0 %v5227
        %5310 = vmatpush.msra.mxu0 %v5224
        %5311 = vmatpush.msra.mxu0 %v5221
        %5312 = vmatpush.msra.mxu0 %v5218
        %5313 = vmatpush.msra.mxu0 %v5215
        %5314 = vmatpush.msra.mxu0 %v5212
        %5315 = vmatpush.msra.mxu0 %v5209
        %5316 = vmatpush.msra.mxu0 %v5206
        %5317 = vmatpush.msra.mxu0 %v5203
        %5318 = vmatpush.msra.mxu0 %v5200
        %5319 = vmatpush.msra.mxu0 %v5197
        %5320 = vmatpush.msra.mxu0 %v5194
        %5321 = vmatpush.msra.mxu0 %v5191
        %5322 = vmatpush.msra.mxu0 %v5188
        %5323 = vmatmul.f32.gmra.mxu0 %v5082
        %v5324 = vpop.f32.mrf.mxu0
        %v5325 = vadd.f32 %v5296, %v5324
        %5326 = vmatmul.f32.gmra.mxu0 %v5085
        %v5327 = vpop.f32.mrf.mxu0
        %v5328 = vadd.f32 %v5299, %v5327
        %5329 = vmatmul.f32.gmra.mxu0 %v5088
        %v5330 = vpop.f32.mrf.mxu0
        %v5331 = vadd.f32 %v5302, %v5330
        %5332 = vmatmul.f32.gmra.mxu0 %v5091
        %v5333 = vpop.f32.mrf.mxu0
        %v5334 = vadd.f32 %v5305, %v5333
        %5335 = vdwg.mxu0
        %5336 = vmatpush.msra.mxu0 %v5138
        %5337 = vmatpush.msra.mxu0 %v5135
        %5338 = vmatpush.msra.mxu0 %v5132
        %5339 = vmatpush.msra.mxu0 %v5129
        %5340 = vmatpush.msra.mxu0 %v5126
        %5341 = vmatpush.msra.mxu0 %v5123
        %5342 = vmatpush.msra.mxu0 %v5120
        %5343 = vmatpush.msra.mxu0 %v5117
        %5344 = vmatpush.msra.mxu0 %v5114
        %5345 = vmatpush.msra.mxu0 %v5111
        %5346 = vmatpush.msra.mxu0 %v5108
        %5347 = vmatpush.msra.mxu0 %v5105
        %5348 = vmatpush.msra.mxu0 %v5102
        %5349 = vmatpush.msra.mxu0 %v5099
        %5350 = vmatpush.msra.mxu0 %v5096
        %5351 = vmatpush.msra.mxu0 %v5093
        %5352 = vmatmul.f32.gmra.mxu0 %v5080
        %v5353 = vpop.f32.mrf.mxu0
        %v5354 = vadd.f32 %v5238, %v5353
        %5355 = vmatmul.f32.gmra.mxu0 %v5083
        %v5356 = vpop.f32.mrf.mxu0
        %v5357 = vadd.f32 %v5241, %v5356
        %5358 = vmatmul.f32.gmra.mxu0 %v5086
        %v5359 = vpop.f32.mrf.mxu0
        %v5360 = vadd.f32 %v5244, %v5359
        %5361 = vmatmul.f32.gmra.mxu0 %v5089
        %v5362 = vpop.f32.mrf.mxu0
        %v5363 = vadd.f32 %v5247, %v5362
        %5364 = vdwg.mxu0
        %5365 = vmatpush.msra.mxu0 %v5186
        %5366 = vmatpush.msra.mxu0 %v5183
        %5367 = vmatpush.msra.mxu0 %v5180
        %5368 = vmatpush.msra.mxu0 %v5177
        %5369 = vmatpush.msra.mxu0 %v5174
        %5370 = vmatpush.msra.mxu0 %v5171
        %5371 = vmatpush.msra.mxu0 %v5168
        %5372 = vmatpush.msra.mxu0 %v5165
        %5373 = vmatpush.msra.mxu0 %v5162
        %5374 = vmatpush.msra.mxu0 %v5159
        %5375 = vmatpush.msra.mxu0 %v5156
        %5376 = vmatpush.msra.mxu0 %v5153
        %5377 = vmatpush.msra.mxu0 %v5150
        %5378 = vmatpush.msra.mxu0 %v5147
        %5379 = vmatpush.msra.mxu0 %v5144
        %5380 = vmatpush.msra.mxu0 %v5141
        %5381 = vmatmul.f32.gmra.mxu0 %v5081
        %v5382 = vpop.f32.mrf.mxu0
        %v5383 = vadd.f32 %v5354, %v5382
        %5384 = vmatmul.f32.gmra.mxu0 %v5084
        %v5385 = vpop.f32.mrf.mxu0
        %v5386 = vadd.f32 %v5357, %v5385
        %5387 = vmatmul.f32.gmra.mxu0 %v5087
        %v5388 = vpop.f32.mrf.mxu0
        %v5389 = vadd.f32 %v5360, %v5388
        %5390 = vmatmul.f32.gmra.mxu0 %v5090
        %v5391 = vpop.f32.mrf.mxu0
        %v5392 = vadd.f32 %v5363, %v5391
        %5393 = vdwg.mxu0
        %5394 = vmatpush.msra.mxu0 %v5234
        %5395 = vmatpush.msra.mxu0 %v5231
        %5396 = vmatpush.msra.mxu0 %v5228
        %5397 = vmatpush.msra.mxu0 %v5225
        %5398 = vmatpush.msra.mxu0 %v5222
        %5399 = vmatpush.msra.mxu0 %v5219
        %5400 = vmatpush.msra.mxu0 %v5216
        %5401 = vmatpush.msra.mxu0 %v5213
        %5402 = vmatpush.msra.mxu0 %v5210
        %5403 = vmatpush.msra.mxu0 %v5207
        %5404 = vmatpush.msra.mxu0 %v5204
        %5405 = vmatpush.msra.mxu0 %v5201
        %5406 = vmatpush.msra.mxu0 %v5198
        %5407 = vmatpush.msra.mxu0 %v5195
        %5408 = vmatpush.msra.mxu0 %v5192
        %5409 = vmatpush.msra.mxu0 %v5189
        %5410 = vmatmul.f32.gmra.mxu0 %v5082
        %v5411 = vpop.f32.mrf.mxu0
        %v5412 = vadd.f32 %v5383, %v5411
        %5413 = vmatmul.f32.gmra.mxu0 %v5085
        %v5414 = vpop.f32.mrf.mxu0
        %v5415 = vadd.f32 %v5386, %v5414
        %5416 = vmatmul.f32.gmra.mxu0 %v5088
        %v5417 = vpop.f32.mrf.mxu0
        %v5418 = vadd.f32 %v5389, %v5417
        %5419 = vmatmul.f32.gmra.mxu0 %v5091
        %v5420 = vpop.f32.mrf.mxu0
        %v5421 = vadd.f32 %v5392, %v5420
        %5422 = vdwg.mxu0
        %5423 = vmatpush.msra.mxu0 %v5139
        %5424 = vmatpush.msra.mxu0 %v5136
        %5425 = vmatpush.msra.mxu0 %v5133
        %5426 = vmatpush.msra.mxu0 %v5130
        %5427 = vmatpush.msra.mxu0 %v5127
        %5428 = vmatpush.msra.mxu0 %v5124
        %5429 = vmatpush.msra.mxu0 %v5121
        %5430 = vmatpush.msra.mxu0 %v5118
        %5431 = vmatpush.msra.mxu0 %v5115
        %5432 = vmatpush.msra.mxu0 %v5112
        %5433 = vmatpush.msra.mxu0 %v5109
        %5434 = vmatpush.msra.mxu0 %v5106
        %5435 = vmatpush.msra.mxu0 %v5103
        %5436 = vmatpush.msra.mxu0 %v5100
        %5437 = vmatpush.msra.mxu0 %v5097
        %5438 = vmatpush.msra.mxu0 %v5094
        %5439 = vmatmul.f32.gmra.mxu0 %v5080
        %v5440 = vpop.f32.mrf.mxu0
        %v5441 = vadd.f32 %v5239, %v5440
        %5442 = vmatmul.f32.gmra.mxu0 %v5083
        %v5443 = vpop.f32.mrf.mxu0
        %v5444 = vadd.f32 %v5242, %v5443
        %5445 = vmatmul.f32.gmra.mxu0 %v5086
        %v5446 = vpop.f32.mrf.mxu0
        %v5447 = vadd.f32 %v5245, %v5446
        %5448 = vmatmul.f32.gmra.mxu0 %v5089
        %v5449 = vpop.f32.mrf.mxu0
        %v5450 = vadd.f32 %v5248, %v5449
        %5451 = vdwg.mxu0
        %5452 = vmatpush.msra.mxu0 %v5187
        %5453 = vmatpush.msra.mxu0 %v5184
        %5454 = vmatpush.msra.mxu0 %v5181
        %5455 = vmatpush.msra.mxu0 %v5178
        %5456 = vmatpush.msra.mxu0 %v5175
        %5457 = vmatpush.msra.mxu0 %v5172
        %5458 = vmatpush.msra.mxu0 %v5169
        %5459 = vmatpush.msra.mxu0 %v5166
        %5460 = vmatpush.msra.mxu0 %v5163
        %5461 = vmatpush.msra.mxu0 %v5160
        %5462 = vmatpush.msra.mxu0 %v5157
        %5463 = vmatpush.msra.mxu0 %v5154
        %5464 = vmatpush.msra.mxu0 %v5151
        %5465 = vmatpush.msra.mxu0 %v5148
        %5466 = vmatpush.msra.mxu0 %v5145
        %5467 = vmatpush.msra.mxu0 %v5142
        %5468 = vmatmul.f32.gmra.mxu0 %v5081
        %v5469 = vpop.f32.mrf.mxu0
        %v5470 = vadd.f32 %v5441, %v5469
        %5471 = vmatmul.f32.gmra.mxu0 %v5084
        %v5472 = vpop.f32.mrf.mxu0
        %v5473 = vadd.f32 %v5444, %v5472
        %5474 = vmatmul.f32.gmra.mxu0 %v5087
        %v5475 = vpop.f32.mrf.mxu0
        %v5476 = vadd.f32 %v5447, %v5475
        %5477 = vmatmul.f32.gmra.mxu0 %v5090
        %v5478 = vpop.f32.mrf.mxu0
        %v5479 = vadd.f32 %v5450, %v5478
        %5480 = vdwg.mxu0
        %5481 = vmatpush.msra.mxu0 %v5235
        %5482 = vmatpush.msra.mxu0 %v5232
        %5483 = vmatpush.msra.mxu0 %v5229
        %5484 = vmatpush.msra.mxu0 %v5226
        %5485 = vmatpush.msra.mxu0 %v5223
        %5486 = vmatpush.msra.mxu0 %v5220
        %5487 = vmatpush.msra.mxu0 %v5217
        %5488 = vmatpush.msra.mxu0 %v5214
        %5489 = vmatpush.msra.mxu0 %v5211
        %5490 = vmatpush.msra.mxu0 %v5208
        %5491 = vmatpush.msra.mxu0 %v5205
        %5492 = vmatpush.msra.mxu0 %v5202
        %5493 = vmatpush.msra.mxu0 %v5199
        %5494 = vmatpush.msra.mxu0 %v5196
        %5495 = vmatpush.msra.mxu0 %v5193
        %5496 = vmatpush.msra.mxu0 %v5190
        %5497 = vmatmul.f32.gmra.mxu0 %v5082
        %v5498 = vpop.f32.mrf.mxu0
        %v5499 = vadd.f32 %v5470, %v5498
        %5500 = vmatmul.f32.gmra.mxu0 %v5085
        %v5501 = vpop.f32.mrf.mxu0
        %v5502 = vadd.f32 %v5473, %v5501
        %5503 = vmatmul.f32.gmra.mxu0 %v5088
        %v5504 = vpop.f32.mrf.mxu0
        %v5505 = vadd.f32 %v5476, %v5504
        %5506 = vmatmul.f32.gmra.mxu0 %v5091
        %v5507 = vpop.f32.mrf.mxu0
        %v5508 = vadd.f32 %v5479, %v5507
        %5509 = vdwg.mxu0
        %v5510 = vtanh.pop %v5325
        %v5511 = vtanh.pop %v5412
        %v5512 = vtanh.pop %v5499
        %v5513 = vtanh.pop %v5328
        %v5514 = vtanh.pop %v5415
        %v5515 = vtanh.pop %v5502
        %v5516 = vtanh.pop %v5331
        %v5517 = vtanh.pop %v5418
        %v5518 = vtanh.pop %v5505
        %v5519 = vtanh.pop %v5334
        %v5520 = vtanh.pop %v5421
        %v5521 = vtanh.pop %v5508
        %v5522 = vld [vmem:[#allocation9] sm:$0xff]
        %v5523 = vld [vmem:[#allocation9 + $0x8] sm:$0xff]
        %v5524 = vld [vmem:[#allocation9 + $0x10] sm:$0xff]
        %v5525 = vld [vmem:[#allocation9 + $0x18] sm:$0xff]
        %v5526 = vld [vmem:[#allocation9 + $0x20] sm:$0xff]
        %v5527 = vld [vmem:[#allocation9 + $0x28] sm:$0xff]
        %v5528 = vld [vmem:[#allocation9 + $0x30] sm:$0xff]
        %v5529 = vld [vmem:[#allocation9 + $0x38] sm:$0xff]
        %v5530 = vld [vmem:[#allocation9 + $0x40] sm:$0xff]
        %v5531 = vld [vmem:[#allocation9 + $0x48] sm:$0xff]
        %v5532 = vld [vmem:[#allocation9 + $0x50] sm:$0xff]
        %v5533 = vld [vmem:[#allocation9 + $0x58] sm:$0xff]
        %v5534 = vmul.f32 %v5510, %v5522
        %v5535 = vmul.f32 %v5511, %v5523
        %v5536 = vmul.f32 %v5512, %v5524
        %v5537 = vmul.f32 %v5513, %v5525
        %v5538 = vmul.f32 %v5514, %v5526
        %v5539 = vmul.f32 %v5515, %v5527
        %v5540 = vmul.f32 %v5516, %v5528
        %v5541 = vmul.f32 %v5517, %v5529
        %v5542 = vmul.f32 %v5518, %v5530
        %v5543 = vmul.f32 %v5519, %v5531
        %v5544 = vmul.f32 %v5520, %v5532
        %v5545 = vmul.f32 %v5521, %v5533
        %s5546 = scalar_lea.vmem %s242, 288 [#allocation10]
        %5547 = vst [vmem:[%s5546] sm:$0xff] %v5534
        %5548 = vst [vmem:[%s5546 + $0x8] sm:$0xff] %v5535
        %5549 = vst [vmem:[%s5546 + $0x10] sm:$0xff] %v5536
        %5550 = vst [vmem:[%s5546 + $0x18] sm:$0xff] %v5537
        %5551 = vst [vmem:[%s5546 + $0x20] sm:$0xff] %v5538
        %5552 = vst [vmem:[%s5546 + $0x28] sm:$0xff] %v5539
        %5553 = vst [vmem:[%s5546 + $0x30] sm:$0xff] %v5540
        %5554 = vst [vmem:[%s5546 + $0x38] sm:$0xff] %v5541
        %5555 = vst [vmem:[%s5546 + $0x40] sm:$0xff] %v5542
        %5556 = vst [vmem:[%s5546 + $0x48] sm:$0xff] %v5543
        %5557 = vst [vmem:[%s5546 + $0x50] sm:$0xff] %v5544
        %5558 = vst [vmem:[%s5546 + $0x58] sm:$0xff] %v5545
        %5559 = vst [vmem:[#allocation2 + $0x8] sm:$0xff] %v5534
        %5560 = vst [vmem:[#allocation2 + $0x10] sm:$0xff] %v5535
        %5561 = vst [vmem:[#allocation2 + $0x18] sm:$0xff] %v5536
        %5562 = vst [vmem:[#allocation2 + $0x30] sm:$0xff] %v5537
        %5563 = vst [vmem:[#allocation2 + $0x38] sm:$0xff] %v5538
        %5564 = vst [vmem:[#allocation2 + $0x40] sm:$0xff] %v5539
        %5565 = vst [vmem:[#allocation2 + $0x58] sm:$0xff] %v5540
        %5566 = vst [vmem:[#allocation2 + $0x60] sm:$0xff] %v5541
        %5567 = vst [vmem:[#allocation2 + $0x68] sm:$0xff] %v5542
        %5568 = vst [vmem:[#allocation2 + $0x80] sm:$0xff] %v5543
        %5569 = vst [vmem:[#allocation2 + $0x88] sm:$0xff] %v5544
        %5570 = vst [vmem:[#allocation2 + $0x90] sm:$0xff] %v5545
        %s5571 = sand.u32 %s113, 1
        %s5572 = scalar_lea.sflag [#allocation6], %s5571
        %s5573 = sand.u32 %s113, 1
        %s5574 = smul.addr %s5573, 384
        %s5575 = scalar_lea.vmem [#allocation10], %s5574
        // Predicated region
        $region49: #{tpu_custom_call.1} parent=31 // pred_check
          %p5576 = pneg %p123
        $region50: #{tpu_custom_call.1} parent=31 // pred_check_branch
          %5578 = sbr.rel (%p5576) target = $region52
        $region51: #{tpu_custom_call.1} parent=31 // pred_region
          %s5579 = smul.u32 4, %s26
          %5581 = vsyncadd %s5572, 0
          %s5582 = smul.addr %s5579, 12
          %s5583 = smul.addr %s25, 96
          %s5584 = sadd.s32 %s5582, %s5583
          %s5585 = smul.addr %s5584, 8
          %s5586 = scalar_lea.hbm %s3, %s5585
          %s5587 = sshll.u32 %s5575, 4
          %s5588 = int_to_ptr.vmem [resolvable:$true] %s5587
          %s5589 = sshll.u32 %s5586, 4
          %s5590 = int_to_ptr.hbm [resolvable:$true] %s5589
          %5595 = dma.vmem_to_hbm [thread:$0]  %s5588, 6144, %s5590, %s5572, 384, 384, 24
        $region52: #{tpu_custom_call.1} parent=31 // pred_fallthru
          _
      $region32: #{tpu_custom_call.1} parent=5 // pred_fallthru
        _
      %p5596 = scmp.le.s32.totalorder 2, %s16
      // Predicated region
      $region53: #{tpu_custom_call.1} parent=5 // pred_check
        %p5597 = pneg %p5596
      $region54: #{tpu_custom_call.1} parent=5 // pred_check_branch
        %5599 = sbr.rel (%p5597) target = $region56
      $region55: #{tpu_custom_call.1} parent=5 // pred_region
        %s5600 = ssub.s32 %s16, 2
        // Predicated region
        $region57: #{tpu_custom_call.1} parent=55 // pred_check
          %p5601 = pneg %p129
        $region58: #{tpu_custom_call.1} parent=55 // pred_check_branch
          %5603 = sbr.rel (%p5601) target = $region60
        $region59: #{tpu_custom_call.1} parent=55 // pred_region
          %s5604 = sand.u32 %s114, 1
          %s5605 = scalar_lea.sflag [#allocation6], %s5604
          %s5606 = sand.u32 %s114, 1
          %s5607 = smul.addr %s5606, 384
          %s5608 = scalar_lea.vmem [#allocation10], %s5607
          %5610 = dma.done %s5605, 6144
        $region60: #{tpu_custom_call.1} parent=55 // pred_fallthru
          _
      $region56: #{tpu_custom_call.1} parent=5 // pred_fallthru
        _
    $region6: #{tpu_custom_call.1} parent=1 // loop_footer
      %s20 = sadd.s32 1, %s16
    $region7: #{tpu_custom_call.1} parent=1 // loop_footer_branch
      %15 = sbr.rel target = $region3
    $region8: #{tpu_custom_call.1} parent=1 // loop_exit
      _
    %5611 = vsyncpa [#allocation5], 1
    %s5612 = scalar_lea.sflag [#allocation5], 1
    %5613 = vsyncpa %s5612, 1
    %5614 = vsyncpa [#allocation8], 1
    %5615 = vsyncpa [#allocation6], 1
    %s5616 = scalar_lea.sflag [#allocation6], 1
    %5617 = vsyncpa %s5616, 1

</llo_original>
